<compile_context>
chip_gen: v5e
topology: v5e:2x2
jax: 0.10.0
libtpu: 0.0.40
codegen_flags: <defaults>
</compile_context>

<pallas_src>
import functools
import math

import numpy as np
import jax
import jax.numpy as jnp
from jax.experimental import pallas as pl
from jax.experimental.pallas import tpu as pltpu


# ----------------------------------------------------------------------------
# Positional encoding (identical math to the PyTorch helper, minus .cuda()).
# ----------------------------------------------------------------------------
def positional_encoding_1d(position, d_model):
    pos = np.arange(position)[:, np.newaxis]
    i = np.arange(d_model)[np.newaxis, :]
    angle_rates = 1.0 / np.power(10000, 2 * (i // 2) / np.float32(d_model))
    angle_rads = pos * angle_rates
    angle_rads[:, 0::2] = np.sin(angle_rads[:, 0::2])
    angle_rads[:, 1::2] = np.cos(angle_rads[:, 1::2])
    return jnp.asarray(angle_rads[np.newaxis, ...].astype("float32"))


# ----------------------------------------------------------------------------
# In-kernel building blocks
# ----------------------------------------------------------------------------
def _norm(v, alpha, bias, eps=1e-6):
    # torch: alpha * (x - mean) / (x.std(unbiased=True) + eps) + bias
    d = v.shape[-1]
    mean = jnp.mean(v, axis=-1, keepdims=True)
    var = jnp.sum((v - mean) ** 2, axis=-1, keepdims=True) * (1.0 / (d - 1))
    std = jnp.sqrt(var)
    return alpha * ((v - mean) * pl.reciprocal(std + eps, approx=True)) + bias


def _linear(x_b, w_ref, b_ref):
    # x_b: bf16 activations; weight cast to bf16 at the MXU; f32 accumulate.
    return jnp.dot(x_b, w_ref[...].astype(jnp.bfloat16),
                   preferred_element_type=jnp.float32) + b_ref[...]


def _mha(xq, xkv, B, Tq, Tk, num_head, wq, bq, wk, bk, wv, bv, wo, bo):
    # xq: (B*Tq, D) f32, xkv: (B*Tk, D) f32  -> (B*Tq, D) f32
    D = xq.shape[-1]
    dk = D // num_head
    scale = 1.0 / math.sqrt(dk)

    xq_b = xq.astype(jnp.bfloat16)
    xkv_b = xkv.astype(jnp.bfloat16)
    q = _linear(xq_b, wq, bq) * scale          # scale folded into Q once
    k = _linear(xkv_b, wk, bk)
    v = _linear(xkv_b, wv, bv)
    wo_f = wo[...]                             # (D, D) f32

    out = None
    for h in range(num_head):                  # static unroll; batched over B
        sl = slice(h * dk, (h + 1) * dk)
        qh = q[:, sl].reshape(B, Tq, dk).astype(jnp.bfloat16)
        kh = k[:, sl].reshape(B, Tk, dk).astype(jnp.bfloat16)
        vh = v[:, sl].reshape(B, Tk, dk).astype(jnp.bfloat16)
        s = jnp.einsum('btd,bsd->bts', qh, kh,
                       preferred_element_type=jnp.float32)      # (B,Tq,Tk) f32
        s = s - jnp.max(s, axis=-1, keepdims=True)
        p = jnp.exp(s)
        p = p * pl.reciprocal(jnp.sum(p, axis=-1, keepdims=True), approx=True)
        oh = jnp.einsum('bts,bsd->btd', p.astype(jnp.bfloat16), vh,
                        preferred_element_type=jnp.float32)     # (B,Tq,dk)
        # fold head output straight into the out-projection (no head concat)
        contrib = jnp.dot(oh.reshape(B * Tq, dk).astype(jnp.bfloat16),
                          wo_f[sl, :].astype(jnp.bfloat16),
                          preferred_element_type=jnp.float32)
        out = contrib if out is None else out + contrib
    return out + bo[...]


# ----------------------------------------------------------------------------
# The single fused kernel: embedding + all layers + final norm/logits
# ----------------------------------------------------------------------------
def fused_decode_kernel(*refs, num_layers, num_head, B, T, S):
    ids_ref, embed_ref, pos_ref, mem_ref = refs[:4]
    n_lp = 26 * num_layers
    layer_refs = refs[4:4 + n_lp]
    fna, fnb, wlog, blog = refs[4 + n_lp:4 + n_lp + 4]
    out_ref = refs[-1]

    V, D = embed_ref.shape
    N = B * T

    # ---- token embedding (one-hot matmul gather) + positional encoding ----
    ids = ids_ref[...]                                         # (N, 1) int32
    hot = (ids == jax.lax.broadcasted_iota(jnp.int32, (N, V), 1))
    x = jnp.dot(hot.astype(jnp.float32), embed_ref[...],
                preferred_element_type=jnp.float32)            # (N, D)
    x = (x.reshape(B, T, D) + pos_ref[...]).reshape(N, D)

    mem2 = mem_ref[...].reshape(B * S, D)                      # (B*S, D)

    # ---- decoder layers (static unroll) ----
    for li in range(num_layers):
        (n1a, n1b, n2a, n2b, n3a, n3b,
         wq1, bq1, wk1, bk1, wv1, bv1, wo1, bo1,
         wq2, bq2, wk2, bk2, wv2, bv2, wo2, bo2,
         w1, b1, w2, b2) = layer_refs[26 * li: 26 * (li + 1)]

        # self attention block
        x1 = _norm(x, n1a[...], n1b[...])
        x = x + _mha(x1, x1, B, T, T, num_head,
                     wq1, bq1, wk1, bk1, wv1, bv1, wo1, bo1)
        # cross attention block
        x2 = _norm(x, n2a[...], n2b[...])
        x = x + _mha(x2, mem2, B, T, S, num_head,
                     wq2, bq2, wk2, bk2, wv2, bv2, wo2, bo2)
        # feed forward block
        x3 = _norm(x, n3a[...], n3b[...])
        h = jnp.maximum(_linear(x3.astype(jnp.bfloat16), w1, b1), 0.0)
        x = x + _linear(h.astype(jnp.bfloat16), w2, b2)

    # ---- final norm + vocab projection ----
    z = _norm(x, fna[...], fnb[...])
    out_ref[...] = _linear(z.astype(jnp.bfloat16), wlog, blog)


def transformer_decode_forward(x_ids, mem, token_embed, pos_encoding,
                               layer_params, final_params, num_head):
    B, T = x_ids.shape
    S = mem.shape[1]
    V, D = token_embed.shape

    ids2 = x_ids.reshape(B * T, 1).astype(jnp.int32)
    pos = pos_encoding[0, :T, :]                               # (T, D)
    flat = [p for lp in layer_params for p in lp] + list(final_params)
    inputs = [ids2, token_embed, pos, mem] + flat

    kernel = functools.partial(fused_decode_kernel,
                               num_layers=len(layer_params),
                               num_head=num_head, B=B, T=T, S=S)
    vmem = pl.BlockSpec(memory_space=pltpu.MemorySpace.VMEM)
    out = pl.pallas_call(
        kernel,
        out_shape=jax.ShapeDtypeStruct((B * T, V), jnp.float32),
        in_specs=[vmem] * len(inputs),
        out_specs=vmem,
    )(*inputs)
    return out.reshape(B, T, V)


# ----------------------------------------------------------------------------
# Pure-JAX reference (sanity check only)
# ----------------------------------------------------------------------------
def _norm_ref(x, a, b, eps=1e-6):
    d = x.shape[-1]
    mean = x.mean(-1, keepdims=True)
    std = jnp.sqrt(((x - mean) ** 2).sum(-1, keepdims=True) / (d - 1))
    return a * ((x - mean) / (std + eps)) + b


def _mha_ref(xq, xkv, wq, bq, wk, bk, wv, bv, wo, bo, H):
    B, T, D = xq.shape
    dk = D // H

    def split(t):
        return t.reshape(t.shape[0], t.shape[1], H, dk).transpose(0, 2, 1, 3)

    q = split(xq @ wq + bq)
    k = split(xkv @ wk + bk)
    v = split(xkv @ wv + bv)
    s = jnp.einsum("bhqd,bhkd->bhqk", q, k) / math.sqrt(dk)
    p = jax.nn.softmax(s, axis=-1)
    val = jnp.einsum("bhqk,bhkd->bhqd", p, v)
    val = val.transpose(0, 2, 1, 3).reshape(B, T, D)
    return val @ wo + bo


def _layer_ref(x, mem, p, H):
    (n1a, n1b, n2a, n2b, n3a, n3b,
     wq1, bq1, wk1, bk1, wv1, bv1, wo1, bo1,
     wq2, bq2, wk2, bk2, wv2, bv2, wo2, bo2,
     w1, b1, w2, b2) = p
    x1 = _norm_ref(x, n1a, n1b)
    x = x + _mha_ref(x1, x1, wq1, bq1, wk1, bk1, wv1, bv1, wo1, bo1, H)
    x2 = _norm_ref(x, n2a, n2b)
    x = x + _mha_ref(x2, mem, wq2, bq2, wk2, bk2, wv2, bv2, wo2, bo2, H)
    x3 = _norm_ref(x, n3a, n3b)
    h = jax.nn.relu(x3 @ w1 + b1)
    return x + h @ w2 + b2


def _forward_ref(x_ids, mem, token_embed, pos_encoding, layer_params,
                 final_params, H):
    T = x_ids.shape[1]
    x = token_embed[x_ids] + pos_encoding[:, :T, :]
    for lp in layer_params:
        x = _layer_ref(x, mem, lp, H)
    na, nb, wlog, blog = final_params
    return _norm_ref(x, na, nb) @ wlog + blog


# ----------------------------------------------------------------------------
# Parameter construction (deterministic, synthetic)
# ----------------------------------------------------------------------------
def _init_linear(key, din, dout, scale=0.02):
    k1, k2 = jax.random.split(key)
    w = jax.random.normal(k1, (din, dout), jnp.float32) * scale  # W^T layout
    b = jax.random.normal(k2, (1, dout), jnp.float32) * scale
    return w, b


def _init_layer(key, dim, ff_dim):
    keys = jax.random.split(key, 10)
    ones = jnp.ones((1, dim), jnp.float32)
    zeros = jnp.zeros((1, dim), jnp.float32)
    wq1, bq1 = _init_linear(keys[0], dim, dim)
    wk1, bk1 = _init_linear(keys[1], dim, dim)
    wv1, bv1 = _init_linear(keys[2], dim, dim)
    wo1, bo1 = _init_linear(keys[3], dim, dim)
    wq2, bq2 = _init_linear(keys[4], dim, dim)
    wk2, bk2 = _init_linear(keys[5], dim, dim)
    wv2, bv2 = _init_linear(keys[6], dim, dim)
    wo2, bo2 = _init_linear(keys[7], dim, dim)
    w1, b1 = _init_linear(keys[8], dim, ff_dim)
    w2, b2 = _init_linear(keys[9], ff_dim, dim)
    return [ones, zeros, ones, zeros, ones, zeros,
            wq1, bq1, wk1, bk1, wv1, bv1, wo1, bo1,
            wq2, bq2, wk2, bk2, wv2, bv2, wo2, bo2,
            w1, b1, w2, b2]


# ----------------------------------------------------------------------------
if __name__ == "__main__":
    dim, ff_dim, num_head = 32, 64, 4
    decoder_num_layer, vocab_size, max_len = 2, 64, 16
    B, T, S_mem = 2, 8, 16

    root = jax.random.PRNGKey(0)
    k_emb, k_ids, k_mem, k_layers, k_final = jax.random.split(root, 5)

    token_embed = jax.random.normal(k_emb, (vocab_size, dim), jnp.float32) * 0.02
    pos_encoding = positional_encoding_1d(max_len, dim)  # (1, max_len, dim)

    layer_keys = jax.random.split(k_layers, decoder_num_layer)
    layer_params = [_init_layer(k, dim, ff_dim) for k in layer_keys]

    kf1, kf2 = jax.random.split(k_final)
    wlog, blog = _init_linear(kf2, dim, vocab_size)
    final_params = [jnp.ones((1, dim), jnp.float32),
                    jnp.zeros((1, dim), jnp.float32),
                    wlog, blog]

    x_ids = jax.random.randint(k_ids, (B, T), 0, vocab_size, dtype=jnp.int32)
    mem = jax.random.normal(k_mem, (B, S_mem, dim), jnp.float32)

    logits = transformer_decode_forward(
        x_ids, mem, token_embed, pos_encoding,
        layer_params, final_params, num_head)
    logits = jax.block_until_ready(logits)

    assert logits.shape == (B, T, vocab_size)
    assert bool(jnp.all(jnp.isfinite(logits)))

    with jax.default_matmul_precision("highest"):
        ref = _forward_ref(x_ids, mem, token_embed, pos_encoding,
                           layer_params, final_params, num_head)
    np.testing.assert_allclose(np.asarray(logits), np.asarray(ref),
                               rtol=2e-2, atol=2e-2)

    print("KERNEL_OK")
</pallas_src>

<mosaic_0001>
module attributes {stable_mosaic.version = 11 : i64} {
  func.func @fused_decode_kernel(%arg0: memref<16x1xi32, #tpu.memory_space<vmem>>, %arg1: memref<64x32xf32, #tpu.memory_space<vmem>>, %arg2: memref<8x32xf32, #tpu.memory_space<vmem>>, %arg3: memref<2x16x32xf32, #tpu.memory_space<vmem>>, %arg4: memref<1x32xf32, #tpu.memory_space<vmem>>, %arg5: memref<1x32xf32, #tpu.memory_space<vmem>>, %arg6: memref<1x32xf32, #tpu.memory_space<vmem>>, %arg7: memref<1x32xf32, #tpu.memory_space<vmem>>, %arg8: memref<1x32xf32, #tpu.memory_space<vmem>>, %arg9: memref<1x32xf32, #tpu.memory_space<vmem>>, %arg10: memref<32x32xf32, #tpu.memory_space<vmem>>, %arg11: memref<1x32xf32, #tpu.memory_space<vmem>>, %arg12: memref<32x32xf32, #tpu.memory_space<vmem>>, %arg13: memref<1x32xf32, #tpu.memory_space<vmem>>, %arg14: memref<32x32xf32, #tpu.memory_space<vmem>>, %arg15: memref<1x32xf32, #tpu.memory_space<vmem>>, %arg16: memref<32x32xf32, #tpu.memory_space<vmem>>, %arg17: memref<1x32xf32, #tpu.memory_space<vmem>>, %arg18: memref<32x32xf32, #tpu.memory_space<vmem>>, %arg19: memref<1x32xf32, #tpu.memory_space<vmem>>, %arg20: memref<32x32xf32, #tpu.memory_space<vmem>>, %arg21: memref<1x32xf32, #tpu.memory_space<vmem>>, %arg22: memref<32x32xf32, #tpu.memory_space<vmem>>, %arg23: memref<1x32xf32, #tpu.memory_space<vmem>>, %arg24: memref<32x32xf32, #tpu.memory_space<vmem>>, %arg25: memref<1x32xf32, #tpu.memory_space<vmem>>, %arg26: memref<32x64xf32, #tpu.memory_space<vmem>>, %arg27: memref<1x64xf32, #tpu.memory_space<vmem>>, %arg28: memref<64x32xf32, #tpu.memory_space<vmem>>, %arg29: memref<1x32xf32, #tpu.memory_space<vmem>>, %arg30: memref<1x32xf32, #tpu.memory_space<vmem>>, %arg31: memref<1x32xf32, #tpu.memory_space<vmem>>, %arg32: memref<1x32xf32, #tpu.memory_space<vmem>>, %arg33: memref<1x32xf32, #tpu.memory_space<vmem>>, %arg34: memref<1x32xf32, #tpu.memory_space<vmem>>, %arg35: memref<1x32xf32, #tpu.memory_space<vmem>>, %arg36: memref<32x32xf32, #tpu.memory_space<vmem>>, %arg37: memref<1x32xf32, #tpu.memory_space<vmem>>, %arg38: memref<32x32xf32, #tpu.memory_space<vmem>>, %arg39: memref<1x32xf32, #tpu.memory_space<vmem>>, %arg40: memref<32x32xf32, #tpu.memory_space<vmem>>, %arg41: memref<1x32xf32, #tpu.memory_space<vmem>>, %arg42: memref<32x32xf32, #tpu.memory_space<vmem>>, %arg43: memref<1x32xf32, #tpu.memory_space<vmem>>, %arg44: memref<32x32xf32, #tpu.memory_space<vmem>>, %arg45: memref<1x32xf32, #tpu.memory_space<vmem>>, %arg46: memref<32x32xf32, #tpu.memory_space<vmem>>, %arg47: memref<1x32xf32, #tpu.memory_space<vmem>>, %arg48: memref<32x32xf32, #tpu.memory_space<vmem>>, %arg49: memref<1x32xf32, #tpu.memory_space<vmem>>, %arg50: memref<32x32xf32, #tpu.memory_space<vmem>>, %arg51: memref<1x32xf32, #tpu.memory_space<vmem>>, %arg52: memref<32x64xf32, #tpu.memory_space<vmem>>, %arg53: memref<1x64xf32, #tpu.memory_space<vmem>>, %arg54: memref<64x32xf32, #tpu.memory_space<vmem>>, %arg55: memref<1x32xf32, #tpu.memory_space<vmem>>, %arg56: memref<1x32xf32, #tpu.memory_space<vmem>>, %arg57: memref<1x32xf32, #tpu.memory_space<vmem>>, %arg58: memref<32x64xf32, #tpu.memory_space<vmem>>, %arg59: memref<1x64xf32, #tpu.memory_space<vmem>>, %arg60: memref<16x64xf32, #tpu.memory_space<vmem>>) attributes {dimension_semantics = [], scalar_prefetch = 0 : i64, scratch_operands = 0 : i64, tpu.core_type = #tpu.core_type<tc>} {
    %c0 = arith.constant 0 : index
    %c0_0 = arith.constant 0 : index
    %0 = vector.load %arg0[%c0, %c0_0] : memref<16x1xi32, #tpu.memory_space<vmem>>, vector<16x1xi32>
    %1 = tpu.iota {dimensions = array<i32: 1>} : vector<16x64xi32>
    %2 = vector.broadcast %0 : vector<16x1xi32> to vector<16x64xi32>
    %3 = arith.cmpi eq, %2, %1 : vector<16x64xi32>
    %4 = arith.extui %3 : vector<16x64xi1> to vector<16x64xi32>
    %5 = arith.sitofp %4 : vector<16x64xi32> to vector<16x64xf32>
    %c0_1 = arith.constant 0 : index
    %c0_2 = arith.constant 0 : index
    %6 = vector.load %arg1[%c0_1, %c0_2] : memref<64x32xf32, #tpu.memory_space<vmem>>, vector<64x32xf32>
    %cst = arith.constant dense<0.000000e+00> : vector<16x32xf32>
    %7 = tpu.matmul %5, %6, %cst {dimension_numbers = #tpu.dot_dimension_numbers<[1], [0], [0], [1], [0, 0, 1, 1], [], []>} : vector<16x64xf32>, vector<64x32xf32>, vector<16x32xf32> -> vector<16x32xf32>
    %8 = vector.shape_cast %7 : vector<16x32xf32> to vector<2x8x32xf32>
    %c0_3 = arith.constant 0 : index
    %c0_4 = arith.constant 0 : index
    %9 = vector.load %arg2[%c0_3, %c0_4] : memref<8x32xf32, #tpu.memory_space<vmem>>, vector<8x32xf32>
    %10 = vector.shape_cast %9 : vector<8x32xf32> to vector<1x8x32xf32>
    %11 = vector.broadcast %10 : vector<1x8x32xf32> to vector<2x8x32xf32>
    %12 = arith.addf %8, %11 : vector<2x8x32xf32>
    %13 = vector.shape_cast %12 : vector<2x8x32xf32> to vector<16x32xf32>
    %c0_5 = arith.constant 0 : index
    %c0_6 = arith.constant 0 : index
    %c0_7 = arith.constant 0 : index
    %14 = vector.load %arg3[%c0_5, %c0_6, %c0_7] : memref<2x16x32xf32, #tpu.memory_space<vmem>>, vector<2x16x32xf32>
    %15 = vector.shape_cast %14 : vector<2x16x32xf32> to vector<32x32xf32>
    %c0_8 = arith.constant 0 : index
    %c0_9 = arith.constant 0 : index
    %16 = vector.load %arg4[%c0_8, %c0_9] : memref<1x32xf32, #tpu.memory_space<vmem>>, vector<1x32xf32>
    %c0_10 = arith.constant 0 : index
    %c0_11 = arith.constant 0 : index
    %17 = vector.load %arg5[%c0_10, %c0_11] : memref<1x32xf32, #tpu.memory_space<vmem>>, vector<1x32xf32>
    %cst_12 = arith.constant dense<0.000000e+00> : vector<16xf32>
    %18 = vector.multi_reduction <add>, %13, %cst_12 [1] : vector<16x32xf32> to vector<16xf32>
    %19 = vector.shape_cast %18 : vector<16xf32> to vector<16x1xf32>
    %cst_13 = arith.constant 3.200000e+01 : f32
    %20 = vector.broadcast %cst_13 : f32 to vector<16x1xf32>
    %21 = arith.divf %19, %20 : vector<16x1xf32>
    %22 = vector.broadcast %21 : vector<16x1xf32> to vector<16x32xf32>
    %23 = arith.subf %13, %22 : vector<16x32xf32>
    %24 = arith.mulf %23, %23 : vector<16x32xf32>
    %cst_14 = arith.constant dense<0.000000e+00> : vector<16xf32>
    %25 = vector.multi_reduction <add>, %24, %cst_14 [1] : vector<16x32xf32> to vector<16xf32>
    %26 = vector.shape_cast %25 : vector<16xf32> to vector<16x1xf32>
    %cst_15 = arith.constant 0.0322580636 : f32
    %27 = vector.broadcast %cst_15 : f32 to vector<16x1xf32>
    %28 = arith.mulf %26, %27 : vector<16x1xf32>
    %29 = math.sqrt %28 : vector<16x1xf32>
    %30 = vector.broadcast %21 : vector<16x1xf32> to vector<16x32xf32>
    %31 = arith.subf %13, %30 : vector<16x32xf32>
    %cst_16 = arith.constant 9.99999997E-7 : f32
    %32 = vector.broadcast %cst_16 : f32 to vector<16x1xf32>
    %33 = arith.addf %29, %32 : vector<16x1xf32>
    %34 = tpu.reciprocal %33 {approx = true} : vector<16x1xf32> -> vector<16x1xf32>
    %35 = vector.broadcast %34 : vector<16x1xf32> to vector<16x32xf32>
    %36 = arith.mulf %31, %35 : vector<16x32xf32>
    %37 = vector.broadcast %16 : vector<1x32xf32> to vector<16x32xf32>
    %38 = arith.mulf %37, %36 : vector<16x32xf32>
    %39 = vector.broadcast %17 : vector<1x32xf32> to vector<16x32xf32>
    %40 = arith.addf %38, %39 : vector<16x32xf32>
    %41 = arith.truncf %40 : vector<16x32xf32> to vector<16x32xbf16>
    %42 = arith.truncf %40 : vector<16x32xf32> to vector<16x32xbf16>
    %c0_17 = arith.constant 0 : index
    %c0_18 = arith.constant 0 : index
    %43 = vector.load %arg10[%c0_17, %c0_18] : memref<32x32xf32, #tpu.memory_space<vmem>>, vector<32x32xf32>
    %44 = arith.truncf %43 : vector<32x32xf32> to vector<32x32xbf16>
    %cst_19 = arith.constant dense<0.000000e+00> : vector<16x32xf32>
    %45 = tpu.matmul %41, %44, %cst_19 {dimension_numbers = #tpu.dot_dimension_numbers<[1], [0], [0], [1], [0, 0, 1, 1], [], []>} : vector<16x32xbf16>, vector<32x32xbf16>, vector<16x32xf32> -> vector<16x32xf32>
    %c0_20 = arith.constant 0 : index
    %c0_21 = arith.constant 0 : index
    %46 = vector.load %arg11[%c0_20, %c0_21] : memref<1x32xf32, #tpu.memory_space<vmem>>, vector<1x32xf32>
    %47 = vector.broadcast %46 : vector<1x32xf32> to vector<16x32xf32>
    %48 = arith.addf %45, %47 : vector<16x32xf32>
    %cst_22 = arith.constant 0.353553385 : f32
    %49 = vector.broadcast %cst_22 : f32 to vector<16x32xf32>
    %50 = arith.mulf %48, %49 : vector<16x32xf32>
    %c0_23 = arith.constant 0 : index
    %c0_24 = arith.constant 0 : index
    %51 = vector.load %arg12[%c0_23, %c0_24] : memref<32x32xf32, #tpu.memory_space<vmem>>, vector<32x32xf32>
    %52 = arith.truncf %51 : vector<32x32xf32> to vector<32x32xbf16>
    %cst_25 = arith.constant dense<0.000000e+00> : vector<16x32xf32>
    %53 = tpu.matmul %42, %52, %cst_25 {dimension_numbers = #tpu.dot_dimension_numbers<[1], [0], [0], [1], [0, 0, 1, 1], [], []>} : vector<16x32xbf16>, vector<32x32xbf16>, vector<16x32xf32> -> vector<16x32xf32>
    %c0_26 = arith.constant 0 : index
    %c0_27 = arith.constant 0 : index
    %54 = vector.load %arg13[%c0_26, %c0_27] : memref<1x32xf32, #tpu.memory_space<vmem>>, vector<1x32xf32>
    %55 = vector.broadcast %54 : vector<1x32xf32> to vector<16x32xf32>
    %56 = arith.addf %53, %55 : vector<16x32xf32>
    %c0_28 = arith.constant 0 : index
    %c0_29 = arith.constant 0 : index
    %57 = vector.load %arg14[%c0_28, %c0_29] : memref<32x32xf32, #tpu.memory_space<vmem>>, vector<32x32xf32>
    %58 = arith.truncf %57 : vector<32x32xf32> to vector<32x32xbf16>
    %cst_30 = arith.constant dense<0.000000e+00> : vector<16x32xf32>
    %59 = tpu.matmul %42, %58, %cst_30 {dimension_numbers = #tpu.dot_dimension_numbers<[1], [0], [0], [1], [0, 0, 1, 1], [], []>} : vector<16x32xbf16>, vector<32x32xbf16>, vector<16x32xf32> -> vector<16x32xf32>
    %c0_31 = arith.constant 0 : index
    %c0_32 = arith.constant 0 : index
    %60 = vector.load %arg15[%c0_31, %c0_32] : memref<1x32xf32, #tpu.memory_space<vmem>>, vector<1x32xf32>
    %61 = vector.broadcast %60 : vector<1x32xf32> to vector<16x32xf32>
    %62 = arith.addf %59, %61 : vector<16x32xf32>
    %c0_33 = arith.constant 0 : index
    %c0_34 = arith.constant 0 : index
    %63 = vector.load %arg16[%c0_33, %c0_34] : memref<32x32xf32, #tpu.memory_space<vmem>>, vector<32x32xf32>
    %64 = vector.extract_strided_slice %50 {offsets = [0, 0], sizes = [16, 8], strides = [1, 1]} : vector<16x32xf32> to vector<16x8xf32>
    %65 = vector.shape_cast %64 : vector<16x8xf32> to vector<2x8x8xf32>
    %66 = arith.truncf %65 : vector<2x8x8xf32> to vector<2x8x8xbf16>
    %67 = vector.extract_strided_slice %56 {offsets = [0, 0], sizes = [16, 8], strides = [1, 1]} : vector<16x32xf32> to vector<16x8xf32>
    %68 = vector.shape_cast %67 : vector<16x8xf32> to vector<2x8x8xf32>
    %69 = arith.truncf %68 : vector<2x8x8xf32> to vector<2x8x8xbf16>
    %70 = vector.extract_strided_slice %62 {offsets = [0, 0], sizes = [16, 8], strides = [1, 1]} : vector<16x32xf32> to vector<16x8xf32>
    %71 = vector.shape_cast %70 : vector<16x8xf32> to vector<2x8x8xf32>
    %72 = arith.truncf %71 : vector<2x8x8xf32> to vector<2x8x8xbf16>
    "tpu.trace_start"() <{level = 10 : i32, message = "btd,bsd->bts"}> : () -> ()
    %cst_35 = arith.constant dense<0.000000e+00> : vector<2x8x8xf32>
    %73 = tpu.matmul %66, %69, %cst_35 {dimension_numbers = #tpu.dot_dimension_numbers<[2], [2], [1], [1], [0, 0, 0, 1, 1, 1], [0], [0]>} : vector<2x8x8xbf16>, vector<2x8x8xbf16>, vector<2x8x8xf32> -> vector<2x8x8xf32>
    "tpu.trace_stop"() : () -> ()
    %cst_36 = arith.constant dense<0xFF800000> : vector<2x8xf32>
    %74 = vector.multi_reduction <maximumf>, %73, %cst_36 [2] : vector<2x8x8xf32> to vector<2x8xf32>
    %75 = vector.shape_cast %74 : vector<2x8xf32> to vector<2x8x1xf32>
    %76 = vector.broadcast %75 : vector<2x8x1xf32> to vector<2x8x8xf32>
    %77 = arith.subf %73, %76 : vector<2x8x8xf32>
    %78 = math.exp %77 : vector<2x8x8xf32>
    %cst_37 = arith.constant dense<0.000000e+00> : vector<2x8xf32>
    %79 = vector.multi_reduction <add>, %78, %cst_37 [2] : vector<2x8x8xf32> to vector<2x8xf32>
    %80 = vector.shape_cast %79 : vector<2x8xf32> to vector<2x8x1xf32>
    %81 = tpu.reciprocal %80 {approx = true} : vector<2x8x1xf32> -> vector<2x8x1xf32>
    %82 = vector.broadcast %81 : vector<2x8x1xf32> to vector<2x8x8xf32>
    %83 = arith.mulf %78, %82 : vector<2x8x8xf32>
    %84 = arith.truncf %83 : vector<2x8x8xf32> to vector<2x8x8xbf16>
    "tpu.trace_start"() <{level = 10 : i32, message = "bts,bsd->btd"}> : () -> ()
    %cst_38 = arith.constant dense<0.000000e+00> : vector<2x8x8xf32>
    %85 = tpu.matmul %84, %72, %cst_38 {dimension_numbers = #tpu.dot_dimension_numbers<[2], [1], [1], [2], [0, 0, 0, 1, 1, 2], [0], [0]>} : vector<2x8x8xbf16>, vector<2x8x8xbf16>, vector<2x8x8xf32> -> vector<2x8x8xf32>
    "tpu.trace_stop"() : () -> ()
    %86 = vector.shape_cast %85 : vector<2x8x8xf32> to vector<16x8xf32>
    %87 = arith.truncf %86 : vector<16x8xf32> to vector<16x8xbf16>
    %88 = vector.extract_strided_slice %63 {offsets = [0, 0], sizes = [8, 32], strides = [1, 1]} : vector<32x32xf32> to vector<8x32xf32>
    %89 = arith.truncf %88 : vector<8x32xf32> to vector<8x32xbf16>
    %cst_39 = arith.constant dense<0.000000e+00> : vector<16x32xf32>
    %90 = tpu.matmul %87, %89, %cst_39 {dimension_numbers = #tpu.dot_dimension_numbers<[1], [0], [0], [1], [0, 0, 1, 1], [], []>} : vector<16x8xbf16>, vector<8x32xbf16>, vector<16x32xf32> -> vector<16x32xf32>
    %91 = vector.extract_strided_slice %50 {offsets = [0, 8], sizes = [16, 8], strides = [1, 1]} : vector<16x32xf32> to vector<16x8xf32>
    %92 = vector.shape_cast %91 : vector<16x8xf32> to vector<2x8x8xf32>
    %93 = arith.truncf %92 : vector<2x8x8xf32> to vector<2x8x8xbf16>
    %94 = vector.extract_strided_slice %56 {offsets = [0, 8], sizes = [16, 8], strides = [1, 1]} : vector<16x32xf32> to vector<16x8xf32>
    %95 = vector.shape_cast %94 : vector<16x8xf32> to vector<2x8x8xf32>
    %96 = arith.truncf %95 : vector<2x8x8xf32> to vector<2x8x8xbf16>
    %97 = vector.extract_strided_slice %62 {offsets = [0, 8], sizes = [16, 8], strides = [1, 1]} : vector<16x32xf32> to vector<16x8xf32>
    %98 = vector.shape_cast %97 : vector<16x8xf32> to vector<2x8x8xf32>
    %99 = arith.truncf %98 : vector<2x8x8xf32> to vector<2x8x8xbf16>
    "tpu.trace_start"() <{level = 10 : i32, message = "btd,bsd->bts"}> : () -> ()
    %cst_40 = arith.constant dense<0.000000e+00> : vector<2x8x8xf32>
    %100 = tpu.matmul %93, %96, %cst_40 {dimension_numbers = #tpu.dot_dimension_numbers<[2], [2], [1], [1], [0, 0, 0, 1, 1, 1], [0], [0]>} : vector<2x8x8xbf16>, vector<2x8x8xbf16>, vector<2x8x8xf32> -> vector<2x8x8xf32>
    "tpu.trace_stop"() : () -> ()
    %cst_41 = arith.constant dense<0xFF800000> : vector<2x8xf32>
    %101 = vector.multi_reduction <maximumf>, %100, %cst_41 [2] : vector<2x8x8xf32> to vector<2x8xf32>
    %102 = vector.shape_cast %101 : vector<2x8xf32> to vector<2x8x1xf32>
    %103 = vector.broadcast %102 : vector<2x8x1xf32> to vector<2x8x8xf32>
    %104 = arith.subf %100, %103 : vector<2x8x8xf32>
    %105 = math.exp %104 : vector<2x8x8xf32>
    %cst_42 = arith.constant dense<0.000000e+00> : vector<2x8xf32>
    %106 = vector.multi_reduction <add>, %105, %cst_42 [2] : vector<2x8x8xf32> to vector<2x8xf32>
    %107 = vector.shape_cast %106 : vector<2x8xf32> to vector<2x8x1xf32>
    %108 = tpu.reciprocal %107 {approx = true} : vector<2x8x1xf32> -> vector<2x8x1xf32>
    %109 = vector.broadcast %108 : vector<2x8x1xf32> to vector<2x8x8xf32>
    %110 = arith.mulf %105, %109 : vector<2x8x8xf32>
    %111 = arith.truncf %110 : vector<2x8x8xf32> to vector<2x8x8xbf16>
    "tpu.trace_start"() <{level = 10 : i32, message = "bts,bsd->btd"}> : () -> ()
    %cst_43 = arith.constant dense<0.000000e+00> : vector<2x8x8xf32>
    %112 = tpu.matmul %111, %99, %cst_43 {dimension_numbers = #tpu.dot_dimension_numbers<[2], [1], [1], [2], [0, 0, 0, 1, 1, 2], [0], [0]>} : vector<2x8x8xbf16>, vector<2x8x8xbf16>, vector<2x8x8xf32> -> vector<2x8x8xf32>
    "tpu.trace_stop"() : () -> ()
    %113 = vector.shape_cast %112 : vector<2x8x8xf32> to vector<16x8xf32>
    %114 = arith.truncf %113 : vector<16x8xf32> to vector<16x8xbf16>
    %115 = vector.extract_strided_slice %63 {offsets = [8, 0], sizes = [8, 32], strides = [1, 1]} : vector<32x32xf32> to vector<8x32xf32>
    %116 = arith.truncf %115 : vector<8x32xf32> to vector<8x32xbf16>
    %cst_44 = arith.constant dense<0.000000e+00> : vector<16x32xf32>
    %117 = tpu.matmul %114, %116, %cst_44 {dimension_numbers = #tpu.dot_dimension_numbers<[1], [0], [0], [1], [0, 0, 1, 1], [], []>} : vector<16x8xbf16>, vector<8x32xbf16>, vector<16x32xf32> -> vector<16x32xf32>
    %118 = arith.addf %90, %117 : vector<16x32xf32>
    %119 = vector.extract_strided_slice %50 {offsets = [0, 16], sizes = [16, 8], strides = [1, 1]} : vector<16x32xf32> to vector<16x8xf32>
    %120 = vector.shape_cast %119 : vector<16x8xf32> to vector<2x8x8xf32>
    %121 = arith.truncf %120 : vector<2x8x8xf32> to vector<2x8x8xbf16>
    %122 = vector.extract_strided_slice %56 {offsets = [0, 16], sizes = [16, 8], strides = [1, 1]} : vector<16x32xf32> to vector<16x8xf32>
    %123 = vector.shape_cast %122 : vector<16x8xf32> to vector<2x8x8xf32>
    %124 = arith.truncf %123 : vector<2x8x8xf32> to vector<2x8x8xbf16>
    %125 = vector.extract_strided_slice %62 {offsets = [0, 16], sizes = [16, 8], strides = [1, 1]} : vector<16x32xf32> to vector<16x8xf32>
    %126 = vector.shape_cast %125 : vector<16x8xf32> to vector<2x8x8xf32>
    %127 = arith.truncf %126 : vector<2x8x8xf32> to vector<2x8x8xbf16>
    "tpu.trace_start"() <{level = 10 : i32, message = "btd,bsd->bts"}> : () -> ()
    %cst_45 = arith.constant dense<0.000000e+00> : vector<2x8x8xf32>
    %128 = tpu.matmul %121, %124, %cst_45 {dimension_numbers = #tpu.dot_dimension_numbers<[2], [2], [1], [1], [0, 0, 0, 1, 1, 1], [0], [0]>} : vector<2x8x8xbf16>, vector<2x8x8xbf16>, vector<2x8x8xf32> -> vector<2x8x8xf32>
    "tpu.trace_stop"() : () -> ()
    %cst_46 = arith.constant dense<0xFF800000> : vector<2x8xf32>
    %129 = vector.multi_reduction <maximumf>, %128, %cst_46 [2] : vector<2x8x8xf32> to vector<2x8xf32>
    %130 = vector.shape_cast %129 : vector<2x8xf32> to vector<2x8x1xf32>
    %131 = vector.broadcast %130 : vector<2x8x1xf32> to vector<2x8x8xf32>
    %132 = arith.subf %128, %131 : vector<2x8x8xf32>
    %133 = math.exp %132 : vector<2x8x8xf32>
    %cst_47 = arith.constant dense<0.000000e+00> : vector<2x8xf32>
    %134 = vector.multi_reduction <add>, %133, %cst_47 [2] : vector<2x8x8xf32> to vector<2x8xf32>
    %135 = vector.shape_cast %134 : vector<2x8xf32> to vector<2x8x1xf32>
    %136 = tpu.reciprocal %135 {approx = true} : vector<2x8x1xf32> -> vector<2x8x1xf32>
    %137 = vector.broadcast %136 : vector<2x8x1xf32> to vector<2x8x8xf32>
    %138 = arith.mulf %133, %137 : vector<2x8x8xf32>
    %139 = arith.truncf %138 : vector<2x8x8xf32> to vector<2x8x8xbf16>
    "tpu.trace_start"() <{level = 10 : i32, message = "bts,bsd->btd"}> : () -> ()
    %cst_48 = arith.constant dense<0.000000e+00> : vector<2x8x8xf32>
    %140 = tpu.matmul %139, %127, %cst_48 {dimension_numbers = #tpu.dot_dimension_numbers<[2], [1], [1], [2], [0, 0, 0, 1, 1, 2], [0], [0]>} : vector<2x8x8xbf16>, vector<2x8x8xbf16>, vector<2x8x8xf32> -> vector<2x8x8xf32>
    "tpu.trace_stop"() : () -> ()
    %141 = vector.shape_cast %140 : vector<2x8x8xf32> to vector<16x8xf32>
    %142 = arith.truncf %141 : vector<16x8xf32> to vector<16x8xbf16>
    %143 = vector.extract_strided_slice %63 {offsets = [16, 0], sizes = [8, 32], strides = [1, 1]} : vector<32x32xf32> to vector<8x32xf32>
    %144 = arith.truncf %143 : vector<8x32xf32> to vector<8x32xbf16>
    %cst_49 = arith.constant dense<0.000000e+00> : vector<16x32xf32>
    %145 = tpu.matmul %142, %144, %cst_49 {dimension_numbers = #tpu.dot_dimension_numbers<[1], [0], [0], [1], [0, 0, 1, 1], [], []>} : vector<16x8xbf16>, vector<8x32xbf16>, vector<16x32xf32> -> vector<16x32xf32>
    %146 = arith.addf %118, %145 : vector<16x32xf32>
    %147 = vector.extract_strided_slice %50 {offsets = [0, 24], sizes = [16, 8], strides = [1, 1]} : vector<16x32xf32> to vector<16x8xf32>
    %148 = vector.shape_cast %147 : vector<16x8xf32> to vector<2x8x8xf32>
    %149 = arith.truncf %148 : vector<2x8x8xf32> to vector<2x8x8xbf16>
    %150 = vector.extract_strided_slice %56 {offsets = [0, 24], sizes = [16, 8], strides = [1, 1]} : vector<16x32xf32> to vector<16x8xf32>
    %151 = vector.shape_cast %150 : vector<16x8xf32> to vector<2x8x8xf32>
    %152 = arith.truncf %151 : vector<2x8x8xf32> to vector<2x8x8xbf16>
    %153 = vector.extract_strided_slice %62 {offsets = [0, 24], sizes = [16, 8], strides = [1, 1]} : vector<16x32xf32> to vector<16x8xf32>
    %154 = vector.shape_cast %153 : vector<16x8xf32> to vector<2x8x8xf32>
    %155 = arith.truncf %154 : vector<2x8x8xf32> to vector<2x8x8xbf16>
    "tpu.trace_start"() <{level = 10 : i32, message = "btd,bsd->bts"}> : () -> ()
    %cst_50 = arith.constant dense<0.000000e+00> : vector<2x8x8xf32>
    %156 = tpu.matmul %149, %152, %cst_50 {dimension_numbers = #tpu.dot_dimension_numbers<[2], [2], [1], [1], [0, 0, 0, 1, 1, 1], [0], [0]>} : vector<2x8x8xbf16>, vector<2x8x8xbf16>, vector<2x8x8xf32> -> vector<2x8x8xf32>
    "tpu.trace_stop"() : () -> ()
    %cst_51 = arith.constant dense<0xFF800000> : vector<2x8xf32>
    %157 = vector.multi_reduction <maximumf>, %156, %cst_51 [2] : vector<2x8x8xf32> to vector<2x8xf32>
    %158 = vector.shape_cast %157 : vector<2x8xf32> to vector<2x8x1xf32>
    %159 = vector.broadcast %158 : vector<2x8x1xf32> to vector<2x8x8xf32>
    %160 = arith.subf %156, %159 : vector<2x8x8xf32>
    %161 = math.exp %160 : vector<2x8x8xf32>
    %cst_52 = arith.constant dense<0.000000e+00> : vector<2x8xf32>
    %162 = vector.multi_reduction <add>, %161, %cst_52 [2] : vector<2x8x8xf32> to vector<2x8xf32>
    %163 = vector.shape_cast %162 : vector<2x8xf32> to vector<2x8x1xf32>
    %164 = tpu.reciprocal %163 {approx = true} : vector<2x8x1xf32> -> vector<2x8x1xf32>
    %165 = vector.broadcast %164 : vector<2x8x1xf32> to vector<2x8x8xf32>
    %166 = arith.mulf %161, %165 : vector<2x8x8xf32>
    %167 = arith.truncf %166 : vector<2x8x8xf32> to vector<2x8x8xbf16>
    "tpu.trace_start"() <{level = 10 : i32, message = "bts,bsd->btd"}> : () -> ()
    %cst_53 = arith.constant dense<0.000000e+00> : vector<2x8x8xf32>
    %168 = tpu.matmul %167, %155, %cst_53 {dimension_numbers = #tpu.dot_dimension_numbers<[2], [1], [1], [2], [0, 0, 0, 1, 1, 2], [0], [0]>} : vector<2x8x8xbf16>, vector<2x8x8xbf16>, vector<2x8x8xf32> -> vector<2x8x8xf32>
    "tpu.trace_stop"() : () -> ()
    %169 = vector.shape_cast %168 : vector<2x8x8xf32> to vector<16x8xf32>
    %170 = arith.truncf %169 : vector<16x8xf32> to vector<16x8xbf16>
    %171 = vector.extract_strided_slice %63 {offsets = [24, 0], sizes = [8, 32], strides = [1, 1]} : vector<32x32xf32> to vector<8x32xf32>
    %172 = arith.truncf %171 : vector<8x32xf32> to vector<8x32xbf16>
    %cst_54 = arith.constant dense<0.000000e+00> : vector<16x32xf32>
    %173 = tpu.matmul %170, %172, %cst_54 {dimension_numbers = #tpu.dot_dimension_numbers<[1], [0], [0], [1], [0, 0, 1, 1], [], []>} : vector<16x8xbf16>, vector<8x32xbf16>, vector<16x32xf32> -> vector<16x32xf32>
    %174 = arith.addf %146, %173 : vector<16x32xf32>
    %c0_55 = arith.constant 0 : index
    %c0_56 = arith.constant 0 : index
    %175 = vector.load %arg17[%c0_55, %c0_56] : memref<1x32xf32, #tpu.memory_space<vmem>>, vector<1x32xf32>
    %176 = vector.broadcast %175 : vector<1x32xf32> to vector<16x32xf32>
    %177 = arith.addf %174, %176 : vector<16x32xf32>
    %178 = arith.addf %13, %177 : vector<16x32xf32>
    %c0_57 = arith.constant 0 : index
    %c0_58 = arith.constant 0 : index
    %179 = vector.load %arg6[%c0_57, %c0_58] : memref<1x32xf32, #tpu.memory_space<vmem>>, vector<1x32xf32>
    %c0_59 = arith.constant 0 : index
    %c0_60 = arith.constant 0 : index
    %180 = vector.load %arg7[%c0_59, %c0_60] : memref<1x32xf32, #tpu.memory_space<vmem>>, vector<1x32xf32>
    %cst_61 = arith.constant dense<0.000000e+00> : vector<16xf32>
    %181 = vector.multi_reduction <add>, %178, %cst_61 [1] : vector<16x32xf32> to vector<16xf32>
    %182 = vector.shape_cast %181 : vector<16xf32> to vector<16x1xf32>
    %cst_62 = arith.constant 3.200000e+01 : f32
    %183 = vector.broadcast %cst_62 : f32 to vector<16x1xf32>
    %184 = arith.divf %182, %183 : vector<16x1xf32>
    %185 = vector.broadcast %184 : vector<16x1xf32> to vector<16x32xf32>
    %186 = arith.subf %178, %185 : vector<16x32xf32>
    %187 = arith.mulf %186, %186 : vector<16x32xf32>
    %cst_63 = arith.constant dense<0.000000e+00> : vector<16xf32>
    %188 = vector.multi_reduction <add>, %187, %cst_63 [1] : vector<16x32xf32> to vector<16xf32>
    %189 = vector.shape_cast %188 : vector<16xf32> to vector<16x1xf32>
    %cst_64 = arith.constant 0.0322580636 : f32
    %190 = vector.broadcast %cst_64 : f32 to vector<16x1xf32>
    %191 = arith.mulf %189, %190 : vector<16x1xf32>
    %192 = math.sqrt %191 : vector<16x1xf32>
    %193 = vector.broadcast %184 : vector<16x1xf32> to vector<16x32xf32>
    %194 = arith.subf %178, %193 : vector<16x32xf32>
    %cst_65 = arith.constant 9.99999997E-7 : f32
    %195 = vector.broadcast %cst_65 : f32 to vector<16x1xf32>
    %196 = arith.addf %192, %195 : vector<16x1xf32>
    %197 = tpu.reciprocal %196 {approx = true} : vector<16x1xf32> -> vector<16x1xf32>
    %198 = vector.broadcast %197 : vector<16x1xf32> to vector<16x32xf32>
    %199 = arith.mulf %194, %198 : vector<16x32xf32>
    %200 = vector.broadcast %179 : vector<1x32xf32> to vector<16x32xf32>
    %201 = arith.mulf %200, %199 : vector<16x32xf32>
    %202 = vector.broadcast %180 : vector<1x32xf32> to vector<16x32xf32>
    %203 = arith.addf %201, %202 : vector<16x32xf32>
    %204 = arith.truncf %203 : vector<16x32xf32> to vector<16x32xbf16>
    %205 = arith.truncf %15 : vector<32x32xf32> to vector<32x32xbf16>
    %c0_66 = arith.constant 0 : index
    %c0_67 = arith.constant 0 : index
    %206 = vector.load %arg18[%c0_66, %c0_67] : memref<32x32xf32, #tpu.memory_space<vmem>>, vector<32x32xf32>
    %207 = arith.truncf %206 : vector<32x32xf32> to vector<32x32xbf16>
    %cst_68 = arith.constant dense<0.000000e+00> : vector<16x32xf32>
    %208 = tpu.matmul %204, %207, %cst_68 {dimension_numbers = #tpu.dot_dimension_numbers<[1], [0], [0], [1], [0, 0, 1, 1], [], []>} : vector<16x32xbf16>, vector<32x32xbf16>, vector<16x32xf32> -> vector<16x32xf32>
    %c0_69 = arith.constant 0 : index
    %c0_70 = arith.constant 0 : index
    %209 = vector.load %arg19[%c0_69, %c0_70] : memref<1x32xf32, #tpu.memory_space<vmem>>, vector<1x32xf32>
    %210 = vector.broadcast %209 : vector<1x32xf32> to vector<16x32xf32>
    %211 = arith.addf %208, %210 : vector<16x32xf32>
    %cst_71 = arith.constant 0.353553385 : f32
    %212 = vector.broadcast %cst_71 : f32 to vector<16x32xf32>
    %213 = arith.mulf %211, %212 : vector<16x32xf32>
    %c0_72 = arith.constant 0 : index
    %c0_73 = arith.constant 0 : index
    %214 = vector.load %arg20[%c0_72, %c0_73] : memref<32x32xf32, #tpu.memory_space<vmem>>, vector<32x32xf32>
    %215 = arith.truncf %214 : vector<32x32xf32> to vector<32x32xbf16>
    %cst_74 = arith.constant dense<0.000000e+00> : vector<32x32xf32>
    %216 = tpu.matmul %205, %215, %cst_74 {dimension_numbers = #tpu.dot_dimension_numbers<[1], [0], [0], [1], [0, 0, 1, 1], [], []>} : vector<32x32xbf16>, vector<32x32xbf16>, vector<32x32xf32> -> vector<32x32xf32>
    %c0_75 = arith.constant 0 : index
    %c0_76 = arith.constant 0 : index
    %217 = vector.load %arg21[%c0_75, %c0_76] : memref<1x32xf32, #tpu.memory_space<vmem>>, vector<1x32xf32>
    %218 = vector.broadcast %217 : vector<1x32xf32> to vector<32x32xf32>
    %219 = arith.addf %216, %218 : vector<32x32xf32>
    %c0_77 = arith.constant 0 : index
    %c0_78 = arith.constant 0 : index
    %220 = vector.load %arg22[%c0_77, %c0_78] : memref<32x32xf32, #tpu.memory_space<vmem>>, vector<32x32xf32>
    %221 = arith.truncf %220 : vector<32x32xf32> to vector<32x32xbf16>
    %cst_79 = arith.constant dense<0.000000e+00> : vector<32x32xf32>
    %222 = tpu.matmul %205, %221, %cst_79 {dimension_numbers = #tpu.dot_dimension_numbers<[1], [0], [0], [1], [0, 0, 1, 1], [], []>} : vector<32x32xbf16>, vector<32x32xbf16>, vector<32x32xf32> -> vector<32x32xf32>
    %c0_80 = arith.constant 0 : index
    %c0_81 = arith.constant 0 : index
    %223 = vector.load %arg23[%c0_80, %c0_81] : memref<1x32xf32, #tpu.memory_space<vmem>>, vector<1x32xf32>
    %224 = vector.broadcast %223 : vector<1x32xf32> to vector<32x32xf32>
    %225 = arith.addf %222, %224 : vector<32x32xf32>
    %c0_82 = arith.constant 0 : index
    %c0_83 = arith.constant 0 : index
    %226 = vector.load %arg24[%c0_82, %c0_83] : memref<32x32xf32, #tpu.memory_space<vmem>>, vector<32x32xf32>
    %227 = vector.extract_strided_slice %213 {offsets = [0, 0], sizes = [16, 8], strides = [1, 1]} : vector<16x32xf32> to vector<16x8xf32>
    %228 = vector.shape_cast %227 : vector<16x8xf32> to vector<2x8x8xf32>
    %229 = arith.truncf %228 : vector<2x8x8xf32> to vector<2x8x8xbf16>
    %230 = vector.extract_strided_slice %219 {offsets = [0, 0], sizes = [32, 8], strides = [1, 1]} : vector<32x32xf32> to vector<32x8xf32>
    %231 = vector.shape_cast %230 : vector<32x8xf32> to vector<2x16x8xf32>
    %232 = arith.truncf %231 : vector<2x16x8xf32> to vector<2x16x8xbf16>
    %233 = vector.extract_strided_slice %225 {offsets = [0, 0], sizes = [32, 8], strides = [1, 1]} : vector<32x32xf32> to vector<32x8xf32>
    %234 = vector.shape_cast %233 : vector<32x8xf32> to vector<2x16x8xf32>
    %235 = arith.truncf %234 : vector<2x16x8xf32> to vector<2x16x8xbf16>
    "tpu.trace_start"() <{level = 10 : i32, message = "btd,bsd->bts"}> : () -> ()
    %cst_84 = arith.constant dense<0.000000e+00> : vector<2x8x16xf32>
    %236 = tpu.matmul %229, %232, %cst_84 {dimension_numbers = #tpu.dot_dimension_numbers<[2], [2], [1], [1], [0, 0, 0, 1, 1, 1], [0], [0]>} : vector<2x8x8xbf16>, vector<2x16x8xbf16>, vector<2x8x16xf32> -> vector<2x8x16xf32>
    "tpu.trace_stop"() : () -> ()
    %cst_85 = arith.constant dense<0xFF800000> : vector<2x8xf32>
    %237 = vector.multi_reduction <maximumf>, %236, %cst_85 [2] : vector<2x8x16xf32> to vector<2x8xf32>
    %238 = vector.shape_cast %237 : vector<2x8xf32> to vector<2x8x1xf32>
    %239 = vector.broadcast %238 : vector<2x8x1xf32> to vector<2x8x16xf32>
    %240 = arith.subf %236, %239 : vector<2x8x16xf32>
    %241 = math.exp %240 : vector<2x8x16xf32>
    %cst_86 = arith.constant dense<0.000000e+00> : vector<2x8xf32>
    %242 = vector.multi_reduction <add>, %241, %cst_86 [2] : vector<2x8x16xf32> to vector<2x8xf32>
    %243 = vector.shape_cast %242 : vector<2x8xf32> to vector<2x8x1xf32>
    %244 = tpu.reciprocal %243 {approx = true} : vector<2x8x1xf32> -> vector<2x8x1xf32>
    %245 = vector.broadcast %244 : vector<2x8x1xf32> to vector<2x8x16xf32>
    %246 = arith.mulf %241, %245 : vector<2x8x16xf32>
    %247 = arith.truncf %246 : vector<2x8x16xf32> to vector<2x8x16xbf16>
    "tpu.trace_start"() <{level = 10 : i32, message = "bts,bsd->btd"}> : () -> ()
    %cst_87 = arith.constant dense<0.000000e+00> : vector<2x8x8xf32>
    %248 = tpu.matmul %247, %235, %cst_87 {dimension_numbers = #tpu.dot_dimension_numbers<[2], [1], [1], [2], [0, 0, 0, 1, 1, 2], [0], [0]>} : vector<2x8x16xbf16>, vector<2x16x8xbf16>, vector<2x8x8xf32> -> vector<2x8x8xf32>
    "tpu.trace_stop"() : () -> ()
    %249 = vector.shape_cast %248 : vector<2x8x8xf32> to vector<16x8xf32>
    %250 = arith.truncf %249 : vector<16x8xf32> to vector<16x8xbf16>
    %251 = vector.extract_strided_slice %226 {offsets = [0, 0], sizes = [8, 32], strides = [1, 1]} : vector<32x32xf32> to vector<8x32xf32>
    %252 = arith.truncf %251 : vector<8x32xf32> to vector<8x32xbf16>
    %cst_88 = arith.constant dense<0.000000e+00> : vector<16x32xf32>
    %253 = tpu.matmul %250, %252, %cst_88 {dimension_numbers = #tpu.dot_dimension_numbers<[1], [0], [0], [1], [0, 0, 1, 1], [], []>} : vector<16x8xbf16>, vector<8x32xbf16>, vector<16x32xf32> -> vector<16x32xf32>
    %254 = vector.extract_strided_slice %213 {offsets = [0, 8], sizes = [16, 8], strides = [1, 1]} : vector<16x32xf32> to vector<16x8xf32>
    %255 = vector.shape_cast %254 : vector<16x8xf32> to vector<2x8x8xf32>
    %256 = arith.truncf %255 : vector<2x8x8xf32> to vector<2x8x8xbf16>
    %257 = vector.extract_strided_slice %219 {offsets = [0, 8], sizes = [32, 8], strides = [1, 1]} : vector<32x32xf32> to vector<32x8xf32>
    %258 = vector.shape_cast %257 : vector<32x8xf32> to vector<2x16x8xf32>
    %259 = arith.truncf %258 : vector<2x16x8xf32> to vector<2x16x8xbf16>
    %260 = vector.extract_strided_slice %225 {offsets = [0, 8], sizes = [32, 8], strides = [1, 1]} : vector<32x32xf32> to vector<32x8xf32>
    %261 = vector.shape_cast %260 : vector<32x8xf32> to vector<2x16x8xf32>
    %262 = arith.truncf %261 : vector<2x16x8xf32> to vector<2x16x8xbf16>
    "tpu.trace_start"() <{level = 10 : i32, message = "btd,bsd->bts"}> : () -> ()
    %cst_89 = arith.constant dense<0.000000e+00> : vector<2x8x16xf32>
    %263 = tpu.matmul %256, %259, %cst_89 {dimension_numbers = #tpu.dot_dimension_numbers<[2], [2], [1], [1], [0, 0, 0, 1, 1, 1], [0], [0]>} : vector<2x8x8xbf16>, vector<2x16x8xbf16>, vector<2x8x16xf32> -> vector<2x8x16xf32>
    "tpu.trace_stop"() : () -> ()
    %cst_90 = arith.constant dense<0xFF800000> : vector<2x8xf32>
    %264 = vector.multi_reduction <maximumf>, %263, %cst_90 [2] : vector<2x8x16xf32> to vector<2x8xf32>
    %265 = vector.shape_cast %264 : vector<2x8xf32> to vector<2x8x1xf32>
    %266 = vector.broadcast %265 : vector<2x8x1xf32> to vector<2x8x16xf32>
    %267 = arith.subf %263, %266 : vector<2x8x16xf32>
    %268 = math.exp %267 : vector<2x8x16xf32>
    %cst_91 = arith.constant dense<0.000000e+00> : vector<2x8xf32>
    %269 = vector.multi_reduction <add>, %268, %cst_91 [2] : vector<2x8x16xf32> to vector<2x8xf32>
    %270 = vector.shape_cast %269 : vector<2x8xf32> to vector<2x8x1xf32>
    %271 = tpu.reciprocal %270 {approx = true} : vector<2x8x1xf32> -> vector<2x8x1xf32>
    %272 = vector.broadcast %271 : vector<2x8x1xf32> to vector<2x8x16xf32>
    %273 = arith.mulf %268, %272 : vector<2x8x16xf32>
    %274 = arith.truncf %273 : vector<2x8x16xf32> to vector<2x8x16xbf16>
    "tpu.trace_start"() <{level = 10 : i32, message = "bts,bsd->btd"}> : () -> ()
    %cst_92 = arith.constant dense<0.000000e+00> : vector<2x8x8xf32>
    %275 = tpu.matmul %274, %262, %cst_92 {dimension_numbers = #tpu.dot_dimension_numbers<[2], [1], [1], [2], [0, 0, 0, 1, 1, 2], [0], [0]>} : vector<2x8x16xbf16>, vector<2x16x8xbf16>, vector<2x8x8xf32> -> vector<2x8x8xf32>
    "tpu.trace_stop"() : () -> ()
    %276 = vector.shape_cast %275 : vector<2x8x8xf32> to vector<16x8xf32>
    %277 = arith.truncf %276 : vector<16x8xf32> to vector<16x8xbf16>
    %278 = vector.extract_strided_slice %226 {offsets = [8, 0], sizes = [8, 32], strides = [1, 1]} : vector<32x32xf32> to vector<8x32xf32>
    %279 = arith.truncf %278 : vector<8x32xf32> to vector<8x32xbf16>
    %cst_93 = arith.constant dense<0.000000e+00> : vector<16x32xf32>
    %280 = tpu.matmul %277, %279, %cst_93 {dimension_numbers = #tpu.dot_dimension_numbers<[1], [0], [0], [1], [0, 0, 1, 1], [], []>} : vector<16x8xbf16>, vector<8x32xbf16>, vector<16x32xf32> -> vector<16x32xf32>
    %281 = arith.addf %253, %280 : vector<16x32xf32>
    %282 = vector.extract_strided_slice %213 {offsets = [0, 16], sizes = [16, 8], strides = [1, 1]} : vector<16x32xf32> to vector<16x8xf32>
    %283 = vector.shape_cast %282 : vector<16x8xf32> to vector<2x8x8xf32>
    %284 = arith.truncf %283 : vector<2x8x8xf32> to vector<2x8x8xbf16>
    %285 = vector.extract_strided_slice %219 {offsets = [0, 16], sizes = [32, 8], strides = [1, 1]} : vector<32x32xf32> to vector<32x8xf32>
    %286 = vector.shape_cast %285 : vector<32x8xf32> to vector<2x16x8xf32>
    %287 = arith.truncf %286 : vector<2x16x8xf32> to vector<2x16x8xbf16>
    %288 = vector.extract_strided_slice %225 {offsets = [0, 16], sizes = [32, 8], strides = [1, 1]} : vector<32x32xf32> to vector<32x8xf32>
    %289 = vector.shape_cast %288 : vector<32x8xf32> to vector<2x16x8xf32>
    %290 = arith.truncf %289 : vector<2x16x8xf32> to vector<2x16x8xbf16>
    "tpu.trace_start"() <{level = 10 : i32, message = "btd,bsd->bts"}> : () -> ()
    %cst_94 = arith.constant dense<0.000000e+00> : vector<2x8x16xf32>
    %291 = tpu.matmul %284, %287, %cst_94 {dimension_numbers = #tpu.dot_dimension_numbers<[2], [2], [1], [1], [0, 0, 0, 1, 1, 1], [0], [0]>} : vector<2x8x8xbf16>, vector<2x16x8xbf16>, vector<2x8x16xf32> -> vector<2x8x16xf32>
    "tpu.trace_stop"() : () -> ()
    %cst_95 = arith.constant dense<0xFF800000> : vector<2x8xf32>
    %292 = vector.multi_reduction <maximumf>, %291, %cst_95 [2] : vector<2x8x16xf32> to vector<2x8xf32>
    %293 = vector.shape_cast %292 : vector<2x8xf32> to vector<2x8x1xf32>
    %294 = vector.broadcast %293 : vector<2x8x1xf32> to vector<2x8x16xf32>
    %295 = arith.subf %291, %294 : vector<2x8x16xf32>
    %296 = math.exp %295 : vector<2x8x16xf32>
    %cst_96 = arith.constant dense<0.000000e+00> : vector<2x8xf32>
    %297 = vector.multi_reduction <add>, %296, %cst_96 [2] : vector<2x8x16xf32> to vector<2x8xf32>
    %298 = vector.shape_cast %297 : vector<2x8xf32> to vector<2x8x1xf32>
    %299 = tpu.reciprocal %298 {approx = true} : vector<2x8x1xf32> -> vector<2x8x1xf32>
    %300 = vector.broadcast %299 : vector<2x8x1xf32> to vector<2x8x16xf32>
    %301 = arith.mulf %296, %300 : vector<2x8x16xf32>
    %302 = arith.truncf %301 : vector<2x8x16xf32> to vector<2x8x16xbf16>
    "tpu.trace_start"() <{level = 10 : i32, message = "bts,bsd->btd"}> : () -> ()
    %cst_97 = arith.constant dense<0.000000e+00> : vector<2x8x8xf32>
    %303 = tpu.matmul %302, %290, %cst_97 {dimension_numbers = #tpu.dot_dimension_numbers<[2], [1], [1], [2], [0, 0, 0, 1, 1, 2], [0], [0]>} : vector<2x8x16xbf16>, vector<2x16x8xbf16>, vector<2x8x8xf32> -> vector<2x8x8xf32>
    "tpu.trace_stop"() : () -> ()
    %304 = vector.shape_cast %303 : vector<2x8x8xf32> to vector<16x8xf32>
    %305 = arith.truncf %304 : vector<16x8xf32> to vector<16x8xbf16>
    %306 = vector.extract_strided_slice %226 {offsets = [16, 0], sizes = [8, 32], strides = [1, 1]} : vector<32x32xf32> to vector<8x32xf32>
    %307 = arith.truncf %306 : vector<8x32xf32> to vector<8x32xbf16>
    %cst_98 = arith.constant dense<0.000000e+00> : vector<16x32xf32>
    %308 = tpu.matmul %305, %307, %cst_98 {dimension_numbers = #tpu.dot_dimension_numbers<[1], [0], [0], [1], [0, 0, 1, 1], [], []>} : vector<16x8xbf16>, vector<8x32xbf16>, vector<16x32xf32> -> vector<16x32xf32>
    %309 = arith.addf %281, %308 : vector<16x32xf32>
    %310 = vector.extract_strided_slice %213 {offsets = [0, 24], sizes = [16, 8], strides = [1, 1]} : vector<16x32xf32> to vector<16x8xf32>
    %311 = vector.shape_cast %310 : vector<16x8xf32> to vector<2x8x8xf32>
    %312 = arith.truncf %311 : vector<2x8x8xf32> to vector<2x8x8xbf16>
    %313 = vector.extract_strided_slice %219 {offsets = [0, 24], sizes = [32, 8], strides = [1, 1]} : vector<32x32xf32> to vector<32x8xf32>
    %314 = vector.shape_cast %313 : vector<32x8xf32> to vector<2x16x8xf32>
    %315 = arith.truncf %314 : vector<2x16x8xf32> to vector<2x16x8xbf16>
    %316 = vector.extract_strided_slice %225 {offsets = [0, 24], sizes = [32, 8], strides = [1, 1]} : vector<32x32xf32> to vector<32x8xf32>
    %317 = vector.shape_cast %316 : vector<32x8xf32> to vector<2x16x8xf32>
    %318 = arith.truncf %317 : vector<2x16x8xf32> to vector<2x16x8xbf16>
    "tpu.trace_start"() <{level = 10 : i32, message = "btd,bsd->bts"}> : () -> ()
    %cst_99 = arith.constant dense<0.000000e+00> : vector<2x8x16xf32>
    %319 = tpu.matmul %312, %315, %cst_99 {dimension_numbers = #tpu.dot_dimension_numbers<[2], [2], [1], [1], [0, 0, 0, 1, 1, 1], [0], [0]>} : vector<2x8x8xbf16>, vector<2x16x8xbf16>, vector<2x8x16xf32> -> vector<2x8x16xf32>
    "tpu.trace_stop"() : () -> ()
    %cst_100 = arith.constant dense<0xFF800000> : vector<2x8xf32>
    %320 = vector.multi_reduction <maximumf>, %319, %cst_100 [2] : vector<2x8x16xf32> to vector<2x8xf32>
    %321 = vector.shape_cast %320 : vector<2x8xf32> to vector<2x8x1xf32>
    %322 = vector.broadcast %321 : vector<2x8x1xf32> to vector<2x8x16xf32>
    %323 = arith.subf %319, %322 : vector<2x8x16xf32>
    %324 = math.exp %323 : vector<2x8x16xf32>
    %cst_101 = arith.constant dense<0.000000e+00> : vector<2x8xf32>
    %325 = vector.multi_reduction <add>, %324, %cst_101 [2] : vector<2x8x16xf32> to vector<2x8xf32>
    %326 = vector.shape_cast %325 : vector<2x8xf32> to vector<2x8x1xf32>
    %327 = tpu.reciprocal %326 {approx = true} : vector<2x8x1xf32> -> vector<2x8x1xf32>
    %328 = vector.broadcast %327 : vector<2x8x1xf32> to vector<2x8x16xf32>
    %329 = arith.mulf %324, %328 : vector<2x8x16xf32>
    %330 = arith.truncf %329 : vector<2x8x16xf32> to vector<2x8x16xbf16>
    "tpu.trace_start"() <{level = 10 : i32, message = "bts,bsd->btd"}> : () -> ()
    %cst_102 = arith.constant dense<0.000000e+00> : vector<2x8x8xf32>
    %331 = tpu.matmul %330, %318, %cst_102 {dimension_numbers = #tpu.dot_dimension_numbers<[2], [1], [1], [2], [0, 0, 0, 1, 1, 2], [0], [0]>} : vector<2x8x16xbf16>, vector<2x16x8xbf16>, vector<2x8x8xf32> -> vector<2x8x8xf32>
    "tpu.trace_stop"() : () -> ()
    %332 = vector.shape_cast %331 : vector<2x8x8xf32> to vector<16x8xf32>
    %333 = arith.truncf %332 : vector<16x8xf32> to vector<16x8xbf16>
    %334 = vector.extract_strided_slice %226 {offsets = [24, 0], sizes = [8, 32], strides = [1, 1]} : vector<32x32xf32> to vector<8x32xf32>
    %335 = arith.truncf %334 : vector<8x32xf32> to vector<8x32xbf16>
    %cst_103 = arith.constant dense<0.000000e+00> : vector<16x32xf32>
    %336 = tpu.matmul %333, %335, %cst_103 {dimension_numbers = #tpu.dot_dimension_numbers<[1], [0], [0], [1], [0, 0, 1, 1], [], []>} : vector<16x8xbf16>, vector<8x32xbf16>, vector<16x32xf32> -> vector<16x32xf32>
    %337 = arith.addf %309, %336 : vector<16x32xf32>
    %c0_104 = arith.constant 0 : index
    %c0_105 = arith.constant 0 : index
    %338 = vector.load %arg25[%c0_104, %c0_105] : memref<1x32xf32, #tpu.memory_space<vmem>>, vector<1x32xf32>
    %339 = vector.broadcast %338 : vector<1x32xf32> to vector<16x32xf32>
    %340 = arith.addf %337, %339 : vector<16x32xf32>
    %341 = arith.addf %178, %340 : vector<16x32xf32>
    %c0_106 = arith.constant 0 : index
    %c0_107 = arith.constant 0 : index
    %342 = vector.load %arg8[%c0_106, %c0_107] : memref<1x32xf32, #tpu.memory_space<vmem>>, vector<1x32xf32>
    %c0_108 = arith.constant 0 : index
    %c0_109 = arith.constant 0 : index
    %343 = vector.load %arg9[%c0_108, %c0_109] : memref<1x32xf32, #tpu.memory_space<vmem>>, vector<1x32xf32>
    %cst_110 = arith.constant dense<0.000000e+00> : vector<16xf32>
    %344 = vector.multi_reduction <add>, %341, %cst_110 [1] : vector<16x32xf32> to vector<16xf32>
    %345 = vector.shape_cast %344 : vector<16xf32> to vector<16x1xf32>
    %cst_111 = arith.constant 3.200000e+01 : f32
    %346 = vector.broadcast %cst_111 : f32 to vector<16x1xf32>
    %347 = arith.divf %345, %346 : vector<16x1xf32>
    %348 = vector.broadcast %347 : vector<16x1xf32> to vector<16x32xf32>
    %349 = arith.subf %341, %348 : vector<16x32xf32>
    %350 = arith.mulf %349, %349 : vector<16x32xf32>
    %cst_112 = arith.constant dense<0.000000e+00> : vector<16xf32>
    %351 = vector.multi_reduction <add>, %350, %cst_112 [1] : vector<16x32xf32> to vector<16xf32>
    %352 = vector.shape_cast %351 : vector<16xf32> to vector<16x1xf32>
    %cst_113 = arith.constant 0.0322580636 : f32
    %353 = vector.broadcast %cst_113 : f32 to vector<16x1xf32>
    %354 = arith.mulf %352, %353 : vector<16x1xf32>
    %355 = math.sqrt %354 : vector<16x1xf32>
    %356 = vector.broadcast %347 : vector<16x1xf32> to vector<16x32xf32>
    %357 = arith.subf %341, %356 : vector<16x32xf32>
    %cst_114 = arith.constant 9.99999997E-7 : f32
    %358 = vector.broadcast %cst_114 : f32 to vector<16x1xf32>
    %359 = arith.addf %355, %358 : vector<16x1xf32>
    %360 = tpu.reciprocal %359 {approx = true} : vector<16x1xf32> -> vector<16x1xf32>
    %361 = vector.broadcast %360 : vector<16x1xf32> to vector<16x32xf32>
    %362 = arith.mulf %357, %361 : vector<16x32xf32>
    %363 = vector.broadcast %342 : vector<1x32xf32> to vector<16x32xf32>
    %364 = arith.mulf %363, %362 : vector<16x32xf32>
    %365 = vector.broadcast %343 : vector<1x32xf32> to vector<16x32xf32>
    %366 = arith.addf %364, %365 : vector<16x32xf32>
    %367 = arith.truncf %366 : vector<16x32xf32> to vector<16x32xbf16>
    %c0_115 = arith.constant 0 : index
    %c0_116 = arith.constant 0 : index
    %368 = vector.load %arg26[%c0_115, %c0_116] : memref<32x64xf32, #tpu.memory_space<vmem>>, vector<32x64xf32>
    %369 = arith.truncf %368 : vector<32x64xf32> to vector<32x64xbf16>
    %cst_117 = arith.constant dense<0.000000e+00> : vector<16x64xf32>
    %370 = tpu.matmul %367, %369, %cst_117 {dimension_numbers = #tpu.dot_dimension_numbers<[1], [0], [0], [1], [0, 0, 1, 1], [], []>} : vector<16x32xbf16>, vector<32x64xbf16>, vector<16x64xf32> -> vector<16x64xf32>
    %c0_118 = arith.constant 0 : index
    %c0_119 = arith.constant 0 : index
    %371 = vector.load %arg27[%c0_118, %c0_119] : memref<1x64xf32, #tpu.memory_space<vmem>>, vector<1x64xf32>
    %372 = vector.broadcast %371 : vector<1x64xf32> to vector<16x64xf32>
    %373 = arith.addf %370, %372 : vector<16x64xf32>
    %cst_120 = arith.constant 0.000000e+00 : f32
    %374 = vector.broadcast %cst_120 : f32 to vector<16x64xf32>
    %375 = arith.maximumf %373, %374 : vector<16x64xf32>
    %376 = arith.truncf %375 : vector<16x64xf32> to vector<16x64xbf16>
    %c0_121 = arith.constant 0 : index
    %c0_122 = arith.constant 0 : index
    %377 = vector.load %arg28[%c0_121, %c0_122] : memref<64x32xf32, #tpu.memory_space<vmem>>, vector<64x32xf32>
    %378 = arith.truncf %377 : vector<64x32xf32> to vector<64x32xbf16>
    %cst_123 = arith.constant dense<0.000000e+00> : vector<16x32xf32>
    %379 = tpu.matmul %376, %378, %cst_123 {dimension_numbers = #tpu.dot_dimension_numbers<[1], [0], [0], [1], [0, 0, 1, 1], [], []>} : vector<16x64xbf16>, vector<64x32xbf16>, vector<16x32xf32> -> vector<16x32xf32>
    %c0_124 = arith.constant 0 : index
    %c0_125 = arith.constant 0 : index
    %380 = vector.load %arg29[%c0_124, %c0_125] : memref<1x32xf32, #tpu.memory_space<vmem>>, vector<1x32xf32>
    %381 = vector.broadcast %380 : vector<1x32xf32> to vector<16x32xf32>
    %382 = arith.addf %379, %381 : vector<16x32xf32>
    %383 = arith.addf %341, %382 : vector<16x32xf32>
    %c0_126 = arith.constant 0 : index
    %c0_127 = arith.constant 0 : index
    %384 = vector.load %arg30[%c0_126, %c0_127] : memref<1x32xf32, #tpu.memory_space<vmem>>, vector<1x32xf32>
    %c0_128 = arith.constant 0 : index
    %c0_129 = arith.constant 0 : index
    %385 = vector.load %arg31[%c0_128, %c0_129] : memref<1x32xf32, #tpu.memory_space<vmem>>, vector<1x32xf32>
    %cst_130 = arith.constant dense<0.000000e+00> : vector<16xf32>
    %386 = vector.multi_reduction <add>, %383, %cst_130 [1] : vector<16x32xf32> to vector<16xf32>
    %387 = vector.shape_cast %386 : vector<16xf32> to vector<16x1xf32>
    %cst_131 = arith.constant 3.200000e+01 : f32
    %388 = vector.broadcast %cst_131 : f32 to vector<16x1xf32>
    %389 = arith.divf %387, %388 : vector<16x1xf32>
    %390 = vector.broadcast %389 : vector<16x1xf32> to vector<16x32xf32>
    %391 = arith.subf %383, %390 : vector<16x32xf32>
    %392 = arith.mulf %391, %391 : vector<16x32xf32>
    %cst_132 = arith.constant dense<0.000000e+00> : vector<16xf32>
    %393 = vector.multi_reduction <add>, %392, %cst_132 [1] : vector<16x32xf32> to vector<16xf32>
    %394 = vector.shape_cast %393 : vector<16xf32> to vector<16x1xf32>
    %cst_133 = arith.constant 0.0322580636 : f32
    %395 = vector.broadcast %cst_133 : f32 to vector<16x1xf32>
    %396 = arith.mulf %394, %395 : vector<16x1xf32>
    %397 = math.sqrt %396 : vector<16x1xf32>
    %398 = vector.broadcast %389 : vector<16x1xf32> to vector<16x32xf32>
    %399 = arith.subf %383, %398 : vector<16x32xf32>
    %cst_134 = arith.constant 9.99999997E-7 : f32
    %400 = vector.broadcast %cst_134 : f32 to vector<16x1xf32>
    %401 = arith.addf %397, %400 : vector<16x1xf32>
    %402 = tpu.reciprocal %401 {approx = true} : vector<16x1xf32> -> vector<16x1xf32>
    %403 = vector.broadcast %402 : vector<16x1xf32> to vector<16x32xf32>
    %404 = arith.mulf %399, %403 : vector<16x32xf32>
    %405 = vector.broadcast %384 : vector<1x32xf32> to vector<16x32xf32>
    %406 = arith.mulf %405, %404 : vector<16x32xf32>
    %407 = vector.broadcast %385 : vector<1x32xf32> to vector<16x32xf32>
    %408 = arith.addf %406, %407 : vector<16x32xf32>
    %409 = arith.truncf %408 : vector<16x32xf32> to vector<16x32xbf16>
    %410 = arith.truncf %408 : vector<16x32xf32> to vector<16x32xbf16>
    %c0_135 = arith.constant 0 : index
    %c0_136 = arith.constant 0 : index
    %411 = vector.load %arg36[%c0_135, %c0_136] : memref<32x32xf32, #tpu.memory_space<vmem>>, vector<32x32xf32>
    %412 = arith.truncf %411 : vector<32x32xf32> to vector<32x32xbf16>
    %cst_137 = arith.constant dense<0.000000e+00> : vector<16x32xf32>
    %413 = tpu.matmul %409, %412, %cst_137 {dimension_numbers = #tpu.dot_dimension_numbers<[1], [0], [0], [1], [0, 0, 1, 1], [], []>} : vector<16x32xbf16>, vector<32x32xbf16>, vector<16x32xf32> -> vector<16x32xf32>
    %c0_138 = arith.constant 0 : index
    %c0_139 = arith.constant 0 : index
    %414 = vector.load %arg37[%c0_138, %c0_139] : memref<1x32xf32, #tpu.memory_space<vmem>>, vector<1x32xf32>
    %415 = vector.broadcast %414 : vector<1x32xf32> to vector<16x32xf32>
    %416 = arith.addf %413, %415 : vector<16x32xf32>
    %cst_140 = arith.constant 0.353553385 : f32
    %417 = vector.broadcast %cst_140 : f32 to vector<16x32xf32>
    %418 = arith.mulf %416, %417 : vector<16x32xf32>
    %c0_141 = arith.constant 0 : index
    %c0_142 = arith.constant 0 : index
    %419 = vector.load %arg38[%c0_141, %c0_142] : memref<32x32xf32, #tpu.memory_space<vmem>>, vector<32x32xf32>
    %420 = arith.truncf %419 : vector<32x32xf32> to vector<32x32xbf16>
    %cst_143 = arith.constant dense<0.000000e+00> : vector<16x32xf32>
    %421 = tpu.matmul %410, %420, %cst_143 {dimension_numbers = #tpu.dot_dimension_numbers<[1], [0], [0], [1], [0, 0, 1, 1], [], []>} : vector<16x32xbf16>, vector<32x32xbf16>, vector<16x32xf32> -> vector<16x32xf32>
    %c0_144 = arith.constant 0 : index
    %c0_145 = arith.constant 0 : index
    %422 = vector.load %arg39[%c0_144, %c0_145] : memref<1x32xf32, #tpu.memory_space<vmem>>, vector<1x32xf32>
    %423 = vector.broadcast %422 : vector<1x32xf32> to vector<16x32xf32>
    %424 = arith.addf %421, %423 : vector<16x32xf32>
    %c0_146 = arith.constant 0 : index
    %c0_147 = arith.constant 0 : index
    %425 = vector.load %arg40[%c0_146, %c0_147] : memref<32x32xf32, #tpu.memory_space<vmem>>, vector<32x32xf32>
    %426 = arith.truncf %425 : vector<32x32xf32> to vector<32x32xbf16>
    %cst_148 = arith.constant dense<0.000000e+00> : vector<16x32xf32>
    %427 = tpu.matmul %410, %426, %cst_148 {dimension_numbers = #tpu.dot_dimension_numbers<[1], [0], [0], [1], [0, 0, 1, 1], [], []>} : vector<16x32xbf16>, vector<32x32xbf16>, vector<16x32xf32> -> vector<16x32xf32>
    %c0_149 = arith.constant 0 : index
    %c0_150 = arith.constant 0 : index
    %428 = vector.load %arg41[%c0_149, %c0_150] : memref<1x32xf32, #tpu.memory_space<vmem>>, vector<1x32xf32>
    %429 = vector.broadcast %428 : vector<1x32xf32> to vector<16x32xf32>
    %430 = arith.addf %427, %429 : vector<16x32xf32>
    %c0_151 = arith.constant 0 : index
    %c0_152 = arith.constant 0 : index
    %431 = vector.load %arg42[%c0_151, %c0_152] : memref<32x32xf32, #tpu.memory_space<vmem>>, vector<32x32xf32>
    %432 = vector.extract_strided_slice %418 {offsets = [0, 0], sizes = [16, 8], strides = [1, 1]} : vector<16x32xf32> to vector<16x8xf32>
    %433 = vector.shape_cast %432 : vector<16x8xf32> to vector<2x8x8xf32>
    %434 = arith.truncf %433 : vector<2x8x8xf32> to vector<2x8x8xbf16>
    %435 = vector.extract_strided_slice %424 {offsets = [0, 0], sizes = [16, 8], strides = [1, 1]} : vector<16x32xf32> to vector<16x8xf32>
    %436 = vector.shape_cast %435 : vector<16x8xf32> to vector<2x8x8xf32>
    %437 = arith.truncf %436 : vector<2x8x8xf32> to vector<2x8x8xbf16>
    %438 = vector.extract_strided_slice %430 {offsets = [0, 0], sizes = [16, 8], strides = [1, 1]} : vector<16x32xf32> to vector<16x8xf32>
    %439 = vector.shape_cast %438 : vector<16x8xf32> to vector<2x8x8xf32>
    %440 = arith.truncf %439 : vector<2x8x8xf32> to vector<2x8x8xbf16>
    "tpu.trace_start"() <{level = 10 : i32, message = "btd,bsd->bts"}> : () -> ()
    %cst_153 = arith.constant dense<0.000000e+00> : vector<2x8x8xf32>
    %441 = tpu.matmul %434, %437, %cst_153 {dimension_numbers = #tpu.dot_dimension_numbers<[2], [2], [1], [1], [0, 0, 0, 1, 1, 1], [0], [0]>} : vector<2x8x8xbf16>, vector<2x8x8xbf16>, vector<2x8x8xf32> -> vector<2x8x8xf32>
    "tpu.trace_stop"() : () -> ()
    %cst_154 = arith.constant dense<0xFF800000> : vector<2x8xf32>
    %442 = vector.multi_reduction <maximumf>, %441, %cst_154 [2] : vector<2x8x8xf32> to vector<2x8xf32>
    %443 = vector.shape_cast %442 : vector<2x8xf32> to vector<2x8x1xf32>
    %444 = vector.broadcast %443 : vector<2x8x1xf32> to vector<2x8x8xf32>
    %445 = arith.subf %441, %444 : vector<2x8x8xf32>
    %446 = math.exp %445 : vector<2x8x8xf32>
    %cst_155 = arith.constant dense<0.000000e+00> : vector<2x8xf32>
    %447 = vector.multi_reduction <add>, %446, %cst_155 [2] : vector<2x8x8xf32> to vector<2x8xf32>
    %448 = vector.shape_cast %447 : vector<2x8xf32> to vector<2x8x1xf32>
    %449 = tpu.reciprocal %448 {approx = true} : vector<2x8x1xf32> -> vector<2x8x1xf32>
    %450 = vector.broadcast %449 : vector<2x8x1xf32> to vector<2x8x8xf32>
    %451 = arith.mulf %446, %450 : vector<2x8x8xf32>
    %452 = arith.truncf %451 : vector<2x8x8xf32> to vector<2x8x8xbf16>
    "tpu.trace_start"() <{level = 10 : i32, message = "bts,bsd->btd"}> : () -> ()
    %cst_156 = arith.constant dense<0.000000e+00> : vector<2x8x8xf32>
    %453 = tpu.matmul %452, %440, %cst_156 {dimension_numbers = #tpu.dot_dimension_numbers<[2], [1], [1], [2], [0, 0, 0, 1, 1, 2], [0], [0]>} : vector<2x8x8xbf16>, vector<2x8x8xbf16>, vector<2x8x8xf32> -> vector<2x8x8xf32>
    "tpu.trace_stop"() : () -> ()
    %454 = vector.shape_cast %453 : vector<2x8x8xf32> to vector<16x8xf32>
    %455 = arith.truncf %454 : vector<16x8xf32> to vector<16x8xbf16>
    %456 = vector.extract_strided_slice %431 {offsets = [0, 0], sizes = [8, 32], strides = [1, 1]} : vector<32x32xf32> to vector<8x32xf32>
    %457 = arith.truncf %456 : vector<8x32xf32> to vector<8x32xbf16>
    %cst_157 = arith.constant dense<0.000000e+00> : vector<16x32xf32>
    %458 = tpu.matmul %455, %457, %cst_157 {dimension_numbers = #tpu.dot_dimension_numbers<[1], [0], [0], [1], [0, 0, 1, 1], [], []>} : vector<16x8xbf16>, vector<8x32xbf16>, vector<16x32xf32> -> vector<16x32xf32>
    %459 = vector.extract_strided_slice %418 {offsets = [0, 8], sizes = [16, 8], strides = [1, 1]} : vector<16x32xf32> to vector<16x8xf32>
    %460 = vector.shape_cast %459 : vector<16x8xf32> to vector<2x8x8xf32>
    %461 = arith.truncf %460 : vector<2x8x8xf32> to vector<2x8x8xbf16>
    %462 = vector.extract_strided_slice %424 {offsets = [0, 8], sizes = [16, 8], strides = [1, 1]} : vector<16x32xf32> to vector<16x8xf32>
    %463 = vector.shape_cast %462 : vector<16x8xf32> to vector<2x8x8xf32>
    %464 = arith.truncf %463 : vector<2x8x8xf32> to vector<2x8x8xbf16>
    %465 = vector.extract_strided_slice %430 {offsets = [0, 8], sizes = [16, 8], strides = [1, 1]} : vector<16x32xf32> to vector<16x8xf32>
    %466 = vector.shape_cast %465 : vector<16x8xf32> to vector<2x8x8xf32>
    %467 = arith.truncf %466 : vector<2x8x8xf32> to vector<2x8x8xbf16>
    "tpu.trace_start"() <{level = 10 : i32, message = "btd,bsd->bts"}> : () -> ()
    %cst_158 = arith.constant dense<0.000000e+00> : vector<2x8x8xf32>
    %468 = tpu.matmul %461, %464, %cst_158 {dimension_numbers = #tpu.dot_dimension_numbers<[2], [2], [1], [1], [0, 0, 0, 1, 1, 1], [0], [0]>} : vector<2x8x8xbf16>, vector<2x8x8xbf16>, vector<2x8x8xf32> -> vector<2x8x8xf32>
    "tpu.trace_stop"() : () -> ()
    %cst_159 = arith.constant dense<0xFF800000> : vector<2x8xf32>
    %469 = vector.multi_reduction <maximumf>, %468, %cst_159 [2] : vector<2x8x8xf32> to vector<2x8xf32>
    %470 = vector.shape_cast %469 : vector<2x8xf32> to vector<2x8x1xf32>
    %471 = vector.broadcast %470 : vector<2x8x1xf32> to vector<2x8x8xf32>
    %472 = arith.subf %468, %471 : vector<2x8x8xf32>
    %473 = math.exp %472 : vector<2x8x8xf32>
    %cst_160 = arith.constant dense<0.000000e+00> : vector<2x8xf32>
    %474 = vector.multi_reduction <add>, %473, %cst_160 [2] : vector<2x8x8xf32> to vector<2x8xf32>
    %475 = vector.shape_cast %474 : vector<2x8xf32> to vector<2x8x1xf32>
    %476 = tpu.reciprocal %475 {approx = true} : vector<2x8x1xf32> -> vector<2x8x1xf32>
    %477 = vector.broadcast %476 : vector<2x8x1xf32> to vector<2x8x8xf32>
    %478 = arith.mulf %473, %477 : vector<2x8x8xf32>
    %479 = arith.truncf %478 : vector<2x8x8xf32> to vector<2x8x8xbf16>
    "tpu.trace_start"() <{level = 10 : i32, message = "bts,bsd->btd"}> : () -> ()
    %cst_161 = arith.constant dense<0.000000e+00> : vector<2x8x8xf32>
    %480 = tpu.matmul %479, %467, %cst_161 {dimension_numbers = #tpu.dot_dimension_numbers<[2], [1], [1], [2], [0, 0, 0, 1, 1, 2], [0], [0]>} : vector<2x8x8xbf16>, vector<2x8x8xbf16>, vector<2x8x8xf32> -> vector<2x8x8xf32>
    "tpu.trace_stop"() : () -> ()
    %481 = vector.shape_cast %480 : vector<2x8x8xf32> to vector<16x8xf32>
    %482 = arith.truncf %481 : vector<16x8xf32> to vector<16x8xbf16>
    %483 = vector.extract_strided_slice %431 {offsets = [8, 0], sizes = [8, 32], strides = [1, 1]} : vector<32x32xf32> to vector<8x32xf32>
    %484 = arith.truncf %483 : vector<8x32xf32> to vector<8x32xbf16>
    %cst_162 = arith.constant dense<0.000000e+00> : vector<16x32xf32>
    %485 = tpu.matmul %482, %484, %cst_162 {dimension_numbers = #tpu.dot_dimension_numbers<[1], [0], [0], [1], [0, 0, 1, 1], [], []>} : vector<16x8xbf16>, vector<8x32xbf16>, vector<16x32xf32> -> vector<16x32xf32>
    %486 = arith.addf %458, %485 : vector<16x32xf32>
    %487 = vector.extract_strided_slice %418 {offsets = [0, 16], sizes = [16, 8], strides = [1, 1]} : vector<16x32xf32> to vector<16x8xf32>
    %488 = vector.shape_cast %487 : vector<16x8xf32> to vector<2x8x8xf32>
    %489 = arith.truncf %488 : vector<2x8x8xf32> to vector<2x8x8xbf16>
    %490 = vector.extract_strided_slice %424 {offsets = [0, 16], sizes = [16, 8], strides = [1, 1]} : vector<16x32xf32> to vector<16x8xf32>
    %491 = vector.shape_cast %490 : vector<16x8xf32> to vector<2x8x8xf32>
    %492 = arith.truncf %491 : vector<2x8x8xf32> to vector<2x8x8xbf16>
    %493 = vector.extract_strided_slice %430 {offsets = [0, 16], sizes = [16, 8], strides = [1, 1]} : vector<16x32xf32> to vector<16x8xf32>
    %494 = vector.shape_cast %493 : vector<16x8xf32> to vector<2x8x8xf32>
    %495 = arith.truncf %494 : vector<2x8x8xf32> to vector<2x8x8xbf16>
    "tpu.trace_start"() <{level = 10 : i32, message = "btd,bsd->bts"}> : () -> ()
    %cst_163 = arith.constant dense<0.000000e+00> : vector<2x8x8xf32>
    %496 = tpu.matmul %489, %492, %cst_163 {dimension_numbers = #tpu.dot_dimension_numbers<[2], [2], [1], [1], [0, 0, 0, 1, 1, 1], [0], [0]>} : vector<2x8x8xbf16>, vector<2x8x8xbf16>, vector<2x8x8xf32> -> vector<2x8x8xf32>
    "tpu.trace_stop"() : () -> ()
    %cst_164 = arith.constant dense<0xFF800000> : vector<2x8xf32>
    %497 = vector.multi_reduction <maximumf>, %496, %cst_164 [2] : vector<2x8x8xf32> to vector<2x8xf32>
    %498 = vector.shape_cast %497 : vector<2x8xf32> to vector<2x8x1xf32>
    %499 = vector.broadcast %498 : vector<2x8x1xf32> to vector<2x8x8xf32>
    %500 = arith.subf %496, %499 : vector<2x8x8xf32>
    %501 = math.exp %500 : vector<2x8x8xf32>
    %cst_165 = arith.constant dense<0.000000e+00> : vector<2x8xf32>
    %502 = vector.multi_reduction <add>, %501, %cst_165 [2] : vector<2x8x8xf32> to vector<2x8xf32>
    %503 = vector.shape_cast %502 : vector<2x8xf32> to vector<2x8x1xf32>
    %504 = tpu.reciprocal %503 {approx = true} : vector<2x8x1xf32> -> vector<2x8x1xf32>
    %505 = vector.broadcast %504 : vector<2x8x1xf32> to vector<2x8x8xf32>
    %506 = arith.mulf %501, %505 : vector<2x8x8xf32>
    %507 = arith.truncf %506 : vector<2x8x8xf32> to vector<2x8x8xbf16>
    "tpu.trace_start"() <{level = 10 : i32, message = "bts,bsd->btd"}> : () -> ()
    %cst_166 = arith.constant dense<0.000000e+00> : vector<2x8x8xf32>
    %508 = tpu.matmul %507, %495, %cst_166 {dimension_numbers = #tpu.dot_dimension_numbers<[2], [1], [1], [2], [0, 0, 0, 1, 1, 2], [0], [0]>} : vector<2x8x8xbf16>, vector<2x8x8xbf16>, vector<2x8x8xf32> -> vector<2x8x8xf32>
    "tpu.trace_stop"() : () -> ()
    %509 = vector.shape_cast %508 : vector<2x8x8xf32> to vector<16x8xf32>
    %510 = arith.truncf %509 : vector<16x8xf32> to vector<16x8xbf16>
    %511 = vector.extract_strided_slice %431 {offsets = [16, 0], sizes = [8, 32], strides = [1, 1]} : vector<32x32xf32> to vector<8x32xf32>
    %512 = arith.truncf %511 : vector<8x32xf32> to vector<8x32xbf16>
    %cst_167 = arith.constant dense<0.000000e+00> : vector<16x32xf32>
    %513 = tpu.matmul %510, %512, %cst_167 {dimension_numbers = #tpu.dot_dimension_numbers<[1], [0], [0], [1], [0, 0, 1, 1], [], []>} : vector<16x8xbf16>, vector<8x32xbf16>, vector<16x32xf32> -> vector<16x32xf32>
    %514 = arith.addf %486, %513 : vector<16x32xf32>
    %515 = vector.extract_strided_slice %418 {offsets = [0, 24], sizes = [16, 8], strides = [1, 1]} : vector<16x32xf32> to vector<16x8xf32>
    %516 = vector.shape_cast %515 : vector<16x8xf32> to vector<2x8x8xf32>
    %517 = arith.truncf %516 : vector<2x8x8xf32> to vector<2x8x8xbf16>
    %518 = vector.extract_strided_slice %424 {offsets = [0, 24], sizes = [16, 8], strides = [1, 1]} : vector<16x32xf32> to vector<16x8xf32>
    %519 = vector.shape_cast %518 : vector<16x8xf32> to vector<2x8x8xf32>
    %520 = arith.truncf %519 : vector<2x8x8xf32> to vector<2x8x8xbf16>
    %521 = vector.extract_strided_slice %430 {offsets = [0, 24], sizes = [16, 8], strides = [1, 1]} : vector<16x32xf32> to vector<16x8xf32>
    %522 = vector.shape_cast %521 : vector<16x8xf32> to vector<2x8x8xf32>
    %523 = arith.truncf %522 : vector<2x8x8xf32> to vector<2x8x8xbf16>
    "tpu.trace_start"() <{level = 10 : i32, message = "btd,bsd->bts"}> : () -> ()
    %cst_168 = arith.constant dense<0.000000e+00> : vector<2x8x8xf32>
    %524 = tpu.matmul %517, %520, %cst_168 {dimension_numbers = #tpu.dot_dimension_numbers<[2], [2], [1], [1], [0, 0, 0, 1, 1, 1], [0], [0]>} : vector<2x8x8xbf16>, vector<2x8x8xbf16>, vector<2x8x8xf32> -> vector<2x8x8xf32>
    "tpu.trace_stop"() : () -> ()
    %cst_169 = arith.constant dense<0xFF800000> : vector<2x8xf32>
    %525 = vector.multi_reduction <maximumf>, %524, %cst_169 [2] : vector<2x8x8xf32> to vector<2x8xf32>
    %526 = vector.shape_cast %525 : vector<2x8xf32> to vector<2x8x1xf32>
    %527 = vector.broadcast %526 : vector<2x8x1xf32> to vector<2x8x8xf32>
    %528 = arith.subf %524, %527 : vector<2x8x8xf32>
    %529 = math.exp %528 : vector<2x8x8xf32>
    %cst_170 = arith.constant dense<0.000000e+00> : vector<2x8xf32>
    %530 = vector.multi_reduction <add>, %529, %cst_170 [2] : vector<2x8x8xf32> to vector<2x8xf32>
    %531 = vector.shape_cast %530 : vector<2x8xf32> to vector<2x8x1xf32>
    %532 = tpu.reciprocal %531 {approx = true} : vector<2x8x1xf32> -> vector<2x8x1xf32>
    %533 = vector.broadcast %532 : vector<2x8x1xf32> to vector<2x8x8xf32>
    %534 = arith.mulf %529, %533 : vector<2x8x8xf32>
    %535 = arith.truncf %534 : vector<2x8x8xf32> to vector<2x8x8xbf16>
    "tpu.trace_start"() <{level = 10 : i32, message = "bts,bsd->btd"}> : () -> ()
    %cst_171 = arith.constant dense<0.000000e+00> : vector<2x8x8xf32>
    %536 = tpu.matmul %535, %523, %cst_171 {dimension_numbers = #tpu.dot_dimension_numbers<[2], [1], [1], [2], [0, 0, 0, 1, 1, 2], [0], [0]>} : vector<2x8x8xbf16>, vector<2x8x8xbf16>, vector<2x8x8xf32> -> vector<2x8x8xf32>
    "tpu.trace_stop"() : () -> ()
    %537 = vector.shape_cast %536 : vector<2x8x8xf32> to vector<16x8xf32>
    %538 = arith.truncf %537 : vector<16x8xf32> to vector<16x8xbf16>
    %539 = vector.extract_strided_slice %431 {offsets = [24, 0], sizes = [8, 32], strides = [1, 1]} : vector<32x32xf32> to vector<8x32xf32>
    %540 = arith.truncf %539 : vector<8x32xf32> to vector<8x32xbf16>
    %cst_172 = arith.constant dense<0.000000e+00> : vector<16x32xf32>
    %541 = tpu.matmul %538, %540, %cst_172 {dimension_numbers = #tpu.dot_dimension_numbers<[1], [0], [0], [1], [0, 0, 1, 1], [], []>} : vector<16x8xbf16>, vector<8x32xbf16>, vector<16x32xf32> -> vector<16x32xf32>
    %542 = arith.addf %514, %541 : vector<16x32xf32>
    %c0_173 = arith.constant 0 : index
    %c0_174 = arith.constant 0 : index
    %543 = vector.load %arg43[%c0_173, %c0_174] : memref<1x32xf32, #tpu.memory_space<vmem>>, vector<1x32xf32>
    %544 = vector.broadcast %543 : vector<1x32xf32> to vector<16x32xf32>
    %545 = arith.addf %542, %544 : vector<16x32xf32>
    %546 = arith.addf %383, %545 : vector<16x32xf32>
    %c0_175 = arith.constant 0 : index
    %c0_176 = arith.constant 0 : index
    %547 = vector.load %arg32[%c0_175, %c0_176] : memref<1x32xf32, #tpu.memory_space<vmem>>, vector<1x32xf32>
    %c0_177 = arith.constant 0 : index
    %c0_178 = arith.constant 0 : index
    %548 = vector.load %arg33[%c0_177, %c0_178] : memref<1x32xf32, #tpu.memory_space<vmem>>, vector<1x32xf32>
    %cst_179 = arith.constant dense<0.000000e+00> : vector<16xf32>
    %549 = vector.multi_reduction <add>, %546, %cst_179 [1] : vector<16x32xf32> to vector<16xf32>
    %550 = vector.shape_cast %549 : vector<16xf32> to vector<16x1xf32>
    %cst_180 = arith.constant 3.200000e+01 : f32
    %551 = vector.broadcast %cst_180 : f32 to vector<16x1xf32>
    %552 = arith.divf %550, %551 : vector<16x1xf32>
    %553 = vector.broadcast %552 : vector<16x1xf32> to vector<16x32xf32>
    %554 = arith.subf %546, %553 : vector<16x32xf32>
    %555 = arith.mulf %554, %554 : vector<16x32xf32>
    %cst_181 = arith.constant dense<0.000000e+00> : vector<16xf32>
    %556 = vector.multi_reduction <add>, %555, %cst_181 [1] : vector<16x32xf32> to vector<16xf32>
    %557 = vector.shape_cast %556 : vector<16xf32> to vector<16x1xf32>
    %cst_182 = arith.constant 0.0322580636 : f32
    %558 = vector.broadcast %cst_182 : f32 to vector<16x1xf32>
    %559 = arith.mulf %557, %558 : vector<16x1xf32>
    %560 = math.sqrt %559 : vector<16x1xf32>
    %561 = vector.broadcast %552 : vector<16x1xf32> to vector<16x32xf32>
    %562 = arith.subf %546, %561 : vector<16x32xf32>
    %cst_183 = arith.constant 9.99999997E-7 : f32
    %563 = vector.broadcast %cst_183 : f32 to vector<16x1xf32>
    %564 = arith.addf %560, %563 : vector<16x1xf32>
    %565 = tpu.reciprocal %564 {approx = true} : vector<16x1xf32> -> vector<16x1xf32>
    %566 = vector.broadcast %565 : vector<16x1xf32> to vector<16x32xf32>
    %567 = arith.mulf %562, %566 : vector<16x32xf32>
    %568 = vector.broadcast %547 : vector<1x32xf32> to vector<16x32xf32>
    %569 = arith.mulf %568, %567 : vector<16x32xf32>
    %570 = vector.broadcast %548 : vector<1x32xf32> to vector<16x32xf32>
    %571 = arith.addf %569, %570 : vector<16x32xf32>
    %572 = arith.truncf %571 : vector<16x32xf32> to vector<16x32xbf16>
    %573 = arith.truncf %15 : vector<32x32xf32> to vector<32x32xbf16>
    %c0_184 = arith.constant 0 : index
    %c0_185 = arith.constant 0 : index
    %574 = vector.load %arg44[%c0_184, %c0_185] : memref<32x32xf32, #tpu.memory_space<vmem>>, vector<32x32xf32>
    %575 = arith.truncf %574 : vector<32x32xf32> to vector<32x32xbf16>
    %cst_186 = arith.constant dense<0.000000e+00> : vector<16x32xf32>
    %576 = tpu.matmul %572, %575, %cst_186 {dimension_numbers = #tpu.dot_dimension_numbers<[1], [0], [0], [1], [0, 0, 1, 1], [], []>} : vector<16x32xbf16>, vector<32x32xbf16>, vector<16x32xf32> -> vector<16x32xf32>
    %c0_187 = arith.constant 0 : index
    %c0_188 = arith.constant 0 : index
    %577 = vector.load %arg45[%c0_187, %c0_188] : memref<1x32xf32, #tpu.memory_space<vmem>>, vector<1x32xf32>
    %578 = vector.broadcast %577 : vector<1x32xf32> to vector<16x32xf32>
    %579 = arith.addf %576, %578 : vector<16x32xf32>
    %cst_189 = arith.constant 0.353553385 : f32
    %580 = vector.broadcast %cst_189 : f32 to vector<16x32xf32>
    %581 = arith.mulf %579, %580 : vector<16x32xf32>
    %c0_190 = arith.constant 0 : index
    %c0_191 = arith.constant 0 : index
    %582 = vector.load %arg46[%c0_190, %c0_191] : memref<32x32xf32, #tpu.memory_space<vmem>>, vector<32x32xf32>
    %583 = arith.truncf %582 : vector<32x32xf32> to vector<32x32xbf16>
    %cst_192 = arith.constant dense<0.000000e+00> : vector<32x32xf32>
    %584 = tpu.matmul %573, %583, %cst_192 {dimension_numbers = #tpu.dot_dimension_numbers<[1], [0], [0], [1], [0, 0, 1, 1], [], []>} : vector<32x32xbf16>, vector<32x32xbf16>, vector<32x32xf32> -> vector<32x32xf32>
    %c0_193 = arith.constant 0 : index
    %c0_194 = arith.constant 0 : index
    %585 = vector.load %arg47[%c0_193, %c0_194] : memref<1x32xf32, #tpu.memory_space<vmem>>, vector<1x32xf32>
    %586 = vector.broadcast %585 : vector<1x32xf32> to vector<32x32xf32>
    %587 = arith.addf %584, %586 : vector<32x32xf32>
    %c0_195 = arith.constant 0 : index
    %c0_196 = arith.constant 0 : index
    %588 = vector.load %arg48[%c0_195, %c0_196] : memref<32x32xf32, #tpu.memory_space<vmem>>, vector<32x32xf32>
    %589 = arith.truncf %588 : vector<32x32xf32> to vector<32x32xbf16>
    %cst_197 = arith.constant dense<0.000000e+00> : vector<32x32xf32>
    %590 = tpu.matmul %573, %589, %cst_197 {dimension_numbers = #tpu.dot_dimension_numbers<[1], [0], [0], [1], [0, 0, 1, 1], [], []>} : vector<32x32xbf16>, vector<32x32xbf16>, vector<32x32xf32> -> vector<32x32xf32>
    %c0_198 = arith.constant 0 : index
    %c0_199 = arith.constant 0 : index
    %591 = vector.load %arg49[%c0_198, %c0_199] : memref<1x32xf32, #tpu.memory_space<vmem>>, vector<1x32xf32>
    %592 = vector.broadcast %591 : vector<1x32xf32> to vector<32x32xf32>
    %593 = arith.addf %590, %592 : vector<32x32xf32>
    %c0_200 = arith.constant 0 : index
    %c0_201 = arith.constant 0 : index
    %594 = vector.load %arg50[%c0_200, %c0_201] : memref<32x32xf32, #tpu.memory_space<vmem>>, vector<32x32xf32>
    %595 = vector.extract_strided_slice %581 {offsets = [0, 0], sizes = [16, 8], strides = [1, 1]} : vector<16x32xf32> to vector<16x8xf32>
    %596 = vector.shape_cast %595 : vector<16x8xf32> to vector<2x8x8xf32>
    %597 = arith.truncf %596 : vector<2x8x8xf32> to vector<2x8x8xbf16>
    %598 = vector.extract_strided_slice %587 {offsets = [0, 0], sizes = [32, 8], strides = [1, 1]} : vector<32x32xf32> to vector<32x8xf32>
    %599 = vector.shape_cast %598 : vector<32x8xf32> to vector<2x16x8xf32>
    %600 = arith.truncf %599 : vector<2x16x8xf32> to vector<2x16x8xbf16>
    %601 = vector.extract_strided_slice %593 {offsets = [0, 0], sizes = [32, 8], strides = [1, 1]} : vector<32x32xf32> to vector<32x8xf32>
    %602 = vector.shape_cast %601 : vector<32x8xf32> to vector<2x16x8xf32>
    %603 = arith.truncf %602 : vector<2x16x8xf32> to vector<2x16x8xbf16>
    "tpu.trace_start"() <{level = 10 : i32, message = "btd,bsd->bts"}> : () -> ()
    %cst_202 = arith.constant dense<0.000000e+00> : vector<2x8x16xf32>
    %604 = tpu.matmul %597, %600, %cst_202 {dimension_numbers = #tpu.dot_dimension_numbers<[2], [2], [1], [1], [0, 0, 0, 1, 1, 1], [0], [0]>} : vector<2x8x8xbf16>, vector<2x16x8xbf16>, vector<2x8x16xf32> -> vector<2x8x16xf32>
    "tpu.trace_stop"() : () -> ()
    %cst_203 = arith.constant dense<0xFF800000> : vector<2x8xf32>
    %605 = vector.multi_reduction <maximumf>, %604, %cst_203 [2] : vector<2x8x16xf32> to vector<2x8xf32>
    %606 = vector.shape_cast %605 : vector<2x8xf32> to vector<2x8x1xf32>
    %607 = vector.broadcast %606 : vector<2x8x1xf32> to vector<2x8x16xf32>
    %608 = arith.subf %604, %607 : vector<2x8x16xf32>
    %609 = math.exp %608 : vector<2x8x16xf32>
    %cst_204 = arith.constant dense<0.000000e+00> : vector<2x8xf32>
    %610 = vector.multi_reduction <add>, %609, %cst_204 [2] : vector<2x8x16xf32> to vector<2x8xf32>
    %611 = vector.shape_cast %610 : vector<2x8xf32> to vector<2x8x1xf32>
    %612 = tpu.reciprocal %611 {approx = true} : vector<2x8x1xf32> -> vector<2x8x1xf32>
    %613 = vector.broadcast %612 : vector<2x8x1xf32> to vector<2x8x16xf32>
    %614 = arith.mulf %609, %613 : vector<2x8x16xf32>
    %615 = arith.truncf %614 : vector<2x8x16xf32> to vector<2x8x16xbf16>
    "tpu.trace_start"() <{level = 10 : i32, message = "bts,bsd->btd"}> : () -> ()
    %cst_205 = arith.constant dense<0.000000e+00> : vector<2x8x8xf32>
    %616 = tpu.matmul %615, %603, %cst_205 {dimension_numbers = #tpu.dot_dimension_numbers<[2], [1], [1], [2], [0, 0, 0, 1, 1, 2], [0], [0]>} : vector<2x8x16xbf16>, vector<2x16x8xbf16>, vector<2x8x8xf32> -> vector<2x8x8xf32>
    "tpu.trace_stop"() : () -> ()
    %617 = vector.shape_cast %616 : vector<2x8x8xf32> to vector<16x8xf32>
    %618 = arith.truncf %617 : vector<16x8xf32> to vector<16x8xbf16>
    %619 = vector.extract_strided_slice %594 {offsets = [0, 0], sizes = [8, 32], strides = [1, 1]} : vector<32x32xf32> to vector<8x32xf32>
    %620 = arith.truncf %619 : vector<8x32xf32> to vector<8x32xbf16>
    %cst_206 = arith.constant dense<0.000000e+00> : vector<16x32xf32>
    %621 = tpu.matmul %618, %620, %cst_206 {dimension_numbers = #tpu.dot_dimension_numbers<[1], [0], [0], [1], [0, 0, 1, 1], [], []>} : vector<16x8xbf16>, vector<8x32xbf16>, vector<16x32xf32> -> vector<16x32xf32>
    %622 = vector.extract_strided_slice %581 {offsets = [0, 8], sizes = [16, 8], strides = [1, 1]} : vector<16x32xf32> to vector<16x8xf32>
    %623 = vector.shape_cast %622 : vector<16x8xf32> to vector<2x8x8xf32>
    %624 = arith.truncf %623 : vector<2x8x8xf32> to vector<2x8x8xbf16>
    %625 = vector.extract_strided_slice %587 {offsets = [0, 8], sizes = [32, 8], strides = [1, 1]} : vector<32x32xf32> to vector<32x8xf32>
    %626 = vector.shape_cast %625 : vector<32x8xf32> to vector<2x16x8xf32>
    %627 = arith.truncf %626 : vector<2x16x8xf32> to vector<2x16x8xbf16>
    %628 = vector.extract_strided_slice %593 {offsets = [0, 8], sizes = [32, 8], strides = [1, 1]} : vector<32x32xf32> to vector<32x8xf32>
    %629 = vector.shape_cast %628 : vector<32x8xf32> to vector<2x16x8xf32>
    %630 = arith.truncf %629 : vector<2x16x8xf32> to vector<2x16x8xbf16>
    "tpu.trace_start"() <{level = 10 : i32, message = "btd,bsd->bts"}> : () -> ()
    %cst_207 = arith.constant dense<0.000000e+00> : vector<2x8x16xf32>
    %631 = tpu.matmul %624, %627, %cst_207 {dimension_numbers = #tpu.dot_dimension_numbers<[2], [2], [1], [1], [0, 0, 0, 1, 1, 1], [0], [0]>} : vector<2x8x8xbf16>, vector<2x16x8xbf16>, vector<2x8x16xf32> -> vector<2x8x16xf32>
    "tpu.trace_stop"() : () -> ()
    %cst_208 = arith.constant dense<0xFF800000> : vector<2x8xf32>
    %632 = vector.multi_reduction <maximumf>, %631, %cst_208 [2] : vector<2x8x16xf32> to vector<2x8xf32>
    %633 = vector.shape_cast %632 : vector<2x8xf32> to vector<2x8x1xf32>
    %634 = vector.broadcast %633 : vector<2x8x1xf32> to vector<2x8x16xf32>
    %635 = arith.subf %631, %634 : vector<2x8x16xf32>
    %636 = math.exp %635 : vector<2x8x16xf32>
    %cst_209 = arith.constant dense<0.000000e+00> : vector<2x8xf32>
    %637 = vector.multi_reduction <add>, %636, %cst_209 [2] : vector<2x8x16xf32> to vector<2x8xf32>
    %638 = vector.shape_cast %637 : vector<2x8xf32> to vector<2x8x1xf32>
    %639 = tpu.reciprocal %638 {approx = true} : vector<2x8x1xf32> -> vector<2x8x1xf32>
    %640 = vector.broadcast %639 : vector<2x8x1xf32> to vector<2x8x16xf32>
    %641 = arith.mulf %636, %640 : vector<2x8x16xf32>
    %642 = arith.truncf %641 : vector<2x8x16xf32> to vector<2x8x16xbf16>
    "tpu.trace_start"() <{level = 10 : i32, message = "bts,bsd->btd"}> : () -> ()
    %cst_210 = arith.constant dense<0.000000e+00> : vector<2x8x8xf32>
    %643 = tpu.matmul %642, %630, %cst_210 {dimension_numbers = #tpu.dot_dimension_numbers<[2], [1], [1], [2], [0, 0, 0, 1, 1, 2], [0], [0]>} : vector<2x8x16xbf16>, vector<2x16x8xbf16>, vector<2x8x8xf32> -> vector<2x8x8xf32>
    "tpu.trace_stop"() : () -> ()
    %644 = vector.shape_cast %643 : vector<2x8x8xf32> to vector<16x8xf32>
    %645 = arith.truncf %644 : vector<16x8xf32> to vector<16x8xbf16>
    %646 = vector.extract_strided_slice %594 {offsets = [8, 0], sizes = [8, 32], strides = [1, 1]} : vector<32x32xf32> to vector<8x32xf32>
    %647 = arith.truncf %646 : vector<8x32xf32> to vector<8x32xbf16>
    %cst_211 = arith.constant dense<0.000000e+00> : vector<16x32xf32>
    %648 = tpu.matmul %645, %647, %cst_211 {dimension_numbers = #tpu.dot_dimension_numbers<[1], [0], [0], [1], [0, 0, 1, 1], [], []>} : vector<16x8xbf16>, vector<8x32xbf16>, vector<16x32xf32> -> vector<16x32xf32>
    %649 = arith.addf %621, %648 : vector<16x32xf32>
    %650 = vector.extract_strided_slice %581 {offsets = [0, 16], sizes = [16, 8], strides = [1, 1]} : vector<16x32xf32> to vector<16x8xf32>
    %651 = vector.shape_cast %650 : vector<16x8xf32> to vector<2x8x8xf32>
    %652 = arith.truncf %651 : vector<2x8x8xf32> to vector<2x8x8xbf16>
    %653 = vector.extract_strided_slice %587 {offsets = [0, 16], sizes = [32, 8], strides = [1, 1]} : vector<32x32xf32> to vector<32x8xf32>
    %654 = vector.shape_cast %653 : vector<32x8xf32> to vector<2x16x8xf32>
    %655 = arith.truncf %654 : vector<2x16x8xf32> to vector<2x16x8xbf16>
    %656 = vector.extract_strided_slice %593 {offsets = [0, 16], sizes = [32, 8], strides = [1, 1]} : vector<32x32xf32> to vector<32x8xf32>
    %657 = vector.shape_cast %656 : vector<32x8xf32> to vector<2x16x8xf32>
    %658 = arith.truncf %657 : vector<2x16x8xf32> to vector<2x16x8xbf16>
    "tpu.trace_start"() <{level = 10 : i32, message = "btd,bsd->bts"}> : () -> ()
    %cst_212 = arith.constant dense<0.000000e+00> : vector<2x8x16xf32>
    %659 = tpu.matmul %652, %655, %cst_212 {dimension_numbers = #tpu.dot_dimension_numbers<[2], [2], [1], [1], [0, 0, 0, 1, 1, 1], [0], [0]>} : vector<2x8x8xbf16>, vector<2x16x8xbf16>, vector<2x8x16xf32> -> vector<2x8x16xf32>
    "tpu.trace_stop"() : () -> ()
    %cst_213 = arith.constant dense<0xFF800000> : vector<2x8xf32>
    %660 = vector.multi_reduction <maximumf>, %659, %cst_213 [2] : vector<2x8x16xf32> to vector<2x8xf32>
    %661 = vector.shape_cast %660 : vector<2x8xf32> to vector<2x8x1xf32>
    %662 = vector.broadcast %661 : vector<2x8x1xf32> to vector<2x8x16xf32>
    %663 = arith.subf %659, %662 : vector<2x8x16xf32>
    %664 = math.exp %663 : vector<2x8x16xf32>
    %cst_214 = arith.constant dense<0.000000e+00> : vector<2x8xf32>
    %665 = vector.multi_reduction <add>, %664, %cst_214 [2] : vector<2x8x16xf32> to vector<2x8xf32>
    %666 = vector.shape_cast %665 : vector<2x8xf32> to vector<2x8x1xf32>
    %667 = tpu.reciprocal %666 {approx = true} : vector<2x8x1xf32> -> vector<2x8x1xf32>
    %668 = vector.broadcast %667 : vector<2x8x1xf32> to vector<2x8x16xf32>
    %669 = arith.mulf %664, %668 : vector<2x8x16xf32>
    %670 = arith.truncf %669 : vector<2x8x16xf32> to vector<2x8x16xbf16>
    "tpu.trace_start"() <{level = 10 : i32, message = "bts,bsd->btd"}> : () -> ()
    %cst_215 = arith.constant dense<0.000000e+00> : vector<2x8x8xf32>
    %671 = tpu.matmul %670, %658, %cst_215 {dimension_numbers = #tpu.dot_dimension_numbers<[2], [1], [1], [2], [0, 0, 0, 1, 1, 2], [0], [0]>} : vector<2x8x16xbf16>, vector<2x16x8xbf16>, vector<2x8x8xf32> -> vector<2x8x8xf32>
    "tpu.trace_stop"() : () -> ()
    %672 = vector.shape_cast %671 : vector<2x8x8xf32> to vector<16x8xf32>
    %673 = arith.truncf %672 : vector<16x8xf32> to vector<16x8xbf16>
    %674 = vector.extract_strided_slice %594 {offsets = [16, 0], sizes = [8, 32], strides = [1, 1]} : vector<32x32xf32> to vector<8x32xf32>
    %675 = arith.truncf %674 : vector<8x32xf32> to vector<8x32xbf16>
    %cst_216 = arith.constant dense<0.000000e+00> : vector<16x32xf32>
    %676 = tpu.matmul %673, %675, %cst_216 {dimension_numbers = #tpu.dot_dimension_numbers<[1], [0], [0], [1], [0, 0, 1, 1], [], []>} : vector<16x8xbf16>, vector<8x32xbf16>, vector<16x32xf32> -> vector<16x32xf32>
    %677 = arith.addf %649, %676 : vector<16x32xf32>
    %678 = vector.extract_strided_slice %581 {offsets = [0, 24], sizes = [16, 8], strides = [1, 1]} : vector<16x32xf32> to vector<16x8xf32>
    %679 = vector.shape_cast %678 : vector<16x8xf32> to vector<2x8x8xf32>
    %680 = arith.truncf %679 : vector<2x8x8xf32> to vector<2x8x8xbf16>
    %681 = vector.extract_strided_slice %587 {offsets = [0, 24], sizes = [32, 8], strides = [1, 1]} : vector<32x32xf32> to vector<32x8xf32>
    %682 = vector.shape_cast %681 : vector<32x8xf32> to vector<2x16x8xf32>
    %683 = arith.truncf %682 : vector<2x16x8xf32> to vector<2x16x8xbf16>
    %684 = vector.extract_strided_slice %593 {offsets = [0, 24], sizes = [32, 8], strides = [1, 1]} : vector<32x32xf32> to vector<32x8xf32>
    %685 = vector.shape_cast %684 : vector<32x8xf32> to vector<2x16x8xf32>
    %686 = arith.truncf %685 : vector<2x16x8xf32> to vector<2x16x8xbf16>
    "tpu.trace_start"() <{level = 10 : i32, message = "btd,bsd->bts"}> : () -> ()
    %cst_217 = arith.constant dense<0.000000e+00> : vector<2x8x16xf32>
    %687 = tpu.matmul %680, %683, %cst_217 {dimension_numbers = #tpu.dot_dimension_numbers<[2], [2], [1], [1], [0, 0, 0, 1, 1, 1], [0], [0]>} : vector<2x8x8xbf16>, vector<2x16x8xbf16>, vector<2x8x16xf32> -> vector<2x8x16xf32>
    "tpu.trace_stop"() : () -> ()
    %cst_218 = arith.constant dense<0xFF800000> : vector<2x8xf32>
    %688 = vector.multi_reduction <maximumf>, %687, %cst_218 [2] : vector<2x8x16xf32> to vector<2x8xf32>
    %689 = vector.shape_cast %688 : vector<2x8xf32> to vector<2x8x1xf32>
    %690 = vector.broadcast %689 : vector<2x8x1xf32> to vector<2x8x16xf32>
    %691 = arith.subf %687, %690 : vector<2x8x16xf32>
    %692 = math.exp %691 : vector<2x8x16xf32>
    %cst_219 = arith.constant dense<0.000000e+00> : vector<2x8xf32>
    %693 = vector.multi_reduction <add>, %692, %cst_219 [2] : vector<2x8x16xf32> to vector<2x8xf32>
    %694 = vector.shape_cast %693 : vector<2x8xf32> to vector<2x8x1xf32>
    %695 = tpu.reciprocal %694 {approx = true} : vector<2x8x1xf32> -> vector<2x8x1xf32>
    %696 = vector.broadcast %695 : vector<2x8x1xf32> to vector<2x8x16xf32>
    %697 = arith.mulf %692, %696 : vector<2x8x16xf32>
    %698 = arith.truncf %697 : vector<2x8x16xf32> to vector<2x8x16xbf16>
    "tpu.trace_start"() <{level = 10 : i32, message = "bts,bsd->btd"}> : () -> ()
    %cst_220 = arith.constant dense<0.000000e+00> : vector<2x8x8xf32>
    %699 = tpu.matmul %698, %686, %cst_220 {dimension_numbers = #tpu.dot_dimension_numbers<[2], [1], [1], [2], [0, 0, 0, 1, 1, 2], [0], [0]>} : vector<2x8x16xbf16>, vector<2x16x8xbf16>, vector<2x8x8xf32> -> vector<2x8x8xf32>
    "tpu.trace_stop"() : () -> ()
    %700 = vector.shape_cast %699 : vector<2x8x8xf32> to vector<16x8xf32>
    %701 = arith.truncf %700 : vector<16x8xf32> to vector<16x8xbf16>
    %702 = vector.extract_strided_slice %594 {offsets = [24, 0], sizes = [8, 32], strides = [1, 1]} : vector<32x32xf32> to vector<8x32xf32>
    %703 = arith.truncf %702 : vector<8x32xf32> to vector<8x32xbf16>
    %cst_221 = arith.constant dense<0.000000e+00> : vector<16x32xf32>
    %704 = tpu.matmul %701, %703, %cst_221 {dimension_numbers = #tpu.dot_dimension_numbers<[1], [0], [0], [1], [0, 0, 1, 1], [], []>} : vector<16x8xbf16>, vector<8x32xbf16>, vector<16x32xf32> -> vector<16x32xf32>
    %705 = arith.addf %677, %704 : vector<16x32xf32>
    %c0_222 = arith.constant 0 : index
    %c0_223 = arith.constant 0 : index
    %706 = vector.load %arg51[%c0_222, %c0_223] : memref<1x32xf32, #tpu.memory_space<vmem>>, vector<1x32xf32>
    %707 = vector.broadcast %706 : vector<1x32xf32> to vector<16x32xf32>
    %708 = arith.addf %705, %707 : vector<16x32xf32>
    %709 = arith.addf %546, %708 : vector<16x32xf32>
    %c0_224 = arith.constant 0 : index
    %c0_225 = arith.constant 0 : index
    %710 = vector.load %arg34[%c0_224, %c0_225] : memref<1x32xf32, #tpu.memory_space<vmem>>, vector<1x32xf32>
    %c0_226 = arith.constant 0 : index
    %c0_227 = arith.constant 0 : index
    %711 = vector.load %arg35[%c0_226, %c0_227] : memref<1x32xf32, #tpu.memory_space<vmem>>, vector<1x32xf32>
    %cst_228 = arith.constant dense<0.000000e+00> : vector<16xf32>
    %712 = vector.multi_reduction <add>, %709, %cst_228 [1] : vector<16x32xf32> to vector<16xf32>
    %713 = vector.shape_cast %712 : vector<16xf32> to vector<16x1xf32>
    %cst_229 = arith.constant 3.200000e+01 : f32
    %714 = vector.broadcast %cst_229 : f32 to vector<16x1xf32>
    %715 = arith.divf %713, %714 : vector<16x1xf32>
    %716 = vector.broadcast %715 : vector<16x1xf32> to vector<16x32xf32>
    %717 = arith.subf %709, %716 : vector<16x32xf32>
    %718 = arith.mulf %717, %717 : vector<16x32xf32>
    %cst_230 = arith.constant dense<0.000000e+00> : vector<16xf32>
    %719 = vector.multi_reduction <add>, %718, %cst_230 [1] : vector<16x32xf32> to vector<16xf32>
    %720 = vector.shape_cast %719 : vector<16xf32> to vector<16x1xf32>
    %cst_231 = arith.constant 0.0322580636 : f32
    %721 = vector.broadcast %cst_231 : f32 to vector<16x1xf32>
    %722 = arith.mulf %720, %721 : vector<16x1xf32>
    %723 = math.sqrt %722 : vector<16x1xf32>
    %724 = vector.broadcast %715 : vector<16x1xf32> to vector<16x32xf32>
    %725 = arith.subf %709, %724 : vector<16x32xf32>
    %cst_232 = arith.constant 9.99999997E-7 : f32
    %726 = vector.broadcast %cst_232 : f32 to vector<16x1xf32>
    %727 = arith.addf %723, %726 : vector<16x1xf32>
    %728 = tpu.reciprocal %727 {approx = true} : vector<16x1xf32> -> vector<16x1xf32>
    %729 = vector.broadcast %728 : vector<16x1xf32> to vector<16x32xf32>
    %730 = arith.mulf %725, %729 : vector<16x32xf32>
    %731 = vector.broadcast %710 : vector<1x32xf32> to vector<16x32xf32>
    %732 = arith.mulf %731, %730 : vector<16x32xf32>
    %733 = vector.broadcast %711 : vector<1x32xf32> to vector<16x32xf32>
    %734 = arith.addf %732, %733 : vector<16x32xf32>
    %735 = arith.truncf %734 : vector<16x32xf32> to vector<16x32xbf16>
    %c0_233 = arith.constant 0 : index
    %c0_234 = arith.constant 0 : index
    %736 = vector.load %arg52[%c0_233, %c0_234] : memref<32x64xf32, #tpu.memory_space<vmem>>, vector<32x64xf32>
    %737 = arith.truncf %736 : vector<32x64xf32> to vector<32x64xbf16>
    %cst_235 = arith.constant dense<0.000000e+00> : vector<16x64xf32>
    %738 = tpu.matmul %735, %737, %cst_235 {dimension_numbers = #tpu.dot_dimension_numbers<[1], [0], [0], [1], [0, 0, 1, 1], [], []>} : vector<16x32xbf16>, vector<32x64xbf16>, vector<16x64xf32> -> vector<16x64xf32>
    %c0_236 = arith.constant 0 : index
    %c0_237 = arith.constant 0 : index
    %739 = vector.load %arg53[%c0_236, %c0_237] : memref<1x64xf32, #tpu.memory_space<vmem>>, vector<1x64xf32>
    %740 = vector.broadcast %739 : vector<1x64xf32> to vector<16x64xf32>
    %741 = arith.addf %738, %740 : vector<16x64xf32>
    %cst_238 = arith.constant 0.000000e+00 : f32
    %742 = vector.broadcast %cst_238 : f32 to vector<16x64xf32>
    %743 = arith.maximumf %741, %742 : vector<16x64xf32>
    %744 = arith.truncf %743 : vector<16x64xf32> to vector<16x64xbf16>
    %c0_239 = arith.constant 0 : index
    %c0_240 = arith.constant 0 : index
    %745 = vector.load %arg54[%c0_239, %c0_240] : memref<64x32xf32, #tpu.memory_space<vmem>>, vector<64x32xf32>
    %746 = arith.truncf %745 : vector<64x32xf32> to vector<64x32xbf16>
    %cst_241 = arith.constant dense<0.000000e+00> : vector<16x32xf32>
    %747 = tpu.matmul %744, %746, %cst_241 {dimension_numbers = #tpu.dot_dimension_numbers<[1], [0], [0], [1], [0, 0, 1, 1], [], []>} : vector<16x64xbf16>, vector<64x32xbf16>, vector<16x32xf32> -> vector<16x32xf32>
    %c0_242 = arith.constant 0 : index
    %c0_243 = arith.constant 0 : index
    %748 = vector.load %arg55[%c0_242, %c0_243] : memref<1x32xf32, #tpu.memory_space<vmem>>, vector<1x32xf32>
    %749 = vector.broadcast %748 : vector<1x32xf32> to vector<16x32xf32>
    %750 = arith.addf %747, %749 : vector<16x32xf32>
    %751 = arith.addf %709, %750 : vector<16x32xf32>
    %c0_244 = arith.constant 0 : index
    %c0_245 = arith.constant 0 : index
    %752 = vector.load %arg56[%c0_244, %c0_245] : memref<1x32xf32, #tpu.memory_space<vmem>>, vector<1x32xf32>
    %c0_246 = arith.constant 0 : index
    %c0_247 = arith.constant 0 : index
    %753 = vector.load %arg57[%c0_246, %c0_247] : memref<1x32xf32, #tpu.memory_space<vmem>>, vector<1x32xf32>
    %cst_248 = arith.constant dense<0.000000e+00> : vector<16xf32>
    %754 = vector.multi_reduction <add>, %751, %cst_248 [1] : vector<16x32xf32> to vector<16xf32>
    %755 = vector.shape_cast %754 : vector<16xf32> to vector<16x1xf32>
    %cst_249 = arith.constant 3.200000e+01 : f32
    %756 = vector.broadcast %cst_249 : f32 to vector<16x1xf32>
    %757 = arith.divf %755, %756 : vector<16x1xf32>
    %758 = vector.broadcast %757 : vector<16x1xf32> to vector<16x32xf32>
    %759 = arith.subf %751, %758 : vector<16x32xf32>
    %760 = arith.mulf %759, %759 : vector<16x32xf32>
    %cst_250 = arith.constant dense<0.000000e+00> : vector<16xf32>
    %761 = vector.multi_reduction <add>, %760, %cst_250 [1] : vector<16x32xf32> to vector<16xf32>
    %762 = vector.shape_cast %761 : vector<16xf32> to vector<16x1xf32>
    %cst_251 = arith.constant 0.0322580636 : f32
    %763 = vector.broadcast %cst_251 : f32 to vector<16x1xf32>
    %764 = arith.mulf %762, %763 : vector<16x1xf32>
    %765 = math.sqrt %764 : vector<16x1xf32>
    %766 = vector.broadcast %757 : vector<16x1xf32> to vector<16x32xf32>
    %767 = arith.subf %751, %766 : vector<16x32xf32>
    %cst_252 = arith.constant 9.99999997E-7 : f32
    %768 = vector.broadcast %cst_252 : f32 to vector<16x1xf32>
    %769 = arith.addf %765, %768 : vector<16x1xf32>
    %770 = tpu.reciprocal %769 {approx = true} : vector<16x1xf32> -> vector<16x1xf32>
    %771 = vector.broadcast %770 : vector<16x1xf32> to vector<16x32xf32>
    %772 = arith.mulf %767, %771 : vector<16x32xf32>
    %773 = vector.broadcast %752 : vector<1x32xf32> to vector<16x32xf32>
    %774 = arith.mulf %773, %772 : vector<16x32xf32>
    %775 = vector.broadcast %753 : vector<1x32xf32> to vector<16x32xf32>
    %776 = arith.addf %774, %775 : vector<16x32xf32>
    %777 = arith.truncf %776 : vector<16x32xf32> to vector<16x32xbf16>
    %c0_253 = arith.constant 0 : index
    %c0_254 = arith.constant 0 : index
    %778 = vector.load %arg58[%c0_253, %c0_254] : memref<32x64xf32, #tpu.memory_space<vmem>>, vector<32x64xf32>
    %779 = arith.truncf %778 : vector<32x64xf32> to vector<32x64xbf16>
    %cst_255 = arith.constant dense<0.000000e+00> : vector<16x64xf32>
    %780 = tpu.matmul %777, %779, %cst_255 {dimension_numbers = #tpu.dot_dimension_numbers<[1], [0], [0], [1], [0, 0, 1, 1], [], []>} : vector<16x32xbf16>, vector<32x64xbf16>, vector<16x64xf32> -> vector<16x64xf32>
    %c0_256 = arith.constant 0 : index
    %c0_257 = arith.constant 0 : index
    %781 = vector.load %arg59[%c0_256, %c0_257] : memref<1x64xf32, #tpu.memory_space<vmem>>, vector<1x64xf32>
    %782 = vector.broadcast %781 : vector<1x64xf32> to vector<16x64xf32>
    %783 = arith.addf %780, %782 : vector<16x64xf32>
    %c0_258 = arith.constant 0 : index
    %c0_259 = arith.constant 0 : index
    %784 = vector.load %arg60[%c0_258, %c0_259] : memref<16x64xf32, #tpu.memory_space<vmem>>, vector<16x64xf32>
    tpu.vector_store %arg60[%c0_258, %c0_259], %783 {strides = array<i32>} : memref<16x64xf32, #tpu.memory_space<vmem>>, vector<16x64xf32>,
    return
  }
}

</mosaic_0001>

<llo_original>
// kernel: tpu_custom_call.1
$region0: #{tpu_custom_call.1}
  #allocation0 [shape = 'u32[]', space=smem, size = 0x4, offset = 0x4, fixed_abs, tag = 'smem constant byte address 0x4 - core index']
  #allocation1 [shape = 'u32[72,128]{1,0:T(1,128)}', space=vmem, size = 0x9000, scoped, tag = 'internal scratch']
  %s0 = inlined_call_operand.smem [shape: u32[61], index: -1, kind: input, shape index: {}]
  %s1 = sld [smem:[%s0]]
  %s2 = scalar_lea.smem %s0, 1
  %s3 = sld [smem:[%s2]]
  %s4 = scalar_lea.smem %s0, 2
  %s5 = sld [smem:[%s4]]
  %s6 = scalar_lea.smem %s0, 3
  %s7 = sld [smem:[%s6]]
  %s8 = scalar_lea.smem %s0, 4
  %s9 = sld [smem:[%s8]]
  %s10 = scalar_lea.smem %s0, 5
  %s11 = sld [smem:[%s10]]
  %s12 = scalar_lea.smem %s0, 6
  %s13 = sld [smem:[%s12]]
  %s14 = scalar_lea.smem %s0, 7
  %s15 = sld [smem:[%s14]]
  %s16 = scalar_lea.smem %s0, 8
  %s17 = sld [smem:[%s16]]
  %s18 = scalar_lea.smem %s0, 9
  %s19 = sld [smem:[%s18]]
  %s20 = scalar_lea.smem %s0, 10
  %s21 = sld [smem:[%s20]]
  %s22 = scalar_lea.smem %s0, 11
  %s23 = sld [smem:[%s22]]
  %s24 = scalar_lea.smem %s0, 12
  %s25 = sld [smem:[%s24]]
  %s26 = scalar_lea.smem %s0, 13
  %s27 = sld [smem:[%s26]]
  %s28 = scalar_lea.smem %s0, 14
  %s29 = sld [smem:[%s28]]
  %s30 = scalar_lea.smem %s0, 15
  %s31 = sld [smem:[%s30]]
  %s32 = scalar_lea.smem %s0, 16
  %s33 = sld [smem:[%s32]]
  %s34 = scalar_lea.smem %s0, 17
  %s35 = sld [smem:[%s34]]
  %s36 = scalar_lea.smem %s0, 18
  %s37 = sld [smem:[%s36]]
  %s38 = scalar_lea.smem %s0, 19
  %s39 = sld [smem:[%s38]]
  %s40 = scalar_lea.smem %s0, 20
  %s41 = sld [smem:[%s40]]
  %s42 = scalar_lea.smem %s0, 21
  %s43 = sld [smem:[%s42]]
  %s44 = scalar_lea.smem %s0, 22
  %s45 = sld [smem:[%s44]]
  %s46 = scalar_lea.smem %s0, 23
  %s47 = sld [smem:[%s46]]
  %s48 = scalar_lea.smem %s0, 24
  %s49 = sld [smem:[%s48]]
  %s50 = scalar_lea.smem %s0, 25
  %s51 = sld [smem:[%s50]]
  %s52 = scalar_lea.smem %s0, 26
  %s53 = sld [smem:[%s52]]
  %s54 = scalar_lea.smem %s0, 27
  %s55 = sld [smem:[%s54]]
  %s56 = scalar_lea.smem %s0, 28
  %s57 = sld [smem:[%s56]]
  %s58 = scalar_lea.smem %s0, 29
  %s59 = sld [smem:[%s58]]
  %s60 = scalar_lea.smem %s0, 30
  %s61 = sld [smem:[%s60]]
  %s62 = scalar_lea.smem %s0, 31
  %s63 = sld [smem:[%s62]]
  %s64 = scalar_lea.smem %s0, 32
  %s65 = sld [smem:[%s64]]
  %s66 = scalar_lea.smem %s0, 33
  %s67 = sld [smem:[%s66]]
  %s68 = scalar_lea.smem %s0, 34
  %s69 = sld [smem:[%s68]]
  %s70 = scalar_lea.smem %s0, 35
  %s71 = sld [smem:[%s70]]
  %s72 = scalar_lea.smem %s0, 36
  %s73 = sld [smem:[%s72]]
  %s74 = scalar_lea.smem %s0, 37
  %s75 = sld [smem:[%s74]]
  %s76 = scalar_lea.smem %s0, 38
  %s77 = sld [smem:[%s76]]
  %s78 = scalar_lea.smem %s0, 39
  %s79 = sld [smem:[%s78]]
  %s80 = scalar_lea.smem %s0, 40
  %s81 = sld [smem:[%s80]]
  %s82 = scalar_lea.smem %s0, 41
  %s83 = sld [smem:[%s82]]
  %s84 = scalar_lea.smem %s0, 42
  %s85 = sld [smem:[%s84]]
  %s86 = scalar_lea.smem %s0, 43
  %s87 = sld [smem:[%s86]]
  %s88 = scalar_lea.smem %s0, 44
  %s89 = sld [smem:[%s88]]
  %s90 = scalar_lea.smem %s0, 45
  %s91 = sld [smem:[%s90]]
  %s92 = scalar_lea.smem %s0, 46
  %s93 = sld [smem:[%s92]]
  %s94 = scalar_lea.smem %s0, 47
  %s95 = sld [smem:[%s94]]
  %s96 = scalar_lea.smem %s0, 48
  %s97 = sld [smem:[%s96]]
  %s98 = scalar_lea.smem %s0, 49
  %s99 = sld [smem:[%s98]]
  %s100 = scalar_lea.smem %s0, 50
  %s101 = sld [smem:[%s100]]
  %s102 = scalar_lea.smem %s0, 51
  %s103 = sld [smem:[%s102]]
  %s104 = scalar_lea.smem %s0, 52
  %s105 = sld [smem:[%s104]]
  %s106 = scalar_lea.smem %s0, 53
  %s107 = sld [smem:[%s106]]
  %s108 = scalar_lea.smem %s0, 54
  %s109 = sld [smem:[%s108]]
  %s110 = scalar_lea.smem %s0, 55
  %s111 = sld [smem:[%s110]]
  %s112 = scalar_lea.smem %s0, 56
  %s113 = sld [smem:[%s112]]
  %s114 = scalar_lea.smem %s0, 57
  %s115 = sld [smem:[%s114]]
  %s116 = scalar_lea.smem %s0, 58
  %s117 = sld [smem:[%s116]]
  %s118 = scalar_lea.smem %s0, 59
  %s119 = sld [smem:[%s118]]
  %s120 = scalar_lea.smem %s0, 60
  %s121 = sld [smem:[%s120]]
  %s122 = sld [smem:[#allocation0]]
  $region418: #{tpu_custom_call.1} parent=0
    _
  %s124 = ssub.s32 1, %s122
  %s125 = scalar_select 0, %s124, %s122
  $region1: #{tpu_custom_call.1} parent=0
    #allocation2 [shape = 'u8[4096]{0}', space=vmem, size = 0x1000, scoped, tag = 'input window, operand 2, single buffered']
    #allocation3 [shape = 's32[1]{0}', space=sflag, size = 0x4, scoped, tag = 'scoped memory for tpu_custom_call.1']
    #allocation4 [shape = 's32[1]{0}', space=sflag, size = 0x4, scoped, tag = 'scoped memory for tpu_custom_call.1']
    #allocation5 [shape = 'u8[512]{0}', space=vmem, size = 0x400, scoped, tag = 'input window, operand 4, single buffered']
    #allocation6 [shape = 's32[1]{0}', space=sflag, size = 0x4, scoped, tag = 'scoped memory for tpu_custom_call.1']
    #allocation7 [shape = 'u8[512]{0}', space=vmem, size = 0x400, scoped, tag = 'input window, operand 5, single buffered']
    #allocation8 [shape = 'u8[512]{0}', space=vmem, size = 0x400, scoped, tag = 'input window, operand 6, single buffered']
    #allocation9 [shape = 's32[1]{0}', space=sflag, size = 0x4, scoped, tag = 'scoped memory for tpu_custom_call.1']
    #allocation10 [shape = 'u8[512]{0}', space=vmem, size = 0x400, scoped, tag = 'input window, operand 7, single buffered']
    #allocation11 [shape = 'u8[512]{0}', space=vmem, size = 0x400, scoped, tag = 'input window, operand 8, single buffered']
    #allocation12 [shape = 's32[1]{0}', space=sflag, size = 0x4, scoped, tag = 'scoped memory for tpu_custom_call.1']
    #allocation13 [shape = 'u8[512]{0}', space=vmem, size = 0x400, scoped, tag = 'input window, operand 9, single buffered']
    #allocation14 [shape = 'u8[512]{0}', space=vmem, size = 0x400, scoped, tag = 'input window, operand 11, single buffered']
    #allocation15 [shape = 's32[1]{0}', space=sflag, size = 0x4, scoped, tag = 'scoped memory for tpu_custom_call.1']
    #allocation16 [shape = 'u8[512]{0}', space=vmem, size = 0x400, scoped, tag = 'input window, operand 13, single buffered']
    #allocation17 [shape = 'u8[512]{0}', space=vmem, size = 0x400, scoped, tag = 'input window, operand 15, single buffered']
    #allocation18 [shape = 's32[1]{0}', space=sflag, size = 0x4, scoped, tag = 'scoped memory for tpu_custom_call.1']
    #allocation19 [shape = 'u8[512]{0}', space=vmem, size = 0x400, scoped, tag = 'input window, operand 17, single buffered']
    #allocation20 [shape = 'u8[512]{0}', space=vmem, size = 0x400, scoped, tag = 'input window, operand 19, single buffered']
    #allocation21 [shape = 's32[1]{0}', space=sflag, size = 0x4, scoped, tag = 'scoped memory for tpu_custom_call.1']
    #allocation22 [shape = 'u8[16384]{0}', space=vmem, size = 0x4000, scoped, tag = 'input window, operand 24, single buffered']
    #allocation23 [shape = 'u8[512]{0}', space=vmem, size = 0x400, scoped, tag = 'input window, operand 25, single buffered']
    #allocation24 [shape = 's32[1]{0}', space=sflag, size = 0x4, scoped, tag = 'scoped memory for tpu_custom_call.1']
    #allocation25 [shape = 'u8[16384]{0}', space=vmem, size = 0x4000, scoped, tag = 'input window, operand 26, single buffered']
    #allocation26 [shape = 'u8[512]{0}', space=vmem, size = 0x400, scoped, tag = 'input window, operand 27, single buffered']
    #allocation27 [shape = 's32[1]{0}', space=sflag, size = 0x4, scoped, tag = 'scoped memory for tpu_custom_call.1']
    #allocation28 [shape = 'u8[512]{0}', space=vmem, size = 0x400, scoped, tag = 'input window, operand 29, single buffered']
    #allocation29 [shape = 'u8[512]{0}', space=vmem, size = 0x400, scoped, tag = 'input window, operand 30, single buffered']
    #allocation30 [shape = 's32[1]{0}', space=sflag, size = 0x4, scoped, tag = 'scoped memory for tpu_custom_call.1']
    #allocation31 [shape = 'u8[512]{0}', space=vmem, size = 0x400, scoped, tag = 'input window, operand 31, single buffered']
    #allocation32 [shape = 'u8[512]{0}', space=vmem, size = 0x400, scoped, tag = 'input window, operand 32, single buffered']
    #allocation33 [shape = 's32[1]{0}', space=sflag, size = 0x4, scoped, tag = 'scoped memory for tpu_custom_call.1']
    #allocation34 [shape = 'u8[512]{0}', space=vmem, size = 0x400, scoped, tag = 'input window, operand 33, single buffered']
    #allocation35 [shape = 'u8[512]{0}', space=vmem, size = 0x400, scoped, tag = 'input window, operand 34, single buffered']
    #allocation36 [shape = 's32[1]{0}', space=sflag, size = 0x4, scoped, tag = 'scoped memory for tpu_custom_call.1']
    #allocation37 [shape = 'u8[512]{0}', space=vmem, size = 0x400, scoped, tag = 'input window, operand 35, single buffered']
    #allocation38 [shape = 'u8[16384]{0}', space=vmem, size = 0x4000, scoped, tag = 'input window, operand 36, single buffered']
    #allocation39 [shape = 's32[1]{0}', space=sflag, size = 0x4, scoped, tag = 'scoped memory for tpu_custom_call.1']
    #allocation40 [shape = 'u8[512]{0}', space=vmem, size = 0x400, scoped, tag = 'input window, operand 37, single buffered']
    #allocation41 [shape = 'u8[16384]{0}', space=vmem, size = 0x4000, scoped, tag = 'input window, operand 38, single buffered']
    #allocation42 [shape = 's32[1]{0}', space=sflag, size = 0x4, scoped, tag = 'scoped memory for tpu_custom_call.1']
    #allocation43 [shape = 'u8[512]{0}', space=vmem, size = 0x400, scoped, tag = 'input window, operand 39, single buffered']
    #allocation44 [shape = 'u8[16384]{0}', space=vmem, size = 0x4000, scoped, tag = 'input window, operand 40, single buffered']
    #allocation45 [shape = 's32[1]{0}', space=sflag, size = 0x4, scoped, tag = 'scoped memory for tpu_custom_call.1']
    #allocation46 [shape = 'u8[512]{0}', space=vmem, size = 0x400, scoped, tag = 'input window, operand 41, single buffered']
    #allocation47 [shape = 'u8[16384]{0}', space=vmem, size = 0x4000, scoped, tag = 'input window, operand 42, single buffered']
    #allocation48 [shape = 's32[1]{0}', space=sflag, size = 0x4, scoped, tag = 'scoped memory for tpu_custom_call.1']
    #allocation49 [shape = 'u8[512]{0}', space=vmem, size = 0x400, scoped, tag = 'input window, operand 43, single buffered']
    #allocation50 [shape = 'u8[16384]{0}', space=vmem, size = 0x4000, scoped, tag = 'input window, operand 44, single buffered']
    #allocation51 [shape = 's32[1]{0}', space=sflag, size = 0x4, scoped, tag = 'scoped memory for tpu_custom_call.1']
    #allocation52 [shape = 'u8[512]{0}', space=vmem, size = 0x400, scoped, tag = 'input window, operand 45, single buffered']
    #allocation53 [shape = 'u8[16384]{0}', space=vmem, size = 0x4000, scoped, tag = 'input window, operand 46, single buffered']
    #allocation54 [shape = 's32[1]{0}', space=sflag, size = 0x4, scoped, tag = 'scoped memory for tpu_custom_call.1']
    #allocation55 [shape = 'u8[512]{0}', space=vmem, size = 0x400, scoped, tag = 'input window, operand 47, single buffered']
    #allocation56 [shape = 'u8[16384]{0}', space=vmem, size = 0x4000, scoped, tag = 'input window, operand 48, single buffered']
    #allocation57 [shape = 's32[1]{0}', space=sflag, size = 0x4, scoped, tag = 'scoped memory for tpu_custom_call.1']
    #allocation58 [shape = 'u8[512]{0}', space=vmem, size = 0x400, scoped, tag = 'input window, operand 49, single buffered']
    #allocation59 [shape = 'u8[16384]{0}', space=vmem, size = 0x4000, scoped, tag = 'input window, operand 50, single buffered']
    #allocation60 [shape = 's32[1]{0}', space=sflag, size = 0x4, scoped, tag = 'scoped memory for tpu_custom_call.1']
    #allocation61 [shape = 'u8[512]{0}', space=vmem, size = 0x400, scoped, tag = 'input window, operand 51, single buffered']
    #allocation62 [shape = 'u8[512]{0}', space=vmem, size = 0x400, scoped, tag = 'input window, operand 53, single buffered']
    #allocation63 [shape = 's32[1]{0}', space=sflag, size = 0x4, scoped, tag = 'scoped memory for tpu_custom_call.1']
    #allocation64 [shape = 'u8[512]{0}', space=vmem, size = 0x400, scoped, tag = 'input window, operand 55, single buffered']
    #allocation65 [shape = 'u8[16384]{0}', space=vmem, size = 0x4000, scoped, tag = 'input window, operand 58, single buffered']
    #allocation66 [shape = 's32[1]{0}', space=sflag, size = 0x4, scoped, tag = 'scoped memory for tpu_custom_call.1']
    #allocation67 [shape = 'u8[8192]{0}', space=vmem, size = 0x2000, scoped, tag = 'output window, operand 0, single buffered']
    %126 = vsyncpa [#allocation3], 0
    %127 = vsyncpa [#allocation6], 0
    %128 = vsyncpa [#allocation9], 0
    %129 = vsyncpa [#allocation12], 0
    %130 = vsyncpa [#allocation15], 0
    %131 = vsyncpa [#allocation18], 0
    %132 = vsyncpa [#allocation21], 0
    %133 = vsyncpa [#allocation24], 0
    %134 = vsyncpa [#allocation27], 0
    %135 = vsyncpa [#allocation30], 0
    %136 = vsyncpa [#allocation33], 0
    %137 = vsyncpa [#allocation36], 0
    %138 = vsyncpa [#allocation39], 0
    %139 = vsyncpa [#allocation42], 0
    %140 = vsyncpa [#allocation45], 0
    %141 = vsyncpa [#allocation48], 0
    %142 = vsyncpa [#allocation51], 0
    %143 = vsyncpa [#allocation54], 0
    %144 = vsyncpa [#allocation57], 0
    %145 = vsyncpa [#allocation60], 0
    %146 = vsyncpa [#allocation63], 0
    %147 = vsyncpa [#allocation66], 0
    %148 = vsyncpa [#allocation4], 0
    // Predicated region
    $region2: #{tpu_custom_call.1} parent=1 // pred_check
      _
    $region3: #{tpu_custom_call.1} parent=1 // pred_check_branch
      %150 = sbr.rel (0) target = $region5
    $region4: #{tpu_custom_call.1} parent=1 // pred_region
      _
    $region5: #{tpu_custom_call.1} parent=1 // pred_fallthru
      _
    // Predicated region
    $region6: #{tpu_custom_call.1} parent=1 // pred_check
      _
    $region7: #{tpu_custom_call.1} parent=1 // pred_check_branch
      %152 = sbr.rel (0) target = $region9
    $region8: #{tpu_custom_call.1} parent=1 // pred_region
      _
    $region9: #{tpu_custom_call.1} parent=1 // pred_fallthru
      _
    // Predicated region
    $region10: #{tpu_custom_call.1} parent=1 // pred_check
      _
    $region11: #{tpu_custom_call.1} parent=1 // pred_check_branch
      %154 = sbr.rel (0) target = $region13
    $region12: #{tpu_custom_call.1} parent=1 // pred_region
      %156 = vsyncadd [#allocation3], 0
      %s158 = sshll.u32 %s5, 4
      %s159 = int_to_ptr.hbm [resolvable:$true] %s158
      %s160 = sshll.u32 [#allocation2], 4
      %s161 = int_to_ptr.vmem [resolvable:$true] %s160
      %163 = dma.hbm_to_vmem [thread:$0]  %s159, 128, %s161, [#allocation3]
    $region13: #{tpu_custom_call.1} parent=1 // pred_fallthru
      _
    // Predicated region
    $region14: #{tpu_custom_call.1} parent=1 // pred_check
      _
    $region15: #{tpu_custom_call.1} parent=1 // pred_check_branch
      %165 = sbr.rel (0) target = $region17
    $region16: #{tpu_custom_call.1} parent=1 // pred_region
      _
    $region17: #{tpu_custom_call.1} parent=1 // pred_fallthru
      _
    // Predicated region
    $region18: #{tpu_custom_call.1} parent=1 // pred_check
      _
    $region19: #{tpu_custom_call.1} parent=1 // pred_check_branch
      %167 = sbr.rel (0) target = $region21
    $region20: #{tpu_custom_call.1} parent=1 // pred_region
      %169 = vsyncadd [#allocation6], 0
      %s171 = sshll.u32 %s9, 4
      %s172 = int_to_ptr.hbm [resolvable:$true] %s171
      %s173 = sshll.u32 [#allocation5], 4
      %s174 = int_to_ptr.vmem [resolvable:$true] %s173
      %176 = dma.hbm_to_vmem [thread:$0]  %s172, 16, %s174, [#allocation6]
    $region21: #{tpu_custom_call.1} parent=1 // pred_fallthru
      _
    // Predicated region
    $region22: #{tpu_custom_call.1} parent=1 // pred_check
      _
    $region23: #{tpu_custom_call.1} parent=1 // pred_check_branch
      %178 = sbr.rel (0) target = $region25
    $region24: #{tpu_custom_call.1} parent=1 // pred_region
      %180 = vsyncadd [#allocation6], 0
      %s182 = sshll.u32 %s11, 4
      %s183 = int_to_ptr.hbm [resolvable:$true] %s182
      %s184 = sshll.u32 [#allocation7], 4
      %s185 = int_to_ptr.vmem [resolvable:$true] %s184
      %187 = dma.hbm_to_vmem [thread:$0]  %s183, 16, %s185, [#allocation6]
    $region25: #{tpu_custom_call.1} parent=1 // pred_fallthru
      _
    // Predicated region
    $region26: #{tpu_custom_call.1} parent=1 // pred_check
      _
    $region27: #{tpu_custom_call.1} parent=1 // pred_check_branch
      %189 = sbr.rel (0) target = $region29
    $region28: #{tpu_custom_call.1} parent=1 // pred_region
      %191 = vsyncadd [#allocation9], 0
      %s193 = sshll.u32 %s13, 4
      %s194 = int_to_ptr.hbm [resolvable:$true] %s193
      %s195 = sshll.u32 [#allocation8], 4
      %s196 = int_to_ptr.vmem [resolvable:$true] %s195
      %198 = dma.hbm_to_vmem [thread:$0]  %s194, 16, %s196, [#allocation9]
    $region29: #{tpu_custom_call.1} parent=1 // pred_fallthru
      _
    // Predicated region
    $region30: #{tpu_custom_call.1} parent=1 // pred_check
      _
    $region31: #{tpu_custom_call.1} parent=1 // pred_check_branch
      %200 = sbr.rel (0) target = $region33
    $region32: #{tpu_custom_call.1} parent=1 // pred_region
      %202 = vsyncadd [#allocation9], 0
      %s204 = sshll.u32 %s15, 4
      %s205 = int_to_ptr.hbm [resolvable:$true] %s204
      %s206 = sshll.u32 [#allocation10], 4
      %s207 = int_to_ptr.vmem [resolvable:$true] %s206
      %209 = dma.hbm_to_vmem [thread:$0]  %s205, 16, %s207, [#allocation9]
    $region33: #{tpu_custom_call.1} parent=1 // pred_fallthru
      _
    // Predicated region
    $region34: #{tpu_custom_call.1} parent=1 // pred_check
      _
    $region35: #{tpu_custom_call.1} parent=1 // pred_check_branch
      %211 = sbr.rel (0) target = $region37
    $region36: #{tpu_custom_call.1} parent=1 // pred_region
      %213 = vsyncadd [#allocation12], 0
      %s215 = sshll.u32 %s17, 4
      %s216 = int_to_ptr.hbm [resolvable:$true] %s215
      %s217 = sshll.u32 [#allocation11], 4
      %s218 = int_to_ptr.vmem [resolvable:$true] %s217
      %220 = dma.hbm_to_vmem [thread:$0]  %s216, 16, %s218, [#allocation12]
    $region37: #{tpu_custom_call.1} parent=1 // pred_fallthru
      _
    // Predicated region
    $region38: #{tpu_custom_call.1} parent=1 // pred_check
      _
    $region39: #{tpu_custom_call.1} parent=1 // pred_check_branch
      %222 = sbr.rel (0) target = $region41
    $region40: #{tpu_custom_call.1} parent=1 // pred_region
      %224 = vsyncadd [#allocation12], 0
      %s226 = sshll.u32 %s19, 4
      %s227 = int_to_ptr.hbm [resolvable:$true] %s226
      %s228 = sshll.u32 [#allocation13], 4
      %s229 = int_to_ptr.vmem [resolvable:$true] %s228
      %231 = dma.hbm_to_vmem [thread:$0]  %s227, 16, %s229, [#allocation12]
    $region41: #{tpu_custom_call.1} parent=1 // pred_fallthru
      _
    // Predicated region
    $region42: #{tpu_custom_call.1} parent=1 // pred_check
      _
    $region43: #{tpu_custom_call.1} parent=1 // pred_check_branch
      %233 = sbr.rel (0) target = $region45
    $region44: #{tpu_custom_call.1} parent=1 // pred_region
      _
    $region45: #{tpu_custom_call.1} parent=1 // pred_fallthru
      _
    // Predicated region
    $region46: #{tpu_custom_call.1} parent=1 // pred_check
      _
    $region47: #{tpu_custom_call.1} parent=1 // pred_check_branch
      %235 = sbr.rel (0) target = $region49
    $region48: #{tpu_custom_call.1} parent=1 // pred_region
      %237 = vsyncadd [#allocation15], 0
      %s239 = sshll.u32 %s23, 4
      %s240 = int_to_ptr.hbm [resolvable:$true] %s239
      %s241 = sshll.u32 [#allocation14], 4
      %s242 = int_to_ptr.vmem [resolvable:$true] %s241
      %244 = dma.hbm_to_vmem [thread:$0]  %s240, 16, %s242, [#allocation15]
    $region49: #{tpu_custom_call.1} parent=1 // pred_fallthru
      _
    // Predicated region
    $region50: #{tpu_custom_call.1} parent=1 // pred_check
      _
    $region51: #{tpu_custom_call.1} parent=1 // pred_check_branch
      %246 = sbr.rel (0) target = $region53
    $region52: #{tpu_custom_call.1} parent=1 // pred_region
      _
    $region53: #{tpu_custom_call.1} parent=1 // pred_fallthru
      _
    // Predicated region
    $region54: #{tpu_custom_call.1} parent=1 // pred_check
      _
    $region55: #{tpu_custom_call.1} parent=1 // pred_check_branch
      %248 = sbr.rel (0) target = $region57
    $region56: #{tpu_custom_call.1} parent=1 // pred_region
      %250 = vsyncadd [#allocation15], 0
      %s252 = sshll.u32 %s27, 4
      %s253 = int_to_ptr.hbm [resolvable:$true] %s252
      %s254 = sshll.u32 [#allocation16], 4
      %s255 = int_to_ptr.vmem [resolvable:$true] %s254
      %257 = dma.hbm_to_vmem [thread:$0]  %s253, 16, %s255, [#allocation15]
    $region57: #{tpu_custom_call.1} parent=1 // pred_fallthru
      _
    // Predicated region
    $region58: #{tpu_custom_call.1} parent=1 // pred_check
      _
    $region59: #{tpu_custom_call.1} parent=1 // pred_check_branch
      %259 = sbr.rel (0) target = $region61
    $region60: #{tpu_custom_call.1} parent=1 // pred_region
      _
    $region61: #{tpu_custom_call.1} parent=1 // pred_fallthru
      _
    // Predicated region
    $region62: #{tpu_custom_call.1} parent=1 // pred_check
      _
    $region63: #{tpu_custom_call.1} parent=1 // pred_check_branch
      %261 = sbr.rel (0) target = $region65
    $region64: #{tpu_custom_call.1} parent=1 // pred_region
      %263 = vsyncadd [#allocation18], 0
      %s265 = sshll.u32 %s31, 4
      %s266 = int_to_ptr.hbm [resolvable:$true] %s265
      %s267 = sshll.u32 [#allocation17], 4
      %s268 = int_to_ptr.vmem [resolvable:$true] %s267
      %270 = dma.hbm_to_vmem [thread:$0]  %s266, 16, %s268, [#allocation18]
    $region65: #{tpu_custom_call.1} parent=1 // pred_fallthru
      _
    // Predicated region
    $region66: #{tpu_custom_call.1} parent=1 // pred_check
      _
    $region67: #{tpu_custom_call.1} parent=1 // pred_check_branch
      %272 = sbr.rel (0) target = $region69
    $region68: #{tpu_custom_call.1} parent=1 // pred_region
      _
    $region69: #{tpu_custom_call.1} parent=1 // pred_fallthru
      _
    // Predicated region
    $region70: #{tpu_custom_call.1} parent=1 // pred_check
      _
    $region71: #{tpu_custom_call.1} parent=1 // pred_check_branch
      %274 = sbr.rel (0) target = $region73
    $region72: #{tpu_custom_call.1} parent=1 // pred_region
      %276 = vsyncadd [#allocation18], 0
      %s278 = sshll.u32 %s35, 4
      %s279 = int_to_ptr.hbm [resolvable:$true] %s278
      %s280 = sshll.u32 [#allocation19], 4
      %s281 = int_to_ptr.vmem [resolvable:$true] %s280
      %283 = dma.hbm_to_vmem [thread:$0]  %s279, 16, %s281, [#allocation18]
    $region73: #{tpu_custom_call.1} parent=1 // pred_fallthru
      _
    // Predicated region
    $region74: #{tpu_custom_call.1} parent=1 // pred_check
      _
    $region75: #{tpu_custom_call.1} parent=1 // pred_check_branch
      %285 = sbr.rel (0) target = $region77
    $region76: #{tpu_custom_call.1} parent=1 // pred_region
      _
    $region77: #{tpu_custom_call.1} parent=1 // pred_fallthru
      _
    // Predicated region
    $region78: #{tpu_custom_call.1} parent=1 // pred_check
      _
    $region79: #{tpu_custom_call.1} parent=1 // pred_check_branch
      %287 = sbr.rel (0) target = $region81
    $region80: #{tpu_custom_call.1} parent=1 // pred_region
      %289 = vsyncadd [#allocation21], 0
      %s291 = sshll.u32 %s39, 4
      %s292 = int_to_ptr.hbm [resolvable:$true] %s291
      %s293 = sshll.u32 [#allocation20], 4
      %s294 = int_to_ptr.vmem [resolvable:$true] %s293
      %296 = dma.hbm_to_vmem [thread:$0]  %s292, 16, %s294, [#allocation21]
    $region81: #{tpu_custom_call.1} parent=1 // pred_fallthru
      _
    // Predicated region
    $region82: #{tpu_custom_call.1} parent=1 // pred_check
      _
    $region83: #{tpu_custom_call.1} parent=1 // pred_check_branch
      %298 = sbr.rel (0) target = $region85
    $region84: #{tpu_custom_call.1} parent=1 // pred_region
      _
    $region85: #{tpu_custom_call.1} parent=1 // pred_fallthru
      _
    // Predicated region
    $region86: #{tpu_custom_call.1} parent=1 // pred_check
      _
    $region87: #{tpu_custom_call.1} parent=1 // pred_check_branch
      %300 = sbr.rel (0) target = $region89
    $region88: #{tpu_custom_call.1} parent=1 // pred_region
      _
    $region89: #{tpu_custom_call.1} parent=1 // pred_fallthru
      _
    // Predicated region
    $region90: #{tpu_custom_call.1} parent=1 // pred_check
      _
    $region91: #{tpu_custom_call.1} parent=1 // pred_check_branch
      %302 = sbr.rel (0) target = $region93
    $region92: #{tpu_custom_call.1} parent=1 // pred_region
      _
    $region93: #{tpu_custom_call.1} parent=1 // pred_fallthru
      _
    // Predicated region
    $region94: #{tpu_custom_call.1} parent=1 // pred_check
      _
    $region95: #{tpu_custom_call.1} parent=1 // pred_check_branch
      %304 = sbr.rel (0) target = $region97
    $region96: #{tpu_custom_call.1} parent=1 // pred_region
      _
    $region97: #{tpu_custom_call.1} parent=1 // pred_fallthru
      _
    // Predicated region
    $region98: #{tpu_custom_call.1} parent=1 // pred_check
      _
    $region99: #{tpu_custom_call.1} parent=1 // pred_check_branch
      %306 = sbr.rel (0) target = $region101
    $region100: #{tpu_custom_call.1} parent=1 // pred_region
      %308 = vsyncadd [#allocation21], 0
      %s309 = sshll.u32 %s49, 4
      %s310 = int_to_ptr.hbm [resolvable:$true] %s309
      %s311 = sshll.u32 [#allocation22], 4
      %s312 = int_to_ptr.vmem [resolvable:$true] %s311
      %317 = dma.hbm_to_vmem [thread:$0]  %s310, 512, %s312, [#allocation21], 128, 128, 8
    $region101: #{tpu_custom_call.1} parent=1 // pred_fallthru
      _
    // Predicated region
    $region102: #{tpu_custom_call.1} parent=1 // pred_check
      _
    $region103: #{tpu_custom_call.1} parent=1 // pred_check_branch
      %319 = sbr.rel (0) target = $region105
    $region104: #{tpu_custom_call.1} parent=1 // pred_region
      %321 = vsyncadd [#allocation24], 0
      %s323 = sshll.u32 %s51, 4
      %s324 = int_to_ptr.hbm [resolvable:$true] %s323
      %s325 = sshll.u32 [#allocation23], 4
      %s326 = int_to_ptr.vmem [resolvable:$true] %s325
      %328 = dma.hbm_to_vmem [thread:$0]  %s324, 16, %s326, [#allocation24]
    $region105: #{tpu_custom_call.1} parent=1 // pred_fallthru
      _
    // Predicated region
    $region106: #{tpu_custom_call.1} parent=1 // pred_check
      _
    $region107: #{tpu_custom_call.1} parent=1 // pred_check_branch
      %330 = sbr.rel (0) target = $region109
    $region108: #{tpu_custom_call.1} parent=1 // pred_region
      %332 = vsyncadd [#allocation24], 0
      %s333 = sshll.u32 %s53, 4
      %s334 = int_to_ptr.hbm [resolvable:$true] %s333
      %s335 = sshll.u32 [#allocation25], 4
      %s336 = int_to_ptr.vmem [resolvable:$true] %s335
      %341 = dma.hbm_to_vmem [thread:$0]  %s334, 512, %s336, [#allocation24], 128, 128, 8
    $region109: #{tpu_custom_call.1} parent=1 // pred_fallthru
      _
    // Predicated region
    $region110: #{tpu_custom_call.1} parent=1 // pred_check
      _
    $region111: #{tpu_custom_call.1} parent=1 // pred_check_branch
      %343 = sbr.rel (0) target = $region113
    $region112: #{tpu_custom_call.1} parent=1 // pred_region
      %345 = vsyncadd [#allocation27], 0
      %s347 = sshll.u32 %s55, 4
      %s348 = int_to_ptr.hbm [resolvable:$true] %s347
      %s349 = sshll.u32 [#allocation26], 4
      %s350 = int_to_ptr.vmem [resolvable:$true] %s349
      %352 = dma.hbm_to_vmem [thread:$0]  %s348, 16, %s350, [#allocation27]
    $region113: #{tpu_custom_call.1} parent=1 // pred_fallthru
      _
    // Predicated region
    $region114: #{tpu_custom_call.1} parent=1 // pred_check
      _
    $region115: #{tpu_custom_call.1} parent=1 // pred_check_branch
      %354 = sbr.rel (0) target = $region117
    $region116: #{tpu_custom_call.1} parent=1 // pred_region
      _
    $region117: #{tpu_custom_call.1} parent=1 // pred_fallthru
      _
    // Predicated region
    $region118: #{tpu_custom_call.1} parent=1 // pred_check
      _
    $region119: #{tpu_custom_call.1} parent=1 // pred_check_branch
      %356 = sbr.rel (0) target = $region121
    $region120: #{tpu_custom_call.1} parent=1 // pred_region
      %358 = vsyncadd [#allocation27], 0
      %s360 = sshll.u32 %s59, 4
      %s361 = int_to_ptr.hbm [resolvable:$true] %s360
      %s362 = sshll.u32 [#allocation28], 4
      %s363 = int_to_ptr.vmem [resolvable:$true] %s362
      %365 = dma.hbm_to_vmem [thread:$0]  %s361, 16, %s363, [#allocation27]
    $region121: #{tpu_custom_call.1} parent=1 // pred_fallthru
      _
    // Predicated region
    $region122: #{tpu_custom_call.1} parent=1 // pred_check
      _
    $region123: #{tpu_custom_call.1} parent=1 // pred_check_branch
      %367 = sbr.rel (0) target = $region125
    $region124: #{tpu_custom_call.1} parent=1 // pred_region
      %369 = vsyncadd [#allocation30], 0
      %s371 = sshll.u32 %s61, 4
      %s372 = int_to_ptr.hbm [resolvable:$true] %s371
      %s373 = sshll.u32 [#allocation29], 4
      %s374 = int_to_ptr.vmem [resolvable:$true] %s373
      %376 = dma.hbm_to_vmem [thread:$0]  %s372, 16, %s374, [#allocation30]
    $region125: #{tpu_custom_call.1} parent=1 // pred_fallthru
      _
    // Predicated region
    $region126: #{tpu_custom_call.1} parent=1 // pred_check
      _
    $region127: #{tpu_custom_call.1} parent=1 // pred_check_branch
      %378 = sbr.rel (0) target = $region129
    $region128: #{tpu_custom_call.1} parent=1 // pred_region
      %380 = vsyncadd [#allocation30], 0
      %s382 = sshll.u32 %s63, 4
      %s383 = int_to_ptr.hbm [resolvable:$true] %s382
      %s384 = sshll.u32 [#allocation31], 4
      %s385 = int_to_ptr.vmem [resolvable:$true] %s384
      %387 = dma.hbm_to_vmem [thread:$0]  %s383, 16, %s385, [#allocation30]
    $region129: #{tpu_custom_call.1} parent=1 // pred_fallthru
      _
    // Predicated region
    $region130: #{tpu_custom_call.1} parent=1 // pred_check
      _
    $region131: #{tpu_custom_call.1} parent=1 // pred_check_branch
      %389 = sbr.rel (0) target = $region133
    $region132: #{tpu_custom_call.1} parent=1 // pred_region
      %391 = vsyncadd [#allocation33], 0
      %s393 = sshll.u32 %s65, 4
      %s394 = int_to_ptr.hbm [resolvable:$true] %s393
      %s395 = sshll.u32 [#allocation32], 4
      %s396 = int_to_ptr.vmem [resolvable:$true] %s395
      %398 = dma.hbm_to_vmem [thread:$0]  %s394, 16, %s396, [#allocation33]
    $region133: #{tpu_custom_call.1} parent=1 // pred_fallthru
      _
    // Predicated region
    $region134: #{tpu_custom_call.1} parent=1 // pred_check
      _
    $region135: #{tpu_custom_call.1} parent=1 // pred_check_branch
      %400 = sbr.rel (0) target = $region137
    $region136: #{tpu_custom_call.1} parent=1 // pred_region
      %402 = vsyncadd [#allocation33], 0
      %s404 = sshll.u32 %s67, 4
      %s405 = int_to_ptr.hbm [resolvable:$true] %s404
      %s406 = sshll.u32 [#allocation34], 4
      %s407 = int_to_ptr.vmem [resolvable:$true] %s406
      %409 = dma.hbm_to_vmem [thread:$0]  %s405, 16, %s407, [#allocation33]
    $region137: #{tpu_custom_call.1} parent=1 // pred_fallthru
      _
    // Predicated region
    $region138: #{tpu_custom_call.1} parent=1 // pred_check
      _
    $region139: #{tpu_custom_call.1} parent=1 // pred_check_branch
      %411 = sbr.rel (0) target = $region141
    $region140: #{tpu_custom_call.1} parent=1 // pred_region
      %413 = vsyncadd [#allocation36], 0
      %s415 = sshll.u32 %s69, 4
      %s416 = int_to_ptr.hbm [resolvable:$true] %s415
      %s417 = sshll.u32 [#allocation35], 4
      %s418 = int_to_ptr.vmem [resolvable:$true] %s417
      %420 = dma.hbm_to_vmem [thread:$0]  %s416, 16, %s418, [#allocation36]
    $region141: #{tpu_custom_call.1} parent=1 // pred_fallthru
      _
    // Predicated region
    $region142: #{tpu_custom_call.1} parent=1 // pred_check
      _
    $region143: #{tpu_custom_call.1} parent=1 // pred_check_branch
      %422 = sbr.rel (0) target = $region145
    $region144: #{tpu_custom_call.1} parent=1 // pred_region
      %424 = vsyncadd [#allocation36], 0
      %s426 = sshll.u32 %s71, 4
      %s427 = int_to_ptr.hbm [resolvable:$true] %s426
      %s428 = sshll.u32 [#allocation37], 4
      %s429 = int_to_ptr.vmem [resolvable:$true] %s428
      %431 = dma.hbm_to_vmem [thread:$0]  %s427, 16, %s429, [#allocation36]
    $region145: #{tpu_custom_call.1} parent=1 // pred_fallthru
      _
    // Predicated region
    $region146: #{tpu_custom_call.1} parent=1 // pred_check
      _
    $region147: #{tpu_custom_call.1} parent=1 // pred_check_branch
      %433 = sbr.rel (0) target = $region149
    $region148: #{tpu_custom_call.1} parent=1 // pred_region
      %435 = vsyncadd [#allocation39], 0
      %s436 = sshll.u32 %s73, 4
      %s437 = int_to_ptr.hbm [resolvable:$true] %s436
      %s438 = sshll.u32 [#allocation38], 4
      %s439 = int_to_ptr.vmem [resolvable:$true] %s438
      %444 = dma.hbm_to_vmem [thread:$0]  %s437, 512, %s439, [#allocation39], 128, 128, 8
    $region149: #{tpu_custom_call.1} parent=1 // pred_fallthru
      _
    // Predicated region
    $region150: #{tpu_custom_call.1} parent=1 // pred_check
      _
    $region151: #{tpu_custom_call.1} parent=1 // pred_check_branch
      %446 = sbr.rel (0) target = $region153
    $region152: #{tpu_custom_call.1} parent=1 // pred_region
      %448 = vsyncadd [#allocation39], 0
      %s450 = sshll.u32 %s75, 4
      %s451 = int_to_ptr.hbm [resolvable:$true] %s450
      %s452 = sshll.u32 [#allocation40], 4
      %s453 = int_to_ptr.vmem [resolvable:$true] %s452
      %455 = dma.hbm_to_vmem [thread:$0]  %s451, 16, %s453, [#allocation39]
    $region153: #{tpu_custom_call.1} parent=1 // pred_fallthru
      _
    // Predicated region
    $region154: #{tpu_custom_call.1} parent=1 // pred_check
      _
    $region155: #{tpu_custom_call.1} parent=1 // pred_check_branch
      %457 = sbr.rel (0) target = $region157
    $region156: #{tpu_custom_call.1} parent=1 // pred_region
      %459 = vsyncadd [#allocation42], 0
      %s460 = sshll.u32 %s77, 4
      %s461 = int_to_ptr.hbm [resolvable:$true] %s460
      %s462 = sshll.u32 [#allocation41], 4
      %s463 = int_to_ptr.vmem [resolvable:$true] %s462
      %468 = dma.hbm_to_vmem [thread:$0]  %s461, 512, %s463, [#allocation42], 128, 128, 8
    $region157: #{tpu_custom_call.1} parent=1 // pred_fallthru
      _
    // Predicated region
    $region158: #{tpu_custom_call.1} parent=1 // pred_check
      _
    $region159: #{tpu_custom_call.1} parent=1 // pred_check_branch
      %470 = sbr.rel (0) target = $region161
    $region160: #{tpu_custom_call.1} parent=1 // pred_region
      %472 = vsyncadd [#allocation42], 0
      %s474 = sshll.u32 %s79, 4
      %s475 = int_to_ptr.hbm [resolvable:$true] %s474
      %s476 = sshll.u32 [#allocation43], 4
      %s477 = int_to_ptr.vmem [resolvable:$true] %s476
      %479 = dma.hbm_to_vmem [thread:$0]  %s475, 16, %s477, [#allocation42]
    $region161: #{tpu_custom_call.1} parent=1 // pred_fallthru
      _
    // Predicated region
    $region162: #{tpu_custom_call.1} parent=1 // pred_check
      _
    $region163: #{tpu_custom_call.1} parent=1 // pred_check_branch
      %481 = sbr.rel (0) target = $region165
    $region164: #{tpu_custom_call.1} parent=1 // pred_region
      %483 = vsyncadd [#allocation45], 0
      %s484 = sshll.u32 %s81, 4
      %s485 = int_to_ptr.hbm [resolvable:$true] %s484
      %s486 = sshll.u32 [#allocation44], 4
      %s487 = int_to_ptr.vmem [resolvable:$true] %s486
      %492 = dma.hbm_to_vmem [thread:$0]  %s485, 512, %s487, [#allocation45], 128, 128, 8
    $region165: #{tpu_custom_call.1} parent=1 // pred_fallthru
      _
    // Predicated region
    $region166: #{tpu_custom_call.1} parent=1 // pred_check
      _
    $region167: #{tpu_custom_call.1} parent=1 // pred_check_branch
      %494 = sbr.rel (0) target = $region169
    $region168: #{tpu_custom_call.1} parent=1 // pred_region
      %496 = vsyncadd [#allocation45], 0
      %s498 = sshll.u32 %s83, 4
      %s499 = int_to_ptr.hbm [resolvable:$true] %s498
      %s500 = sshll.u32 [#allocation46], 4
      %s501 = int_to_ptr.vmem [resolvable:$true] %s500
      %503 = dma.hbm_to_vmem [thread:$0]  %s499, 16, %s501, [#allocation45]
    $region169: #{tpu_custom_call.1} parent=1 // pred_fallthru
      _
    // Predicated region
    $region170: #{tpu_custom_call.1} parent=1 // pred_check
      _
    $region171: #{tpu_custom_call.1} parent=1 // pred_check_branch
      %505 = sbr.rel (0) target = $region173
    $region172: #{tpu_custom_call.1} parent=1 // pred_region
      %507 = vsyncadd [#allocation48], 0
      %s508 = sshll.u32 %s85, 4
      %s509 = int_to_ptr.hbm [resolvable:$true] %s508
      %s510 = sshll.u32 [#allocation47], 4
      %s511 = int_to_ptr.vmem [resolvable:$true] %s510
      %516 = dma.hbm_to_vmem [thread:$0]  %s509, 512, %s511, [#allocation48], 128, 128, 8
    $region173: #{tpu_custom_call.1} parent=1 // pred_fallthru
      _
    // Predicated region
    $region174: #{tpu_custom_call.1} parent=1 // pred_check
      _
    $region175: #{tpu_custom_call.1} parent=1 // pred_check_branch
      %518 = sbr.rel (0) target = $region177
    $region176: #{tpu_custom_call.1} parent=1 // pred_region
      %520 = vsyncadd [#allocation48], 0
      %s522 = sshll.u32 %s87, 4
      %s523 = int_to_ptr.hbm [resolvable:$true] %s522
      %s524 = sshll.u32 [#allocation49], 4
      %s525 = int_to_ptr.vmem [resolvable:$true] %s524
      %527 = dma.hbm_to_vmem [thread:$0]  %s523, 16, %s525, [#allocation48]
    $region177: #{tpu_custom_call.1} parent=1 // pred_fallthru
      _
    // Predicated region
    $region178: #{tpu_custom_call.1} parent=1 // pred_check
      _
    $region179: #{tpu_custom_call.1} parent=1 // pred_check_branch
      %529 = sbr.rel (0) target = $region181
    $region180: #{tpu_custom_call.1} parent=1 // pred_region
      %531 = vsyncadd [#allocation51], 0
      %s532 = sshll.u32 %s89, 4
      %s533 = int_to_ptr.hbm [resolvable:$true] %s532
      %s534 = sshll.u32 [#allocation50], 4
      %s535 = int_to_ptr.vmem [resolvable:$true] %s534
      %540 = dma.hbm_to_vmem [thread:$0]  %s533, 512, %s535, [#allocation51], 128, 128, 8
    $region181: #{tpu_custom_call.1} parent=1 // pred_fallthru
      _
    // Predicated region
    $region182: #{tpu_custom_call.1} parent=1 // pred_check
      _
    $region183: #{tpu_custom_call.1} parent=1 // pred_check_branch
      %542 = sbr.rel (0) target = $region185
    $region184: #{tpu_custom_call.1} parent=1 // pred_region
      %544 = vsyncadd [#allocation51], 0
      %s546 = sshll.u32 %s91, 4
      %s547 = int_to_ptr.hbm [resolvable:$true] %s546
      %s548 = sshll.u32 [#allocation52], 4
      %s549 = int_to_ptr.vmem [resolvable:$true] %s548
      %551 = dma.hbm_to_vmem [thread:$0]  %s547, 16, %s549, [#allocation51]
    $region185: #{tpu_custom_call.1} parent=1 // pred_fallthru
      _
    // Predicated region
    $region186: #{tpu_custom_call.1} parent=1 // pred_check
      _
    $region187: #{tpu_custom_call.1} parent=1 // pred_check_branch
      %553 = sbr.rel (0) target = $region189
    $region188: #{tpu_custom_call.1} parent=1 // pred_region
      %555 = vsyncadd [#allocation54], 0
      %s556 = sshll.u32 %s93, 4
      %s557 = int_to_ptr.hbm [resolvable:$true] %s556
      %s558 = sshll.u32 [#allocation53], 4
      %s559 = int_to_ptr.vmem [resolvable:$true] %s558
      %564 = dma.hbm_to_vmem [thread:$0]  %s557, 512, %s559, [#allocation54], 128, 128, 8
    $region189: #{tpu_custom_call.1} parent=1 // pred_fallthru
      _
    // Predicated region
    $region190: #{tpu_custom_call.1} parent=1 // pred_check
      _
    $region191: #{tpu_custom_call.1} parent=1 // pred_check_branch
      %566 = sbr.rel (0) target = $region193
    $region192: #{tpu_custom_call.1} parent=1 // pred_region
      %568 = vsyncadd [#allocation54], 0
      %s570 = sshll.u32 %s95, 4
      %s571 = int_to_ptr.hbm [resolvable:$true] %s570
      %s572 = sshll.u32 [#allocation55], 4
      %s573 = int_to_ptr.vmem [resolvable:$true] %s572
      %575 = dma.hbm_to_vmem [thread:$0]  %s571, 16, %s573, [#allocation54]
    $region193: #{tpu_custom_call.1} parent=1 // pred_fallthru
      _
    // Predicated region
    $region194: #{tpu_custom_call.1} parent=1 // pred_check
      _
    $region195: #{tpu_custom_call.1} parent=1 // pred_check_branch
      %577 = sbr.rel (0) target = $region197
    $region196: #{tpu_custom_call.1} parent=1 // pred_region
      %579 = vsyncadd [#allocation57], 0
      %s580 = sshll.u32 %s97, 4
      %s581 = int_to_ptr.hbm [resolvable:$true] %s580
      %s582 = sshll.u32 [#allocation56], 4
      %s583 = int_to_ptr.vmem [resolvable:$true] %s582
      %588 = dma.hbm_to_vmem [thread:$0]  %s581, 512, %s583, [#allocation57], 128, 128, 8
    $region197: #{tpu_custom_call.1} parent=1 // pred_fallthru
      _
    // Predicated region
    $region198: #{tpu_custom_call.1} parent=1 // pred_check
      _
    $region199: #{tpu_custom_call.1} parent=1 // pred_check_branch
      %590 = sbr.rel (0) target = $region201
    $region200: #{tpu_custom_call.1} parent=1 // pred_region
      %592 = vsyncadd [#allocation57], 0
      %s594 = sshll.u32 %s99, 4
      %s595 = int_to_ptr.hbm [resolvable:$true] %s594
      %s596 = sshll.u32 [#allocation58], 4
      %s597 = int_to_ptr.vmem [resolvable:$true] %s596
      %599 = dma.hbm_to_vmem [thread:$0]  %s595, 16, %s597, [#allocation57]
    $region201: #{tpu_custom_call.1} parent=1 // pred_fallthru
      _
    // Predicated region
    $region202: #{tpu_custom_call.1} parent=1 // pred_check
      _
    $region203: #{tpu_custom_call.1} parent=1 // pred_check_branch
      %601 = sbr.rel (0) target = $region205
    $region204: #{tpu_custom_call.1} parent=1 // pred_region
      %603 = vsyncadd [#allocation60], 0
      %s604 = sshll.u32 %s101, 4
      %s605 = int_to_ptr.hbm [resolvable:$true] %s604
      %s606 = sshll.u32 [#allocation59], 4
      %s607 = int_to_ptr.vmem [resolvable:$true] %s606
      %612 = dma.hbm_to_vmem [thread:$0]  %s605, 512, %s607, [#allocation60], 128, 128, 8
    $region205: #{tpu_custom_call.1} parent=1 // pred_fallthru
      _
    // Predicated region
    $region206: #{tpu_custom_call.1} parent=1 // pred_check
      _
    $region207: #{tpu_custom_call.1} parent=1 // pred_check_branch
      %614 = sbr.rel (0) target = $region209
    $region208: #{tpu_custom_call.1} parent=1 // pred_region
      %616 = vsyncadd [#allocation60], 0
      %s618 = sshll.u32 %s103, 4
      %s619 = int_to_ptr.hbm [resolvable:$true] %s618
      %s620 = sshll.u32 [#allocation61], 4
      %s621 = int_to_ptr.vmem [resolvable:$true] %s620
      %623 = dma.hbm_to_vmem [thread:$0]  %s619, 16, %s621, [#allocation60]
    $region209: #{tpu_custom_call.1} parent=1 // pred_fallthru
      _
    // Predicated region
    $region210: #{tpu_custom_call.1} parent=1 // pred_check
      _
    $region211: #{tpu_custom_call.1} parent=1 // pred_check_branch
      %625 = sbr.rel (0) target = $region213
    $region212: #{tpu_custom_call.1} parent=1 // pred_region
      _
    $region213: #{tpu_custom_call.1} parent=1 // pred_fallthru
      _
    // Predicated region
    $region214: #{tpu_custom_call.1} parent=1 // pred_check
      _
    $region215: #{tpu_custom_call.1} parent=1 // pred_check_branch
      %627 = sbr.rel (0) target = $region217
    $region216: #{tpu_custom_call.1} parent=1 // pred_region
      %629 = vsyncadd [#allocation63], 0
      %s631 = sshll.u32 %s107, 4
      %s632 = int_to_ptr.hbm [resolvable:$true] %s631
      %s633 = sshll.u32 [#allocation62], 4
      %s634 = int_to_ptr.vmem [resolvable:$true] %s633
      %636 = dma.hbm_to_vmem [thread:$0]  %s632, 16, %s634, [#allocation63]
    $region217: #{tpu_custom_call.1} parent=1 // pred_fallthru
      _
    // Predicated region
    $region218: #{tpu_custom_call.1} parent=1 // pred_check
      _
    $region219: #{tpu_custom_call.1} parent=1 // pred_check_branch
      %638 = sbr.rel (0) target = $region221
    $region220: #{tpu_custom_call.1} parent=1 // pred_region
      _
    $region221: #{tpu_custom_call.1} parent=1 // pred_fallthru
      _
    // Predicated region
    $region222: #{tpu_custom_call.1} parent=1 // pred_check
      _
    $region223: #{tpu_custom_call.1} parent=1 // pred_check_branch
      %640 = sbr.rel (0) target = $region225
    $region224: #{tpu_custom_call.1} parent=1 // pred_region
      %642 = vsyncadd [#allocation63], 0
      %s644 = sshll.u32 %s111, 4
      %s645 = int_to_ptr.hbm [resolvable:$true] %s644
      %s646 = sshll.u32 [#allocation64], 4
      %s647 = int_to_ptr.vmem [resolvable:$true] %s646
      %649 = dma.hbm_to_vmem [thread:$0]  %s645, 16, %s647, [#allocation63]
    $region225: #{tpu_custom_call.1} parent=1 // pred_fallthru
      _
    // Predicated region
    $region226: #{tpu_custom_call.1} parent=1 // pred_check
      _
    $region227: #{tpu_custom_call.1} parent=1 // pred_check_branch
      %651 = sbr.rel (0) target = $region229
    $region228: #{tpu_custom_call.1} parent=1 // pred_region
      _
    $region229: #{tpu_custom_call.1} parent=1 // pred_fallthru
      _
    // Predicated region
    $region230: #{tpu_custom_call.1} parent=1 // pred_check
      _
    $region231: #{tpu_custom_call.1} parent=1 // pred_check_branch
      %653 = sbr.rel (0) target = $region233
    $region232: #{tpu_custom_call.1} parent=1 // pred_region
      _
    $region233: #{tpu_custom_call.1} parent=1 // pred_fallthru
      _
    // Predicated region
    $region234: #{tpu_custom_call.1} parent=1 // pred_check
      _
    $region235: #{tpu_custom_call.1} parent=1 // pred_check_branch
      %655 = sbr.rel (0) target = $region237
    $region236: #{tpu_custom_call.1} parent=1 // pred_region
      %657 = vsyncadd [#allocation66], 0
      %s658 = sshll.u32 %s117, 4
      %s659 = int_to_ptr.hbm [resolvable:$true] %s658
      %s660 = sshll.u32 [#allocation65], 4
      %s661 = int_to_ptr.vmem [resolvable:$true] %s660
      %666 = dma.hbm_to_vmem [thread:$0]  %s659, 512, %s661, [#allocation66], 128, 128, 8
    $region237: #{tpu_custom_call.1} parent=1 // pred_fallthru
      _
    // Predicated region
    $region238: #{tpu_custom_call.1} parent=1 // pred_check
      _
    $region239: #{tpu_custom_call.1} parent=1 // pred_check_branch
      %668 = sbr.rel (0) target = $region241
    $region240: #{tpu_custom_call.1} parent=1 // pred_region
      _
    $region241: #{tpu_custom_call.1} parent=1 // pred_fallthru
      _
    // Predicated region
    $region242: #{tpu_custom_call.1} parent=1 // pred_check
      _
    $region243: #{tpu_custom_call.1} parent=1 // pred_check_branch
      %670 = sbr.rel (0) target = $region245
    $region244: #{tpu_custom_call.1} parent=1 // pred_region
      %672 = dma.done [#allocation3], 128
    $region245: #{tpu_custom_call.1} parent=1 // pred_fallthru
      _
    // Predicated region
    $region246: #{tpu_custom_call.1} parent=1 // pred_check
      _
    $region247: #{tpu_custom_call.1} parent=1 // pred_check_branch
      %674 = sbr.rel (0) target = $region249
    $region248: #{tpu_custom_call.1} parent=1 // pred_region
      %676 = dma.done [#allocation6], 16
    $region249: #{tpu_custom_call.1} parent=1 // pred_fallthru
      _
    // Predicated region
    $region250: #{tpu_custom_call.1} parent=1 // pred_check
      _
    $region251: #{tpu_custom_call.1} parent=1 // pred_check_branch
      %678 = sbr.rel (0) target = $region253
    $region252: #{tpu_custom_call.1} parent=1 // pred_region
      %680 = dma.done [#allocation6], 16
    $region253: #{tpu_custom_call.1} parent=1 // pred_fallthru
      _
    // Predicated region
    $region254: #{tpu_custom_call.1} parent=1 // pred_check
      _
    $region255: #{tpu_custom_call.1} parent=1 // pred_check_branch
      %682 = sbr.rel (0) target = $region257
    $region256: #{tpu_custom_call.1} parent=1 // pred_region
      %684 = dma.done [#allocation9], 16
    $region257: #{tpu_custom_call.1} parent=1 // pred_fallthru
      _
    // Predicated region
    $region258: #{tpu_custom_call.1} parent=1 // pred_check
      _
    $region259: #{tpu_custom_call.1} parent=1 // pred_check_branch
      %686 = sbr.rel (0) target = $region261
    $region260: #{tpu_custom_call.1} parent=1 // pred_region
      %688 = dma.done [#allocation9], 16
    $region261: #{tpu_custom_call.1} parent=1 // pred_fallthru
      _
    // Predicated region
    $region262: #{tpu_custom_call.1} parent=1 // pred_check
      _
    $region263: #{tpu_custom_call.1} parent=1 // pred_check_branch
      %690 = sbr.rel (0) target = $region265
    $region264: #{tpu_custom_call.1} parent=1 // pred_region
      %692 = dma.done [#allocation12], 16
    $region265: #{tpu_custom_call.1} parent=1 // pred_fallthru
      _
    // Predicated region
    $region266: #{tpu_custom_call.1} parent=1 // pred_check
      _
    $region267: #{tpu_custom_call.1} parent=1 // pred_check_branch
      %694 = sbr.rel (0) target = $region269
    $region268: #{tpu_custom_call.1} parent=1 // pred_region
      %696 = dma.done [#allocation12], 16
    $region269: #{tpu_custom_call.1} parent=1 // pred_fallthru
      _
    // Predicated region
    $region270: #{tpu_custom_call.1} parent=1 // pred_check
      _
    $region271: #{tpu_custom_call.1} parent=1 // pred_check_branch
      %698 = sbr.rel (0) target = $region273
    $region272: #{tpu_custom_call.1} parent=1 // pred_region
      %700 = dma.done [#allocation15], 16
    $region273: #{tpu_custom_call.1} parent=1 // pred_fallthru
      _
    // Predicated region
    $region274: #{tpu_custom_call.1} parent=1 // pred_check
      _
    $region275: #{tpu_custom_call.1} parent=1 // pred_check_branch
      %702 = sbr.rel (0) target = $region277
    $region276: #{tpu_custom_call.1} parent=1 // pred_region
      %704 = dma.done [#allocation15], 16
    $region277: #{tpu_custom_call.1} parent=1 // pred_fallthru
      _
    // Predicated region
    $region278: #{tpu_custom_call.1} parent=1 // pred_check
      _
    $region279: #{tpu_custom_call.1} parent=1 // pred_check_branch
      %706 = sbr.rel (0) target = $region281
    $region280: #{tpu_custom_call.1} parent=1 // pred_region
      %708 = dma.done [#allocation18], 16
    $region281: #{tpu_custom_call.1} parent=1 // pred_fallthru
      _
    // Predicated region
    $region282: #{tpu_custom_call.1} parent=1 // pred_check
      _
    $region283: #{tpu_custom_call.1} parent=1 // pred_check_branch
      %710 = sbr.rel (0) target = $region285
    $region284: #{tpu_custom_call.1} parent=1 // pred_region
      %712 = dma.done [#allocation18], 16
    $region285: #{tpu_custom_call.1} parent=1 // pred_fallthru
      _
    // Predicated region
    $region286: #{tpu_custom_call.1} parent=1 // pred_check
      _
    $region287: #{tpu_custom_call.1} parent=1 // pred_check_branch
      %714 = sbr.rel (0) target = $region289
    $region288: #{tpu_custom_call.1} parent=1 // pred_region
      %716 = dma.done [#allocation21], 16
    $region289: #{tpu_custom_call.1} parent=1 // pred_fallthru
      _
    // Predicated region
    $region290: #{tpu_custom_call.1} parent=1 // pred_check
      _
    $region291: #{tpu_custom_call.1} parent=1 // pred_check_branch
      %718 = sbr.rel (0) target = $region293
    $region292: #{tpu_custom_call.1} parent=1 // pred_region
      %720 = dma.done [#allocation21], 512
    $region293: #{tpu_custom_call.1} parent=1 // pred_fallthru
      _
    // Predicated region
    $region294: #{tpu_custom_call.1} parent=1 // pred_check
      _
    $region295: #{tpu_custom_call.1} parent=1 // pred_check_branch
      %722 = sbr.rel (0) target = $region297
    $region296: #{tpu_custom_call.1} parent=1 // pred_region
      %724 = dma.done [#allocation24], 16
    $region297: #{tpu_custom_call.1} parent=1 // pred_fallthru
      _
    // Predicated region
    $region298: #{tpu_custom_call.1} parent=1 // pred_check
      _
    $region299: #{tpu_custom_call.1} parent=1 // pred_check_branch
      %726 = sbr.rel (0) target = $region301
    $region300: #{tpu_custom_call.1} parent=1 // pred_region
      %728 = dma.done [#allocation24], 512
    $region301: #{tpu_custom_call.1} parent=1 // pred_fallthru
      _
    // Predicated region
    $region302: #{tpu_custom_call.1} parent=1 // pred_check
      _
    $region303: #{tpu_custom_call.1} parent=1 // pred_check_branch
      %730 = sbr.rel (0) target = $region305
    $region304: #{tpu_custom_call.1} parent=1 // pred_region
      %732 = dma.done [#allocation27], 16
    $region305: #{tpu_custom_call.1} parent=1 // pred_fallthru
      _
    // Predicated region
    $region306: #{tpu_custom_call.1} parent=1 // pred_check
      _
    $region307: #{tpu_custom_call.1} parent=1 // pred_check_branch
      %734 = sbr.rel (0) target = $region309
    $region308: #{tpu_custom_call.1} parent=1 // pred_region
      %736 = dma.done [#allocation27], 16
    $region309: #{tpu_custom_call.1} parent=1 // pred_fallthru
      _
    // Predicated region
    $region310: #{tpu_custom_call.1} parent=1 // pred_check
      _
    $region311: #{tpu_custom_call.1} parent=1 // pred_check_branch
      %738 = sbr.rel (0) target = $region313
    $region312: #{tpu_custom_call.1} parent=1 // pred_region
      %740 = dma.done [#allocation30], 16
    $region313: #{tpu_custom_call.1} parent=1 // pred_fallthru
      _
    // Predicated region
    $region314: #{tpu_custom_call.1} parent=1 // pred_check
      _
    $region315: #{tpu_custom_call.1} parent=1 // pred_check_branch
      %742 = sbr.rel (0) target = $region317
    $region316: #{tpu_custom_call.1} parent=1 // pred_region
      %744 = dma.done [#allocation30], 16
    $region317: #{tpu_custom_call.1} parent=1 // pred_fallthru
      _
    // Predicated region
    $region318: #{tpu_custom_call.1} parent=1 // pred_check
      _
    $region319: #{tpu_custom_call.1} parent=1 // pred_check_branch
      %746 = sbr.rel (0) target = $region321
    $region320: #{tpu_custom_call.1} parent=1 // pred_region
      %748 = dma.done [#allocation33], 16
    $region321: #{tpu_custom_call.1} parent=1 // pred_fallthru
      _
    // Predicated region
    $region322: #{tpu_custom_call.1} parent=1 // pred_check
      _
    $region323: #{tpu_custom_call.1} parent=1 // pred_check_branch
      %750 = sbr.rel (0) target = $region325
    $region324: #{tpu_custom_call.1} parent=1 // pred_region
      %752 = dma.done [#allocation33], 16
    $region325: #{tpu_custom_call.1} parent=1 // pred_fallthru
      _
    // Predicated region
    $region326: #{tpu_custom_call.1} parent=1 // pred_check
      _
    $region327: #{tpu_custom_call.1} parent=1 // pred_check_branch
      %754 = sbr.rel (0) target = $region329
    $region328: #{tpu_custom_call.1} parent=1 // pred_region
      %756 = dma.done [#allocation36], 16
    $region329: #{tpu_custom_call.1} parent=1 // pred_fallthru
      _
    // Predicated region
    $region330: #{tpu_custom_call.1} parent=1 // pred_check
      _
    $region331: #{tpu_custom_call.1} parent=1 // pred_check_branch
      %758 = sbr.rel (0) target = $region333
    $region332: #{tpu_custom_call.1} parent=1 // pred_region
      %760 = dma.done [#allocation36], 16
    $region333: #{tpu_custom_call.1} parent=1 // pred_fallthru
      _
    // Predicated region
    $region334: #{tpu_custom_call.1} parent=1 // pred_check
      _
    $region335: #{tpu_custom_call.1} parent=1 // pred_check_branch
      %762 = sbr.rel (0) target = $region337
    $region336: #{tpu_custom_call.1} parent=1 // pred_region
      %764 = dma.done [#allocation39], 512
    $region337: #{tpu_custom_call.1} parent=1 // pred_fallthru
      _
    // Predicated region
    $region338: #{tpu_custom_call.1} parent=1 // pred_check
      _
    $region339: #{tpu_custom_call.1} parent=1 // pred_check_branch
      %766 = sbr.rel (0) target = $region341
    $region340: #{tpu_custom_call.1} parent=1 // pred_region
      %768 = dma.done [#allocation39], 16
    $region341: #{tpu_custom_call.1} parent=1 // pred_fallthru
      _
    // Predicated region
    $region342: #{tpu_custom_call.1} parent=1 // pred_check
      _
    $region343: #{tpu_custom_call.1} parent=1 // pred_check_branch
      %770 = sbr.rel (0) target = $region345
    $region344: #{tpu_custom_call.1} parent=1 // pred_region
      %772 = dma.done [#allocation42], 512
    $region345: #{tpu_custom_call.1} parent=1 // pred_fallthru
      _
    // Predicated region
    $region346: #{tpu_custom_call.1} parent=1 // pred_check
      _
    $region347: #{tpu_custom_call.1} parent=1 // pred_check_branch
      %774 = sbr.rel (0) target = $region349
    $region348: #{tpu_custom_call.1} parent=1 // pred_region
      %776 = dma.done [#allocation42], 16
    $region349: #{tpu_custom_call.1} parent=1 // pred_fallthru
      _
    // Predicated region
    $region350: #{tpu_custom_call.1} parent=1 // pred_check
      _
    $region351: #{tpu_custom_call.1} parent=1 // pred_check_branch
      %778 = sbr.rel (0) target = $region353
    $region352: #{tpu_custom_call.1} parent=1 // pred_region
      %780 = dma.done [#allocation45], 512
    $region353: #{tpu_custom_call.1} parent=1 // pred_fallthru
      _
    // Predicated region
    $region354: #{tpu_custom_call.1} parent=1 // pred_check
      _
    $region355: #{tpu_custom_call.1} parent=1 // pred_check_branch
      %782 = sbr.rel (0) target = $region357
    $region356: #{tpu_custom_call.1} parent=1 // pred_region
      %784 = dma.done [#allocation45], 16
    $region357: #{tpu_custom_call.1} parent=1 // pred_fallthru
      _
    // Predicated region
    $region358: #{tpu_custom_call.1} parent=1 // pred_check
      _
    $region359: #{tpu_custom_call.1} parent=1 // pred_check_branch
      %786 = sbr.rel (0) target = $region361
    $region360: #{tpu_custom_call.1} parent=1 // pred_region
      %788 = dma.done [#allocation48], 512
    $region361: #{tpu_custom_call.1} parent=1 // pred_fallthru
      _
    // Predicated region
    $region362: #{tpu_custom_call.1} parent=1 // pred_check
      _
    $region363: #{tpu_custom_call.1} parent=1 // pred_check_branch
      %790 = sbr.rel (0) target = $region365
    $region364: #{tpu_custom_call.1} parent=1 // pred_region
      %792 = dma.done [#allocation48], 16
    $region365: #{tpu_custom_call.1} parent=1 // pred_fallthru
      _
    // Predicated region
    $region366: #{tpu_custom_call.1} parent=1 // pred_check
      _
    $region367: #{tpu_custom_call.1} parent=1 // pred_check_branch
      %794 = sbr.rel (0) target = $region369
    $region368: #{tpu_custom_call.1} parent=1 // pred_region
      %796 = dma.done [#allocation51], 512
    $region369: #{tpu_custom_call.1} parent=1 // pred_fallthru
      _
    // Predicated region
    $region370: #{tpu_custom_call.1} parent=1 // pred_check
      _
    $region371: #{tpu_custom_call.1} parent=1 // pred_check_branch
      %798 = sbr.rel (0) target = $region373
    $region372: #{tpu_custom_call.1} parent=1 // pred_region
      %800 = dma.done [#allocation51], 16
    $region373: #{tpu_custom_call.1} parent=1 // pred_fallthru
      _
    // Predicated region
    $region374: #{tpu_custom_call.1} parent=1 // pred_check
      _
    $region375: #{tpu_custom_call.1} parent=1 // pred_check_branch
      %802 = sbr.rel (0) target = $region377
    $region376: #{tpu_custom_call.1} parent=1 // pred_region
      %804 = dma.done [#allocation54], 512
    $region377: #{tpu_custom_call.1} parent=1 // pred_fallthru
      _
    // Predicated region
    $region378: #{tpu_custom_call.1} parent=1 // pred_check
      _
    $region379: #{tpu_custom_call.1} parent=1 // pred_check_branch
      %806 = sbr.rel (0) target = $region381
    $region380: #{tpu_custom_call.1} parent=1 // pred_region
      %808 = dma.done [#allocation54], 16
    $region381: #{tpu_custom_call.1} parent=1 // pred_fallthru
      _
    // Predicated region
    $region382: #{tpu_custom_call.1} parent=1 // pred_check
      _
    $region383: #{tpu_custom_call.1} parent=1 // pred_check_branch
      %810 = sbr.rel (0) target = $region385
    $region384: #{tpu_custom_call.1} parent=1 // pred_region
      %812 = dma.done [#allocation57], 512
    $region385: #{tpu_custom_call.1} parent=1 // pred_fallthru
      _
    // Predicated region
    $region386: #{tpu_custom_call.1} parent=1 // pred_check
      _
    $region387: #{tpu_custom_call.1} parent=1 // pred_check_branch
      %814 = sbr.rel (0) target = $region389
    $region388: #{tpu_custom_call.1} parent=1 // pred_region
      %816 = dma.done [#allocation57], 16
    $region389: #{tpu_custom_call.1} parent=1 // pred_fallthru
      _
    // Predicated region
    $region390: #{tpu_custom_call.1} parent=1 // pred_check
      _
    $region391: #{tpu_custom_call.1} parent=1 // pred_check_branch
      %818 = sbr.rel (0) target = $region393
    $region392: #{tpu_custom_call.1} parent=1 // pred_region
      %820 = dma.done [#allocation60], 512
    $region393: #{tpu_custom_call.1} parent=1 // pred_fallthru
      _
    // Predicated region
    $region394: #{tpu_custom_call.1} parent=1 // pred_check
      _
    $region395: #{tpu_custom_call.1} parent=1 // pred_check_branch
      %822 = sbr.rel (0) target = $region397
    $region396: #{tpu_custom_call.1} parent=1 // pred_region
      %824 = dma.done [#allocation60], 16
    $region397: #{tpu_custom_call.1} parent=1 // pred_fallthru
      _
    // Predicated region
    $region398: #{tpu_custom_call.1} parent=1 // pred_check
      _
    $region399: #{tpu_custom_call.1} parent=1 // pred_check_branch
      %826 = sbr.rel (0) target = $region401
    $region400: #{tpu_custom_call.1} parent=1 // pred_region
      %828 = dma.done [#allocation63], 16
    $region401: #{tpu_custom_call.1} parent=1 // pred_fallthru
      _
    // Predicated region
    $region402: #{tpu_custom_call.1} parent=1 // pred_check
      _
    $region403: #{tpu_custom_call.1} parent=1 // pred_check_branch
      %830 = sbr.rel (0) target = $region405
    $region404: #{tpu_custom_call.1} parent=1 // pred_region
      %832 = dma.done [#allocation63], 16
    $region405: #{tpu_custom_call.1} parent=1 // pred_fallthru
      _
    // Predicated region
    $region406: #{tpu_custom_call.1} parent=1 // pred_check
      _
    $region407: #{tpu_custom_call.1} parent=1 // pred_check_branch
      %834 = sbr.rel (0) target = $region409
    $region408: #{tpu_custom_call.1} parent=1 // pred_region
      %836 = dma.done [#allocation66], 512
    $region409: #{tpu_custom_call.1} parent=1 // pred_fallthru
      _
    %v838 = vld [vmem:[%s1] sm:$0xff]
    %v839 = vld [vmem:[%s1 + $0x8] sm:$0xff]
    %v840 = vlaneseq
    %v841 = vand.u32 %v840, 127
    %842 = vset.pattern.permute.xlu0 0
    %843 = vperm.xlu0 %842, %v838
    %v844 = vpop.permute.xlu0 %843
    %845 = vset.pattern.permute.xlu0 0
    %846 = vperm.xlu0 %845, %v839
    %v847 = vpop.permute.xlu0 %846
    %vm848 = vcmp.eq.s32.totalorder %v844, %v841
    %vm849 = vcmp.eq.s32.totalorder %v847, %v841
    %v850 = vsel %vm848, 1, 0
    %v851 = vsel %vm849, 1, 0
    %v852 = vcvt.s32.f32 %v850
    %v853 = vcvt.s32.f32 %v851
    %v854 = vld [vmem:[%s3] sm:$0xff]
    %v855 = vld [vmem:[%s3 + $0x8] sm:$0xff]
    %v856 = vld [vmem:[%s3 + $0x10] sm:$0xff]
    %v857 = vld [vmem:[%s3 + $0x18] sm:$0xff]
    %v858 = vld [vmem:[%s3 + $0x20] sm:$0xff]
    %v859 = vld [vmem:[%s3 + $0x28] sm:$0xff]
    %v860 = vld [vmem:[%s3 + $0x30] sm:$0xff]
    %v861 = vld [vmem:[%s3 + $0x38] sm:$0xff]
    %vm862 = vcmask 523264
    %v864 = vsel %vm862, %v852, 0
    %v867 = vsel %vm862, %v853, 0
    %869 = vmatpush.msra.mxu0 0.0
    %870 = vmatpush.msra.mxu0 0.0
    %871 = vmatpush.msra.mxu0 0.0
    %872 = vmatpush.msra.mxu0 0.0
    %873 = vmatpush.msra.mxu0 0.0
    %874 = vmatpush.msra.mxu0 0.0
    %875 = vmatpush.msra.mxu0 0.0
    %876 = vmatpush.msra.mxu0 0.0
    %877 = vmatpush.msra.mxu0 %v861
    %878 = vmatpush.msra.mxu0 %v860
    %879 = vmatpush.msra.mxu0 %v859
    %880 = vmatpush.msra.mxu0 %v858
    %881 = vmatpush.msra.mxu0 %v857
    %882 = vmatpush.msra.mxu0 %v856
    %883 = vmatpush.msra.mxu0 %v855
    %884 = vmatpush.msra.mxu0 %v854
    %885 = vmatmul.f32.gmra.mxu0 %v864
    %v886 = vpop.f32.mrf.mxu0
    %v887 = vadd.f32 0.0, %v886
    %888 = vmatmul.f32.gmra.mxu0 %v867
    %v889 = vpop.f32.mrf.mxu0
    %v890 = vadd.f32 0.0, %v889
    %891 = vdwg.mxu0
    %v892 = vld [vmem:[#allocation2] sm:$0xff]
    %v893 = vadd.f32 %v887, %v892
    %v894 = vadd.f32 %v890, %v892
    %v895 = vld [vmem:[%s7] sm:$0xff]
    %v896 = vld [vmem:[%s7 + $0x8] sm:$0xff]
    %v897 = vld [vmem:[%s7 + $0x10] sm:$0xff]
    %v898 = vld [vmem:[%s7 + $0x18] sm:$0xff]
    %v899 = vld [vmem:[#allocation5] sm:$0x1]
    %v900 = vld [vmem:[#allocation7] sm:$0x1]
    %vm901 = vcmask 261120
    %v902 = vsel %vm901, %v893, 0.0
    %903 = vadd.xlane.f32.xlu0 %v902
    %v904 = vpop.xlane.xlu0 %903
    %v905 = vsel %vm901, %v894, 0.0
    %906 = vadd.xlane.f32.xlu0 %v905
    %v907 = vpop.xlane.xlu0 %906
    %v908 = vrcp.pop 32.0
    %v909 = vmul.f32 32.0, %v908
    %v910 = vsub.f32 1.0, %v909
    %v911 = vmul.f32 %v908, %v910
    %v912 = vadd.f32 %v908, %v911
    %vm913 = vweird.f32 %v908
    %v914 = vsel %vm913, %v908, %v912
    %v915 = vmul.f32 %v904, %v914
    %v916 = vmul.f32 %v907, %v914
    %v917 = vsub.f32 %v893, %v915
    %v918 = vsub.f32 %v894, %v916
    %v919 = vmul.f32 %v917, %v917
    %v920 = vmul.f32 %v918, %v918
    %v921 = vsel %vm901, %v919, 0.0
    %922 = vadd.xlane.f32.xlu0 %v921
    %v923 = vpop.xlane.xlu0 %922
    %v924 = vsel %vm901, %v920, 0.0
    %925 = vadd.xlane.f32.xlu0 %v924
    %v926 = vpop.xlane.xlu0 %925
    %v927 = vmul.f32 %v923, 0.032258064
    %v928 = vmul.f32 %v926, 0.032258064
    %v929 = vrsqrt.pop %v927
    %v930 = vmul.f32 %v929, %v927
    %v931 = vmul.f32 %v930, %v929
    %v932 = vmul.f32 0.5, %v931
    %v933 = vsub.f32 1.5, %v932
    %v934 = vmul.f32 %v929, %v933
    %v935 = vmul.f32 %v927, %v934
    %vm936 = vcmp.eq.f32.partialorder %v927, inf
    %v937 = vsel %vm936, %v927, %v935
    %vm938 = vcmp.eq.f32.partialorder %v927, 0.0
    %v939 = vand.u32 %v927, 2147483648
    %v940 = vsel %vm938, %v939, %v937
    %v941 = vrsqrt.pop %v928
    %v942 = vmul.f32 %v941, %v928
    %v943 = vmul.f32 %v942, %v941
    %v944 = vmul.f32 0.5, %v943
    %v945 = vsub.f32 1.5, %v944
    %v946 = vmul.f32 %v941, %v945
    %v947 = vmul.f32 %v928, %v946
    %vm948 = vcmp.eq.f32.partialorder %v928, inf
    %v949 = vsel %vm948, %v928, %v947
    %vm950 = vcmp.eq.f32.partialorder %v928, 0.0
    %v951 = vand.u32 %v928, 2147483648
    %v952 = vsel %vm950, %v951, %v949
    %v953 = vadd.f32 %v940, 1e-06
    %v954 = vadd.f32 %v952, 1e-06
    %v955 = vrcp.pop %v953
    %v956 = vrcp.pop %v954
    %v957 = vmul.f32 %v917, %v955
    %v958 = vmul.f32 %v918, %v956
    %v960 = vperm.slane %v899, 0
    %v962 = vmul.f32 %v960, %v957
    %v963 = vmul.f32 %v960, %v958
    %v965 = vperm.slane %v900, 0
    %v967 = vadd.f32 %v962, %v965
    %v968 = vadd.f32 %v963, %v965
    %v969 = vpack.c.bf16 %v968, %v967
    %v970 = vld [vmem:[%s21] sm:$0xff]
    %v971 = vld [vmem:[%s21 + $0x8] sm:$0xff]
    %v972 = vld [vmem:[%s21 + $0x10] sm:$0xff]
    %v973 = vld [vmem:[%s21 + $0x18] sm:$0xff]
    %v974 = vpack.c.bf16 %v971, %v970
    %v975 = vpack.c.bf16 %v973, %v972
    %v976 = vld [vmem:[#allocation14] sm:$0x1]
    %v978 = vperm.slane %v976, 0
    %v981 = vsel %vm901, %v969, 0
    %983 = vmatpush.bf16.msra.mxu0 0
    %984 = vmatpush.bf16.msra.mxu0 0
    %985 = vmatpush.bf16.msra.mxu0 0
    %986 = vmatpush.bf16.msra.mxu0 0
    %987 = vmatpush.bf16.msra.mxu0 0
    %988 = vmatpush.bf16.msra.mxu0 0
    %989 = vmatpush.bf16.msra.mxu0 %v975
    %990 = vmatpush.bf16.msra.mxu0 %v974
    %991 = vmatmul.bf16.gmra.mxu0 %v981
    %v992 = vpop.f32.mrf.mxu0
    %v993 = vadd.f32 %v978, %v992
    %v994 = vpop.f32.mrf.mxu0
    %v995 = vadd.f32 %v978, %v994
    %996 = vdwg.mxu0
    %v997 = vmul.f32 %v993, 0.35355338
    %v998 = vmul.f32 %v995, 0.35355338
    %v999 = vld [vmem:[%s25] sm:$0xff]
    %v1000 = vld [vmem:[%s25 + $0x8] sm:$0xff]
    %v1001 = vld [vmem:[%s25 + $0x10] sm:$0xff]
    %v1002 = vld [vmem:[%s25 + $0x18] sm:$0xff]
    %v1003 = vpack.c.bf16 %v1000, %v999
    %v1004 = vpack.c.bf16 %v1002, %v1001
    %v1005 = vld [vmem:[#allocation16] sm:$0x1]
    %v1007 = vperm.slane %v1005, 0
    %1009 = vmatpush.bf16.msra.mxu0 0
    %1010 = vmatpush.bf16.msra.mxu0 0
    %1011 = vmatpush.bf16.msra.mxu0 0
    %1012 = vmatpush.bf16.msra.mxu0 0
    %1013 = vmatpush.bf16.msra.mxu0 0
    %1014 = vmatpush.bf16.msra.mxu0 0
    %1015 = vmatpush.bf16.msra.mxu0 %v1004
    %1016 = vmatpush.bf16.msra.mxu0 %v1003
    %1017 = vmatmul.bf16.gmra.mxu0 %v981
    %v1018 = vpop.f32.mrf.mxu0
    %v1019 = vadd.f32 %v1007, %v1018
    %v1020 = vpop.f32.mrf.mxu0
    %v1021 = vadd.f32 %v1007, %v1020
    %1022 = vdwg.mxu0
    %v1023 = vld [vmem:[%s29] sm:$0xff]
    %v1024 = vld [vmem:[%s29 + $0x8] sm:$0xff]
    %v1025 = vld [vmem:[%s29 + $0x10] sm:$0xff]
    %v1026 = vld [vmem:[%s29 + $0x18] sm:$0xff]
    %v1027 = vpack.c.bf16 %v1024, %v1023
    %v1028 = vpack.c.bf16 %v1026, %v1025
    %v1029 = vld [vmem:[#allocation17] sm:$0x1]
    %v1031 = vperm.slane %v1029, 0
    %1033 = vmatpush.bf16.msra.mxu0 0
    %1034 = vmatpush.bf16.msra.mxu0 0
    %1035 = vmatpush.bf16.msra.mxu0 0
    %1036 = vmatpush.bf16.msra.mxu0 0
    %1037 = vmatpush.bf16.msra.mxu0 0
    %1038 = vmatpush.bf16.msra.mxu0 0
    %1039 = vmatpush.bf16.msra.mxu0 %v1028
    %1040 = vmatpush.bf16.msra.mxu0 %v1027
    %1041 = vmatmul.bf16.gmra.mxu0 %v981
    %v1042 = vpop.f32.mrf.mxu0
    %v1043 = vadd.f32 %v1031, %v1042
    %v1044 = vpop.f32.mrf.mxu0
    %v1045 = vadd.f32 %v1031, %v1044
    %1046 = vdwg.mxu0
    %v1047 = vld [vmem:[%s33] sm:$0xff]
    %v1048 = vld [vmem:[%s33 + $0x8] sm:$0xff]
    %v1049 = vld [vmem:[%s33 + $0x10] sm:$0xff]
    %v1050 = vld [vmem:[%s33 + $0x18] sm:$0xff]
    %v1051 = vpack.c.bf16 %v997, %v997
    %v1052 = vpack.c.bf16 %v998, %v998
    %v1053 = vpack.c.bf16 %v1019, %v1019
    %v1054 = vpack.c.bf16 %v1021, %v1021
    %v1055 = vpack.c.bf16 %v1043, %v1043
    %v1056 = vpack.c.bf16 %v1045, %v1045
    %vm1057 = vcmask 64512
    %v1059 = vsel %vm1057, %v1051, 0
    %v1062 = vsel %vm1057, %v1053, 0
    %1064 = vmatpush.bf16.xpose.msra.mxu0 0
    %1065 = vmatpush.bf16.xpose.msra.mxu0 0
    %1066 = vmatpush.bf16.xpose.msra.mxu0 0
    %1067 = vmatpush.bf16.xpose.msra.mxu0 0
    %1068 = vmatpush.bf16.xpose.msra.mxu0 0
    %1069 = vmatpush.bf16.xpose.msra.mxu0 0
    %1070 = vmatpush.bf16.xpose.msra.mxu0 0
    %1071 = vmatpush.bf16.xpose.msra.mxu0 %v1062
    %1072 = vmatmul.bf16.gmra.mxu0 %v1059
    %v1073 = vpop.f32.mrf.mxu0
    %v1074 = vadd.f32 0.0, %v1073
    %v1075 = vpop.f32.mrf.mxu0
    %1076 = vdwg.mxu0
    %v1078 = vsel %vm1057, %v1052, 0
    %v1081 = vsel %vm1057, %v1054, 0
    %1083 = vmatpush.bf16.xpose.msra.mxu0 0
    %1084 = vmatpush.bf16.xpose.msra.mxu0 0
    %1085 = vmatpush.bf16.xpose.msra.mxu0 0
    %1086 = vmatpush.bf16.xpose.msra.mxu0 0
    %1087 = vmatpush.bf16.xpose.msra.mxu0 0
    %1088 = vmatpush.bf16.xpose.msra.mxu0 0
    %1089 = vmatpush.bf16.xpose.msra.mxu0 0
    %1090 = vmatpush.bf16.xpose.msra.mxu0 %v1081
    %1091 = vmatmul.bf16.gmra.mxu0 %v1078
    %v1092 = vpop.f32.mrf.mxu0
    %v1093 = vadd.f32 0.0, %v1092
    %v1094 = vpop.f32.mrf.mxu0
    %1095 = vdwg.mxu0
    %v1096 = vsel %vm1057, %v1074, -inf
    %1097 = vmax.xlane.f32.xlu0 %v1096
    %v1098 = vpop.xlane.xlu0 %1097
    %v1099 = vsel %vm1057, %v1093, -inf
    %1100 = vmax.xlane.f32.xlu0 %v1099
    %v1101 = vpop.xlane.xlu0 %1100
    %v1102 = vsub.f32 %v1074, %v1098
    %v1103 = vsub.f32 %v1093, %v1101
    %v1104 = vmul.f32 %v1102, 1.442695
    %v1105 = vpow.pop %v1104
    %v1106 = vmul.f32 %v1103, 1.442695
    %v1107 = vpow.pop %v1106
    %v1108 = vsel %vm1057, %v1105, 0.0
    %1109 = vadd.xlane.f32.xlu0 %v1108
    %v1110 = vpop.xlane.xlu0 %1109
    %v1111 = vsel %vm1057, %v1107, 0.0
    %1112 = vadd.xlane.f32.xlu0 %v1111
    %v1113 = vpop.xlane.xlu0 %1112
    %v1114 = vrcp.pop %v1110
    %v1115 = vrcp.pop %v1113
    %v1116 = vmul.f32 %v1105, %v1114
    %v1117 = vmul.f32 %v1107, %v1115
    %v1118 = vpack.c.bf16 %v1116, %v1116
    %v1119 = vpack.c.bf16 %v1117, %v1117
    %v1121 = vsel %vm1057, %v1118, 0
    %vm1123 = vcmask 1043456
    %v1125 = vsel %vm1123, %v1055, 0
    %1127 = vmatpush.bf16.msra.mxu0 0
    %1128 = vmatpush.bf16.msra.mxu0 0
    %1129 = vmatpush.bf16.msra.mxu0 0
    %1130 = vmatpush.bf16.msra.mxu0 0
    %1131 = vmatpush.bf16.msra.mxu0 0
    %1132 = vmatpush.bf16.msra.mxu0 0
    %1133 = vmatpush.bf16.msra.mxu0 0
    %1134 = vmatpush.bf16.msra.mxu0 %v1125
    %1135 = vmatmul.bf16.gmra.mxu0 %v1121
    %v1136 = vpop.f32.mrf.mxu0
    %v1137 = vadd.f32 0.0, %v1136
    %v1138 = vpop.f32.mrf.mxu0
    %1139 = vdwg.mxu0
    %v1141 = vsel %vm1057, %v1119, 0
    %v1144 = vsel %vm1123, %v1056, 0
    %1146 = vmatpush.bf16.msra.mxu0 0
    %1147 = vmatpush.bf16.msra.mxu0 0
    %1148 = vmatpush.bf16.msra.mxu0 0
    %1149 = vmatpush.bf16.msra.mxu0 0
    %1150 = vmatpush.bf16.msra.mxu0 0
    %1151 = vmatpush.bf16.msra.mxu0 0
    %1152 = vmatpush.bf16.msra.mxu0 0
    %1153 = vmatpush.bf16.msra.mxu0 %v1144
    %1154 = vmatmul.bf16.gmra.mxu0 %v1141
    %v1155 = vpop.f32.mrf.mxu0
    %v1156 = vadd.f32 0.0, %v1155
    %v1157 = vpop.f32.mrf.mxu0
    %1158 = vdwg.mxu0
    %v1159 = vpack.c.bf16 %v1156, %v1137
    %v1160 = vpack.c.bf16 %v1047, %v1047
    %v1162 = vunpack.c.l.b16 %v1051
    %v1163 = vpack.c.b16 %v1162, %v1162
    %1164 = vrot.lane.b32.xlu0 %v1163, 120
    %v1165 = vpop.permute.xlu0 %1164
    %v1167 = vunpack.c.l.b16 %v1053
    %v1168 = vpack.c.b16 %v1167, %v1167
    %1169 = vrot.lane.b32.xlu0 %v1168, 120
    %v1170 = vpop.permute.xlu0 %1169
    %v1172 = vsel %vm1057, %v1165, 0
    %v1175 = vsel %vm1057, %v1170, 0
    %1177 = vmatpush.bf16.xpose.msra.mxu0 0
    %1178 = vmatpush.bf16.xpose.msra.mxu0 0
    %1179 = vmatpush.bf16.xpose.msra.mxu0 0
    %1180 = vmatpush.bf16.xpose.msra.mxu0 0
    %1181 = vmatpush.bf16.xpose.msra.mxu0 0
    %1182 = vmatpush.bf16.xpose.msra.mxu0 0
    %1183 = vmatpush.bf16.xpose.msra.mxu0 0
    %1184 = vmatpush.bf16.xpose.msra.mxu0 %v1175
    %1185 = vmatmul.bf16.gmra.mxu0 %v1172
    %v1186 = vpop.f32.mrf.mxu0
    %v1187 = vadd.f32 0.0, %v1186
    %v1188 = vpop.f32.mrf.mxu0
    %1189 = vdwg.mxu0
    %v1191 = vunpack.c.l.b16 %v1052
    %v1192 = vpack.c.b16 %v1191, %v1191
    %1193 = vrot.lane.b32.xlu0 %v1192, 120
    %v1194 = vpop.permute.xlu0 %1193
    %v1196 = vunpack.c.l.b16 %v1054
    %v1197 = vpack.c.b16 %v1196, %v1196
    %1198 = vrot.lane.b32.xlu0 %v1197, 120
    %v1199 = vpop.permute.xlu0 %1198
    %v1201 = vsel %vm1057, %v1194, 0
    %v1204 = vsel %vm1057, %v1199, 0
    %1206 = vmatpush.bf16.xpose.msra.mxu0 0
    %1207 = vmatpush.bf16.xpose.msra.mxu0 0
    %1208 = vmatpush.bf16.xpose.msra.mxu0 0
    %1209 = vmatpush.bf16.xpose.msra.mxu0 0
    %1210 = vmatpush.bf16.xpose.msra.mxu0 0
    %1211 = vmatpush.bf16.xpose.msra.mxu0 0
    %1212 = vmatpush.bf16.xpose.msra.mxu0 0
    %1213 = vmatpush.bf16.xpose.msra.mxu0 %v1204
    %1214 = vmatmul.bf16.gmra.mxu0 %v1201
    %v1215 = vpop.f32.mrf.mxu0
    %v1216 = vadd.f32 0.0, %v1215
    %v1217 = vpop.f32.mrf.mxu0
    %1218 = vdwg.mxu0
    %v1219 = vsel %vm1057, %v1187, -inf
    %1220 = vmax.xlane.f32.xlu0 %v1219
    %v1221 = vpop.xlane.xlu0 %1220
    %v1222 = vsel %vm1057, %v1216, -inf
    %1223 = vmax.xlane.f32.xlu0 %v1222
    %v1224 = vpop.xlane.xlu0 %1223
    %v1225 = vsub.f32 %v1187, %v1221
    %v1226 = vsub.f32 %v1216, %v1224
    %v1227 = vmul.f32 %v1225, 1.442695
    %v1228 = vpow.pop %v1227
    %v1229 = vmul.f32 %v1226, 1.442695
    %v1230 = vpow.pop %v1229
    %v1231 = vsel %vm1057, %v1228, 0.0
    %1232 = vadd.xlane.f32.xlu0 %v1231
    %v1233 = vpop.xlane.xlu0 %1232
    %v1234 = vsel %vm1057, %v1230, 0.0
    %1235 = vadd.xlane.f32.xlu0 %v1234
    %v1236 = vpop.xlane.xlu0 %1235
    %v1237 = vrcp.pop %v1233
    %v1238 = vrcp.pop %v1236
    %v1239 = vmul.f32 %v1228, %v1237
    %v1240 = vmul.f32 %v1230, %v1238
    %v1241 = vpack.c.bf16 %v1239, %v1239
    %v1242 = vpack.c.bf16 %v1240, %v1240
    %v1244 = vunpack.c.l.b16 %v1055
    %v1245 = vpack.c.b16 %v1244, %v1244
    %1246 = vrot.lane.b32.xlu0 %v1245, 120
    %v1247 = vpop.permute.xlu0 %1246
    %v1249 = vsel %vm1057, %v1241, 0
    %v1252 = vsel %vm1123, %v1247, 0
    %1254 = vmatpush.bf16.msra.mxu0 0
    %1255 = vmatpush.bf16.msra.mxu0 0
    %1256 = vmatpush.bf16.msra.mxu0 0
    %1257 = vmatpush.bf16.msra.mxu0 0
    %1258 = vmatpush.bf16.msra.mxu0 0
    %1259 = vmatpush.bf16.msra.mxu0 0
    %1260 = vmatpush.bf16.msra.mxu0 0
    %1261 = vmatpush.bf16.msra.mxu0 %v1252
    %1262 = vmatmul.bf16.gmra.mxu0 %v1249
    %v1263 = vpop.f32.mrf.mxu0
    %v1264 = vadd.f32 0.0, %v1263
    %v1265 = vpop.f32.mrf.mxu0
    %1266 = vdwg.mxu0
    %v1268 = vunpack.c.l.b16 %v1056
    %v1269 = vpack.c.b16 %v1268, %v1268
    %1270 = vrot.lane.b32.xlu0 %v1269, 120
    %v1271 = vpop.permute.xlu0 %1270
    %v1273 = vsel %vm1057, %v1242, 0
    %v1276 = vsel %vm1123, %v1271, 0
    %1278 = vmatpush.bf16.msra.mxu0 0
    %1279 = vmatpush.bf16.msra.mxu0 0
    %1280 = vmatpush.bf16.msra.mxu0 0
    %1281 = vmatpush.bf16.msra.mxu0 0
    %1282 = vmatpush.bf16.msra.mxu0 0
    %1283 = vmatpush.bf16.msra.mxu0 0
    %1284 = vmatpush.bf16.msra.mxu0 0
    %1285 = vmatpush.bf16.msra.mxu0 %v1276
    %1286 = vmatmul.bf16.gmra.mxu0 %v1273
    %v1287 = vpop.f32.mrf.mxu0
    %v1288 = vadd.f32 0.0, %v1287
    %v1289 = vpop.f32.mrf.mxu0
    %1290 = vdwg.mxu0
    %v1291 = vpack.c.bf16 %v1288, %v1264
    %v1292 = vpack.c.bf16 %v1048, %v1048
    %v1294 = vsel %vm1057, %v1291, 0
    %v1297 = vsel %vm1123, %v1292, 0
    %1299 = vmatpush.bf16.msra.mxu0 0
    %1300 = vmatpush.bf16.msra.mxu0 0
    %1301 = vmatpush.bf16.msra.mxu0 0
    %1302 = vmatpush.bf16.msra.mxu0 0
    %1303 = vmatpush.bf16.msra.mxu0 0
    %1304 = vmatpush.bf16.msra.mxu0 0
    %1305 = vmatpush.bf16.msra.mxu0 0
    %1306 = vmatpush.bf16.msra.mxu0 %v1297
    %1307 = vmatmul.bf16.gmra.mxu0 %v1294
    %v1308 = vpop.f32.mrf.mxu0
    %v1309 = vadd.f32 0.0, %v1308
    %v1310 = vpop.f32.mrf.mxu0
    %v1311 = vadd.f32 0.0, %v1310
    %1312 = vdwg.mxu0
    %v1314 = vsel %vm1057, %v1159, 0
    %v1317 = vsel %vm1123, %v1160, 0
    %1319 = vmatpush.bf16.msra.mxu0 0
    %1320 = vmatpush.bf16.msra.mxu0 0
    %1321 = vmatpush.bf16.msra.mxu0 0
    %1322 = vmatpush.bf16.msra.mxu0 0
    %1323 = vmatpush.bf16.msra.mxu0 0
    %1324 = vmatpush.bf16.msra.mxu0 0
    %1325 = vmatpush.bf16.msra.mxu0 0
    %1326 = vmatpush.bf16.msra.mxu0 %v1317
    %1327 = vmatmul.bf16.gmra.mxu0 %v1314
    %v1328 = vpop.f32.mrf.mxu0
    %v1329 = vadd.f32 %v1309, %v1328
    %v1330 = vpop.f32.mrf.mxu0
    %v1331 = vadd.f32 %v1311, %v1330
    %1332 = vdwg.mxu0
    %1333 = vrot.lane.b32.xlu0 %v1163, 112
    %v1334 = vpop.permute.xlu0 %1333
    %1335 = vrot.lane.b32.xlu0 %v1168, 112
    %v1336 = vpop.permute.xlu0 %1335
    %v1338 = vsel %vm1057, %v1334, 0
    %v1341 = vsel %vm1057, %v1336, 0
    %1343 = vmatpush.bf16.xpose.msra.mxu0 0
    %1344 = vmatpush.bf16.xpose.msra.mxu0 0
    %1345 = vmatpush.bf16.xpose.msra.mxu0 0
    %1346 = vmatpush.bf16.xpose.msra.mxu0 0
    %1347 = vmatpush.bf16.xpose.msra.mxu0 0
    %1348 = vmatpush.bf16.xpose.msra.mxu0 0
    %1349 = vmatpush.bf16.xpose.msra.mxu0 0
    %1350 = vmatpush.bf16.xpose.msra.mxu0 %v1341
    %1351 = vmatmul.bf16.gmra.mxu0 %v1338
    %v1352 = vpop.f32.mrf.mxu0
    %v1353 = vadd.f32 0.0, %v1352
    %v1354 = vpop.f32.mrf.mxu0
    %1355 = vdwg.mxu0
    %1356 = vrot.lane.b32.xlu0 %v1192, 112
    %v1357 = vpop.permute.xlu0 %1356
    %1358 = vrot.lane.b32.xlu0 %v1197, 112
    %v1359 = vpop.permute.xlu0 %1358
    %v1361 = vsel %vm1057, %v1357, 0
    %v1364 = vsel %vm1057, %v1359, 0
    %1366 = vmatpush.bf16.xpose.msra.mxu0 0
    %1367 = vmatpush.bf16.xpose.msra.mxu0 0
    %1368 = vmatpush.bf16.xpose.msra.mxu0 0
    %1369 = vmatpush.bf16.xpose.msra.mxu0 0
    %1370 = vmatpush.bf16.xpose.msra.mxu0 0
    %1371 = vmatpush.bf16.xpose.msra.mxu0 0
    %1372 = vmatpush.bf16.xpose.msra.mxu0 0
    %1373 = vmatpush.bf16.xpose.msra.mxu0 %v1364
    %1374 = vmatmul.bf16.gmra.mxu0 %v1361
    %v1375 = vpop.f32.mrf.mxu0
    %v1376 = vadd.f32 0.0, %v1375
    %v1377 = vpop.f32.mrf.mxu0
    %1378 = vdwg.mxu0
    %v1379 = vsel %vm1057, %v1353, -inf
    %1380 = vmax.xlane.f32.xlu0 %v1379
    %v1381 = vpop.xlane.xlu0 %1380
    %v1382 = vsel %vm1057, %v1376, -inf
    %1383 = vmax.xlane.f32.xlu0 %v1382
    %v1384 = vpop.xlane.xlu0 %1383
    %v1385 = vsub.f32 %v1353, %v1381
    %v1386 = vsub.f32 %v1376, %v1384
    %v1387 = vmul.f32 %v1385, 1.442695
    %v1388 = vpow.pop %v1387
    %v1389 = vmul.f32 %v1386, 1.442695
    %v1390 = vpow.pop %v1389
    %v1391 = vsel %vm1057, %v1388, 0.0
    %1392 = vadd.xlane.f32.xlu0 %v1391
    %v1393 = vpop.xlane.xlu0 %1392
    %v1394 = vsel %vm1057, %v1390, 0.0
    %1395 = vadd.xlane.f32.xlu0 %v1394
    %v1396 = vpop.xlane.xlu0 %1395
    %v1397 = vrcp.pop %v1393
    %v1398 = vrcp.pop %v1396
    %v1399 = vmul.f32 %v1388, %v1397
    %v1400 = vmul.f32 %v1390, %v1398
    %v1401 = vpack.c.bf16 %v1399, %v1399
    %v1402 = vpack.c.bf16 %v1400, %v1400
    %1403 = vrot.lane.b32.xlu0 %v1245, 112
    %v1404 = vpop.permute.xlu0 %1403
    %v1406 = vsel %vm1057, %v1401, 0
    %v1409 = vsel %vm1123, %v1404, 0
    %1411 = vmatpush.bf16.msra.mxu0 0
    %1412 = vmatpush.bf16.msra.mxu0 0
    %1413 = vmatpush.bf16.msra.mxu0 0
    %1414 = vmatpush.bf16.msra.mxu0 0
    %1415 = vmatpush.bf16.msra.mxu0 0
    %1416 = vmatpush.bf16.msra.mxu0 0
    %1417 = vmatpush.bf16.msra.mxu0 0
    %1418 = vmatpush.bf16.msra.mxu0 %v1409
    %1419 = vmatmul.bf16.gmra.mxu0 %v1406
    %v1420 = vpop.f32.mrf.mxu0
    %v1421 = vadd.f32 0.0, %v1420
    %v1422 = vpop.f32.mrf.mxu0
    %1423 = vdwg.mxu0
    %1424 = vrot.lane.b32.xlu0 %v1269, 112
    %v1425 = vpop.permute.xlu0 %1424
    %v1427 = vsel %vm1057, %v1402, 0
    %v1430 = vsel %vm1123, %v1425, 0
    %1432 = vmatpush.bf16.msra.mxu0 0
    %1433 = vmatpush.bf16.msra.mxu0 0
    %1434 = vmatpush.bf16.msra.mxu0 0
    %1435 = vmatpush.bf16.msra.mxu0 0
    %1436 = vmatpush.bf16.msra.mxu0 0
    %1437 = vmatpush.bf16.msra.mxu0 0
    %1438 = vmatpush.bf16.msra.mxu0 0
    %1439 = vmatpush.bf16.msra.mxu0 %v1430
    %1440 = vmatmul.bf16.gmra.mxu0 %v1427
    %v1441 = vpop.f32.mrf.mxu0
    %v1442 = vadd.f32 0.0, %v1441
    %v1443 = vpop.f32.mrf.mxu0
    %1444 = vdwg.mxu0
    %v1445 = vpack.c.bf16 %v1442, %v1421
    %v1446 = vpack.c.bf16 %v1049, %v1049
    %v1448 = vsel %vm1057, %v1445, 0
    %v1451 = vsel %vm1123, %v1446, 0
    %1453 = vmatpush.bf16.msra.mxu0 0
    %1454 = vmatpush.bf16.msra.mxu0 0
    %1455 = vmatpush.bf16.msra.mxu0 0
    %1456 = vmatpush.bf16.msra.mxu0 0
    %1457 = vmatpush.bf16.msra.mxu0 0
    %1458 = vmatpush.bf16.msra.mxu0 0
    %1459 = vmatpush.bf16.msra.mxu0 0
    %1460 = vmatpush.bf16.msra.mxu0 %v1451
    %1461 = vmatmul.bf16.gmra.mxu0 %v1448
    %v1462 = vpop.f32.mrf.mxu0
    %v1463 = vadd.f32 0.0, %v1462
    %v1464 = vpop.f32.mrf.mxu0
    %v1465 = vadd.f32 0.0, %v1464
    %1466 = vdwg.mxu0
    %v1467 = vadd.f32 %v1329, %v1463
    %v1468 = vadd.f32 %v1331, %v1465
    %1469 = vrot.lane.b32.xlu0 %v1163, 104
    %v1470 = vpop.permute.xlu0 %1469
    %1471 = vrot.lane.b32.xlu0 %v1168, 104
    %v1472 = vpop.permute.xlu0 %1471
    %v1474 = vsel %vm1057, %v1470, 0
    %v1477 = vsel %vm1057, %v1472, 0
    %1479 = vmatpush.bf16.xpose.msra.mxu0 0
    %1480 = vmatpush.bf16.xpose.msra.mxu0 0
    %1481 = vmatpush.bf16.xpose.msra.mxu0 0
    %1482 = vmatpush.bf16.xpose.msra.mxu0 0
    %1483 = vmatpush.bf16.xpose.msra.mxu0 0
    %1484 = vmatpush.bf16.xpose.msra.mxu0 0
    %1485 = vmatpush.bf16.xpose.msra.mxu0 0
    %1486 = vmatpush.bf16.xpose.msra.mxu0 %v1477
    %1487 = vmatmul.bf16.gmra.mxu0 %v1474
    %v1488 = vpop.f32.mrf.mxu0
    %v1489 = vadd.f32 0.0, %v1488
    %v1490 = vpop.f32.mrf.mxu0
    %1491 = vdwg.mxu0
    %1492 = vrot.lane.b32.xlu0 %v1192, 104
    %v1493 = vpop.permute.xlu0 %1492
    %1494 = vrot.lane.b32.xlu0 %v1197, 104
    %v1495 = vpop.permute.xlu0 %1494
    %v1497 = vsel %vm1057, %v1493, 0
    %v1500 = vsel %vm1057, %v1495, 0
    %1502 = vmatpush.bf16.xpose.msra.mxu0 0
    %1503 = vmatpush.bf16.xpose.msra.mxu0 0
    %1504 = vmatpush.bf16.xpose.msra.mxu0 0
    %1505 = vmatpush.bf16.xpose.msra.mxu0 0
    %1506 = vmatpush.bf16.xpose.msra.mxu0 0
    %1507 = vmatpush.bf16.xpose.msra.mxu0 0
    %1508 = vmatpush.bf16.xpose.msra.mxu0 0
    %1509 = vmatpush.bf16.xpose.msra.mxu0 %v1500
    %1510 = vmatmul.bf16.gmra.mxu0 %v1497
    %v1511 = vpop.f32.mrf.mxu0
    %v1512 = vadd.f32 0.0, %v1511
    %v1513 = vpop.f32.mrf.mxu0
    %1514 = vdwg.mxu0
    %v1515 = vsel %vm1057, %v1489, -inf
    %1516 = vmax.xlane.f32.xlu0 %v1515
    %v1517 = vpop.xlane.xlu0 %1516
    %v1518 = vsel %vm1057, %v1512, -inf
    %1519 = vmax.xlane.f32.xlu0 %v1518
    %v1520 = vpop.xlane.xlu0 %1519
    %v1521 = vsub.f32 %v1489, %v1517
    %v1522 = vsub.f32 %v1512, %v1520
    %v1523 = vmul.f32 %v1521, 1.442695
    %v1524 = vpow.pop %v1523
    %v1525 = vmul.f32 %v1522, 1.442695
    %v1526 = vpow.pop %v1525
    %v1527 = vsel %vm1057, %v1524, 0.0
    %1528 = vadd.xlane.f32.xlu0 %v1527
    %v1529 = vpop.xlane.xlu0 %1528
    %v1530 = vsel %vm1057, %v1526, 0.0
    %1531 = vadd.xlane.f32.xlu0 %v1530
    %v1532 = vpop.xlane.xlu0 %1531
    %v1533 = vrcp.pop %v1529
    %v1534 = vrcp.pop %v1532
    %v1535 = vmul.f32 %v1524, %v1533
    %v1536 = vmul.f32 %v1526, %v1534
    %v1537 = vpack.c.bf16 %v1535, %v1535
    %v1538 = vpack.c.bf16 %v1536, %v1536
    %1539 = vrot.lane.b32.xlu0 %v1245, 104
    %v1540 = vpop.permute.xlu0 %1539
    %v1542 = vsel %vm1057, %v1537, 0
    %v1545 = vsel %vm1123, %v1540, 0
    %1547 = vmatpush.bf16.msra.mxu0 0
    %1548 = vmatpush.bf16.msra.mxu0 0
    %1549 = vmatpush.bf16.msra.mxu0 0
    %1550 = vmatpush.bf16.msra.mxu0 0
    %1551 = vmatpush.bf16.msra.mxu0 0
    %1552 = vmatpush.bf16.msra.mxu0 0
    %1553 = vmatpush.bf16.msra.mxu0 0
    %1554 = vmatpush.bf16.msra.mxu0 %v1545
    %1555 = vmatmul.bf16.gmra.mxu0 %v1542
    %v1556 = vpop.f32.mrf.mxu0
    %v1557 = vadd.f32 0.0, %v1556
    %v1558 = vpop.f32.mrf.mxu0
    %1559 = vdwg.mxu0
    %1560 = vrot.lane.b32.xlu0 %v1269, 104
    %v1561 = vpop.permute.xlu0 %1560
    %v1563 = vsel %vm1057, %v1538, 0
    %v1566 = vsel %vm1123, %v1561, 0
    %1568 = vmatpush.bf16.msra.mxu0 0
    %1569 = vmatpush.bf16.msra.mxu0 0
    %1570 = vmatpush.bf16.msra.mxu0 0
    %1571 = vmatpush.bf16.msra.mxu0 0
    %1572 = vmatpush.bf16.msra.mxu0 0
    %1573 = vmatpush.bf16.msra.mxu0 0
    %1574 = vmatpush.bf16.msra.mxu0 0
    %1575 = vmatpush.bf16.msra.mxu0 %v1566
    %1576 = vmatmul.bf16.gmra.mxu0 %v1563
    %v1577 = vpop.f32.mrf.mxu0
    %v1578 = vadd.f32 0.0, %v1577
    %v1579 = vpop.f32.mrf.mxu0
    %1580 = vdwg.mxu0
    %v1581 = vpack.c.bf16 %v1578, %v1557
    %v1582 = vpack.c.bf16 %v1050, %v1050
    %v1584 = vsel %vm1057, %v1581, 0
    %v1587 = vsel %vm1123, %v1582, 0
    %1589 = vmatpush.bf16.msra.mxu0 0
    %1590 = vmatpush.bf16.msra.mxu0 0
    %1591 = vmatpush.bf16.msra.mxu0 0
    %1592 = vmatpush.bf16.msra.mxu0 0
    %1593 = vmatpush.bf16.msra.mxu0 0
    %1594 = vmatpush.bf16.msra.mxu0 0
    %1595 = vmatpush.bf16.msra.mxu0 0
    %1596 = vmatpush.bf16.msra.mxu0 %v1587
    %1597 = vmatmul.bf16.gmra.mxu0 %v1584
    %v1598 = vpop.f32.mrf.mxu0
    %v1599 = vadd.f32 0.0, %v1598
    %v1600 = vpop.f32.mrf.mxu0
    %v1601 = vadd.f32 0.0, %v1600
    %1602 = vdwg.mxu0
    %v1603 = vadd.f32 %v1467, %v1599
    %v1604 = vadd.f32 %v1468, %v1601
    %v1605 = vld [vmem:[#allocation19] sm:$0x1]
    %v1607 = vperm.slane %v1605, 0
    %v1609 = vadd.f32 %v1603, %v1607
    %v1610 = vadd.f32 %v1604, %v1607
    %v1611 = vadd.f32 %v893, %v1609
    %v1612 = vadd.f32 %v894, %v1610
    %v1613 = vld [vmem:[#allocation8] sm:$0x1]
    %v1614 = vld [vmem:[#allocation10] sm:$0x1]
    %v1615 = vsel %vm901, %v1611, 0.0
    %1616 = vadd.xlane.f32.xlu0 %v1615
    %v1617 = vpop.xlane.xlu0 %1616
    %v1618 = vsel %vm901, %v1612, 0.0
    %1619 = vadd.xlane.f32.xlu0 %v1618
    %v1620 = vpop.xlane.xlu0 %1619
    %v1621 = vmul.f32 %v1617, %v914
    %v1622 = vmul.f32 %v1620, %v914
    %v1623 = vsub.f32 %v1611, %v1621
    %v1624 = vsub.f32 %v1612, %v1622
    %v1625 = vmul.f32 %v1623, %v1623
    %v1626 = vmul.f32 %v1624, %v1624
    %v1627 = vsel %vm901, %v1625, 0.0
    %1628 = vadd.xlane.f32.xlu0 %v1627
    %v1629 = vpop.xlane.xlu0 %1628
    %v1630 = vsel %vm901, %v1626, 0.0
    %1631 = vadd.xlane.f32.xlu0 %v1630
    %v1632 = vpop.xlane.xlu0 %1631
    %v1633 = vmul.f32 %v1629, 0.032258064
    %v1634 = vmul.f32 %v1632, 0.032258064
    %v1635 = vrsqrt.pop %v1633
    %v1636 = vmul.f32 %v1635, %v1633
    %v1637 = vmul.f32 %v1636, %v1635
    %v1638 = vmul.f32 0.5, %v1637
    %v1639 = vsub.f32 1.5, %v1638
    %v1640 = vmul.f32 %v1635, %v1639
    %v1641 = vmul.f32 %v1633, %v1640
    %vm1642 = vcmp.eq.f32.partialorder %v1633, inf
    %v1643 = vsel %vm1642, %v1633, %v1641
    %vm1644 = vcmp.eq.f32.partialorder %v1633, 0.0
    %v1645 = vand.u32 %v1633, 2147483648
    %v1646 = vsel %vm1644, %v1645, %v1643
    %v1647 = vrsqrt.pop %v1634
    %v1648 = vmul.f32 %v1647, %v1634
    %v1649 = vmul.f32 %v1648, %v1647
    %v1650 = vmul.f32 0.5, %v1649
    %v1651 = vsub.f32 1.5, %v1650
    %v1652 = vmul.f32 %v1647, %v1651
    %v1653 = vmul.f32 %v1634, %v1652
    %vm1654 = vcmp.eq.f32.partialorder %v1634, inf
    %v1655 = vsel %vm1654, %v1634, %v1653
    %vm1656 = vcmp.eq.f32.partialorder %v1634, 0.0
    %v1657 = vand.u32 %v1634, 2147483648
    %v1658 = vsel %vm1656, %v1657, %v1655
    %v1659 = vadd.f32 %v1646, 1e-06
    %v1660 = vadd.f32 %v1658, 1e-06
    %v1661 = vrcp.pop %v1659
    %v1662 = vrcp.pop %v1660
    %v1663 = vmul.f32 %v1623, %v1661
    %v1664 = vmul.f32 %v1624, %v1662
    %v1666 = vperm.slane %v1613, 0
    %v1668 = vmul.f32 %v1666, %v1663
    %v1669 = vmul.f32 %v1666, %v1664
    %v1671 = vperm.slane %v1614, 0
    %v1673 = vadd.f32 %v1668, %v1671
    %v1674 = vadd.f32 %v1669, %v1671
    %v1675 = vpack.c.bf16 %v1674, %v1673
    %v1676 = vpack.c.bf16 %v896, %v895
    %v1677 = vpack.c.bf16 %v898, %v897
    %v1678 = vld [vmem:[%s37] sm:$0xff]
    %v1679 = vld [vmem:[%s37 + $0x8] sm:$0xff]
    %v1680 = vld [vmem:[%s37 + $0x10] sm:$0xff]
    %v1681 = vld [vmem:[%s37 + $0x18] sm:$0xff]
    %v1682 = vpack.c.bf16 %v1679, %v1678
    %v1683 = vpack.c.bf16 %v1681, %v1680
    %v1684 = vld [vmem:[#allocation20] sm:$0x1]
    %v1686 = vperm.slane %v1684, 0
    %v1689 = vsel %vm901, %v1675, 0
    %1691 = vmatpush.bf16.msra.mxu0 0
    %1692 = vmatpush.bf16.msra.mxu0 0
    %1693 = vmatpush.bf16.msra.mxu0 0
    %1694 = vmatpush.bf16.msra.mxu0 0
    %1695 = vmatpush.bf16.msra.mxu0 0
    %1696 = vmatpush.bf16.msra.mxu0 0
    %1697 = vmatpush.bf16.msra.mxu0 %v1683
    %1698 = vmatpush.bf16.msra.mxu0 %v1682
    %1699 = vmatmul.bf16.gmra.mxu0 %v1689
    %v1700 = vpop.f32.mrf.mxu0
    %v1701 = vadd.f32 %v1686, %v1700
    %v1702 = vpop.f32.mrf.mxu0
    %v1703 = vadd.f32 %v1686, %v1702
    %1704 = vdwg.mxu0
    %v1705 = vmul.f32 %v1701, 0.35355338
    %v1706 = vmul.f32 %v1703, 0.35355338
    %v1707 = vld [vmem:[%s41] sm:$0xff]
    %v1708 = vld [vmem:[%s41 + $0x8] sm:$0xff]
    %v1709 = vld [vmem:[%s41 + $0x10] sm:$0xff]
    %v1710 = vld [vmem:[%s41 + $0x18] sm:$0xff]
    %v1711 = vpack.c.bf16 %v1708, %v1707
    %v1712 = vpack.c.bf16 %v1710, %v1709
    %v1713 = vld [vmem:[%s43] sm:$0x1]
    %v1715 = vperm.slane %v1713, 0
    %v1718 = vsel %vm901, %v1676, 0
    %v1721 = vsel %vm901, %v1677, 0
    %1723 = vmatpush.bf16.msra.mxu0 0
    %1724 = vmatpush.bf16.msra.mxu0 0
    %1725 = vmatpush.bf16.msra.mxu0 0
    %1726 = vmatpush.bf16.msra.mxu0 0
    %1727 = vmatpush.bf16.msra.mxu0 0
    %1728 = vmatpush.bf16.msra.mxu0 0
    %1729 = vmatpush.bf16.msra.mxu0 %v1712
    %1730 = vmatpush.bf16.msra.mxu0 %v1711
    %1731 = vmatmul.bf16.gmra.mxu0 %v1718
    %v1732 = vpop.f32.mrf.mxu0
    %v1733 = vadd.f32 %v1715, %v1732
    %v1734 = vpop.f32.mrf.mxu0
    %v1735 = vadd.f32 %v1715, %v1734
    %1736 = vmatmul.bf16.gmra.mxu0 %v1721
    %v1737 = vpop.f32.mrf.mxu0
    %v1738 = vadd.f32 %v1715, %v1737
    %v1739 = vpop.f32.mrf.mxu0
    %v1740 = vadd.f32 %v1715, %v1739
    %1741 = vdwg.mxu0
    %v1742 = vld [vmem:[%s45] sm:$0xff]
    %v1743 = vld [vmem:[%s45 + $0x8] sm:$0xff]
    %v1744 = vld [vmem:[%s45 + $0x10] sm:$0xff]
    %v1745 = vld [vmem:[%s45 + $0x18] sm:$0xff]
    %v1746 = vpack.c.bf16 %v1743, %v1742
    %v1747 = vpack.c.bf16 %v1745, %v1744
    %v1748 = vld [vmem:[%s47] sm:$0x1]
    %v1750 = vperm.slane %v1748, 0
    %1752 = vmatpush.bf16.msra.mxu0 0
    %1753 = vmatpush.bf16.msra.mxu0 0
    %1754 = vmatpush.bf16.msra.mxu0 0
    %1755 = vmatpush.bf16.msra.mxu0 0
    %1756 = vmatpush.bf16.msra.mxu0 0
    %1757 = vmatpush.bf16.msra.mxu0 0
    %1758 = vmatpush.bf16.msra.mxu0 %v1747
    %1759 = vmatpush.bf16.msra.mxu0 %v1746
    %1760 = vmatmul.bf16.gmra.mxu0 %v1718
    %v1761 = vpop.f32.mrf.mxu0
    %v1762 = vadd.f32 %v1750, %v1761
    %v1763 = vpop.f32.mrf.mxu0
    %v1764 = vadd.f32 %v1750, %v1763
    %1765 = vmatmul.bf16.gmra.mxu0 %v1721
    %v1766 = vpop.f32.mrf.mxu0
    %v1767 = vadd.f32 %v1750, %v1766
    %v1768 = vpop.f32.mrf.mxu0
    %v1769 = vadd.f32 %v1750, %v1768
    %1770 = vdwg.mxu0
    %v1771 = vld [vmem:[#allocation22] sm:$0xff]
    %v1772 = vld [vmem:[#allocation22 + $0x8] sm:$0xff]
    %v1773 = vld [vmem:[#allocation22 + $0x10] sm:$0xff]
    %v1774 = vld [vmem:[#allocation22 + $0x18] sm:$0xff]
    %v1775 = vpack.c.bf16 %v1705, %v1705
    %v1776 = vpack.c.bf16 %v1706, %v1706
    %v1777 = vpack.c.bf16 %v1733, %v1733
    %v1778 = vpack.c.bf16 %v1735, %v1735
    %v1779 = vpack.c.bf16 %v1738, %v1738
    %v1780 = vpack.c.bf16 %v1740, %v1740
    %v1781 = vpack.c.bf16 %v1762, %v1762
    %v1782 = vpack.c.bf16 %v1764, %v1764
    %v1783 = vpack.c.bf16 %v1767, %v1767
    %v1784 = vpack.c.bf16 %v1769, %v1769
    %v1787 = vunpack.c.l.b16 %v1777
    %v1788 = vunpack.c.l.b16 %v1778
    %v1789 = vpack.c.b16 %v1788, %v1787
    %v1791 = vsel %vm1057, %v1775, 0
    %v1794 = vsel %vm1057, %v1789, 0
    %1796 = vmatpush.bf16.xpose.msra.mxu0 0
    %1797 = vmatpush.bf16.xpose.msra.mxu0 0
    %1798 = vmatpush.bf16.xpose.msra.mxu0 0
    %1799 = vmatpush.bf16.xpose.msra.mxu0 0
    %1800 = vmatpush.bf16.xpose.msra.mxu0 0
    %1801 = vmatpush.bf16.xpose.msra.mxu0 0
    %1802 = vmatpush.bf16.xpose.msra.mxu0 0
    %1803 = vmatpush.bf16.xpose.msra.mxu0 %v1794
    %1804 = vmatmul.bf16.gmra.mxu0 %v1791
    %v1805 = vpop.f32.mrf.mxu0
    %v1806 = vadd.f32 0.0, %v1805
    %v1807 = vpop.f32.mrf.mxu0
    %1808 = vdwg.mxu0
    %v1811 = vunpack.c.l.b16 %v1779
    %v1812 = vunpack.c.l.b16 %v1780
    %v1813 = vpack.c.b16 %v1812, %v1811
    %v1815 = vsel %vm1057, %v1776, 0
    %v1818 = vsel %vm1057, %v1813, 0
    %1820 = vmatpush.bf16.xpose.msra.mxu0 0
    %1821 = vmatpush.bf16.xpose.msra.mxu0 0
    %1822 = vmatpush.bf16.xpose.msra.mxu0 0
    %1823 = vmatpush.bf16.xpose.msra.mxu0 0
    %1824 = vmatpush.bf16.xpose.msra.mxu0 0
    %1825 = vmatpush.bf16.xpose.msra.mxu0 0
    %1826 = vmatpush.bf16.xpose.msra.mxu0 0
    %1827 = vmatpush.bf16.xpose.msra.mxu0 %v1818
    %1828 = vmatmul.bf16.gmra.mxu0 %v1815
    %v1829 = vpop.f32.mrf.mxu0
    %v1830 = vadd.f32 0.0, %v1829
    %v1831 = vpop.f32.mrf.mxu0
    %1832 = vdwg.mxu0
    %vm1833 = vcmask 130048
    %v1834 = vsel %vm1833, %v1806, -inf
    %1835 = vmax.xlane.f32.xlu0 %v1834
    %v1836 = vpop.xlane.xlu0 %1835
    %v1837 = vsel %vm1833, %v1830, -inf
    %1838 = vmax.xlane.f32.xlu0 %v1837
    %v1839 = vpop.xlane.xlu0 %1838
    %v1840 = vsub.f32 %v1806, %v1836
    %v1841 = vsub.f32 %v1830, %v1839
    %v1842 = vmul.f32 %v1840, 1.442695
    %v1843 = vpow.pop %v1842
    %v1844 = vmul.f32 %v1841, 1.442695
    %v1845 = vpow.pop %v1844
    %v1846 = vsel %vm1833, %v1843, 0.0
    %1847 = vadd.xlane.f32.xlu0 %v1846
    %v1848 = vpop.xlane.xlu0 %1847
    %v1849 = vsel %vm1833, %v1845, 0.0
    %1850 = vadd.xlane.f32.xlu0 %v1849
    %v1851 = vpop.xlane.xlu0 %1850
    %v1852 = vrcp.pop %v1848
    %v1853 = vrcp.pop %v1851
    %v1854 = vmul.f32 %v1843, %v1852
    %v1855 = vmul.f32 %v1845, %v1853
    %v1856 = vpack.c.bf16 %v1854, %v1854
    %v1857 = vpack.c.bf16 %v1855, %v1855
    %v1860 = vunpack.c.l.b16 %v1781
    %v1861 = vunpack.c.l.b16 %v1782
    %v1862 = vpack.c.b16 %v1861, %v1860
    %v1865 = vsel %vm1833, %v1856, 0
    %1867 = vmatpush.bf16.msra.mxu0 0
    %1868 = vmatpush.bf16.msra.mxu0 0
    %1869 = vmatpush.bf16.msra.mxu0 0
    %1870 = vmatpush.bf16.msra.mxu0 0
    %1871 = vmatpush.bf16.msra.mxu0 0
    %1872 = vmatpush.bf16.msra.mxu0 0
    %1873 = vmatpush.bf16.msra.mxu0 0
    %1874 = vmatpush.bf16.msra.mxu0 %v1862
    %1875 = vmatmul.bf16.gmra.mxu0 %v1865
    %v1876 = vpop.f32.mrf.mxu0
    %v1877 = vadd.f32 0.0, %v1876
    %v1878 = vpop.f32.mrf.mxu0
    %1879 = vdwg.mxu0
    %v1882 = vunpack.c.l.b16 %v1783
    %v1883 = vunpack.c.l.b16 %v1784
    %v1884 = vpack.c.b16 %v1883, %v1882
    %v1887 = vsel %vm1833, %v1857, 0
    %1889 = vmatpush.bf16.msra.mxu0 0
    %1890 = vmatpush.bf16.msra.mxu0 0
    %1891 = vmatpush.bf16.msra.mxu0 0
    %1892 = vmatpush.bf16.msra.mxu0 0
    %1893 = vmatpush.bf16.msra.mxu0 0
    %1894 = vmatpush.bf16.msra.mxu0 0
    %1895 = vmatpush.bf16.msra.mxu0 0
    %1896 = vmatpush.bf16.msra.mxu0 %v1884
    %1897 = vmatmul.bf16.gmra.mxu0 %v1887
    %v1898 = vpop.f32.mrf.mxu0
    %v1899 = vadd.f32 0.0, %v1898
    %v1900 = vpop.f32.mrf.mxu0
    %1901 = vdwg.mxu0
    %v1902 = vpack.c.bf16 %v1899, %v1877
    %v1903 = vpack.c.bf16 %v1771, %v1771
    %v1905 = vunpack.c.l.b16 %v1775
    %v1906 = vpack.c.b16 %v1905, %v1905
    %1907 = vrot.lane.b32.xlu0 %v1906, 120
    %v1908 = vpop.permute.xlu0 %1907
    %1909 = vrot.lane.b32.xlu0 %v1789, 120
    %v1910 = vpop.permute.xlu0 %1909
    %v1912 = vsel %vm1057, %v1908, 0
    %v1915 = vsel %vm1057, %v1910, 0
    %1917 = vmatpush.bf16.xpose.msra.mxu0 0
    %1918 = vmatpush.bf16.xpose.msra.mxu0 0
    %1919 = vmatpush.bf16.xpose.msra.mxu0 0
    %1920 = vmatpush.bf16.xpose.msra.mxu0 0
    %1921 = vmatpush.bf16.xpose.msra.mxu0 0
    %1922 = vmatpush.bf16.xpose.msra.mxu0 0
    %1923 = vmatpush.bf16.xpose.msra.mxu0 0
    %1924 = vmatpush.bf16.xpose.msra.mxu0 %v1915
    %1925 = vmatmul.bf16.gmra.mxu0 %v1912
    %v1926 = vpop.f32.mrf.mxu0
    %v1927 = vadd.f32 0.0, %v1926
    %v1928 = vpop.f32.mrf.mxu0
    %1929 = vdwg.mxu0
    %v1931 = vunpack.c.l.b16 %v1776
    %v1932 = vpack.c.b16 %v1931, %v1931
    %1933 = vrot.lane.b32.xlu0 %v1932, 120
    %v1934 = vpop.permute.xlu0 %1933
    %1935 = vrot.lane.b32.xlu0 %v1813, 120
    %v1936 = vpop.permute.xlu0 %1935
    %v1938 = vsel %vm1057, %v1934, 0
    %v1941 = vsel %vm1057, %v1936, 0
    %1943 = vmatpush.bf16.xpose.msra.mxu0 0
    %1944 = vmatpush.bf16.xpose.msra.mxu0 0
    %1945 = vmatpush.bf16.xpose.msra.mxu0 0
    %1946 = vmatpush.bf16.xpose.msra.mxu0 0
    %1947 = vmatpush.bf16.xpose.msra.mxu0 0
    %1948 = vmatpush.bf16.xpose.msra.mxu0 0
    %1949 = vmatpush.bf16.xpose.msra.mxu0 0
    %1950 = vmatpush.bf16.xpose.msra.mxu0 %v1941
    %1951 = vmatmul.bf16.gmra.mxu0 %v1938
    %v1952 = vpop.f32.mrf.mxu0
    %v1953 = vadd.f32 0.0, %v1952
    %v1954 = vpop.f32.mrf.mxu0
    %1955 = vdwg.mxu0
    %v1956 = vsel %vm1833, %v1927, -inf
    %1957 = vmax.xlane.f32.xlu0 %v1956
    %v1958 = vpop.xlane.xlu0 %1957
    %v1959 = vsel %vm1833, %v1953, -inf
    %1960 = vmax.xlane.f32.xlu0 %v1959
    %v1961 = vpop.xlane.xlu0 %1960
    %v1962 = vsub.f32 %v1927, %v1958
    %v1963 = vsub.f32 %v1953, %v1961
    %v1964 = vmul.f32 %v1962, 1.442695
    %v1965 = vpow.pop %v1964
    %v1966 = vmul.f32 %v1963, 1.442695
    %v1967 = vpow.pop %v1966
    %v1968 = vsel %vm1833, %v1965, 0.0
    %1969 = vadd.xlane.f32.xlu0 %v1968
    %v1970 = vpop.xlane.xlu0 %1969
    %v1971 = vsel %vm1833, %v1967, 0.0
    %1972 = vadd.xlane.f32.xlu0 %v1971
    %v1973 = vpop.xlane.xlu0 %1972
    %v1974 = vrcp.pop %v1970
    %v1975 = vrcp.pop %v1973
    %v1976 = vmul.f32 %v1965, %v1974
    %v1977 = vmul.f32 %v1967, %v1975
    %v1978 = vpack.c.bf16 %v1976, %v1976
    %v1979 = vpack.c.bf16 %v1977, %v1977
    %1980 = vrot.lane.b32.xlu0 %v1862, 120
    %v1981 = vpop.permute.xlu0 %1980
    %v1984 = vsel %vm1833, %v1978, 0
    %1986 = vmatpush.bf16.msra.mxu0 0
    %1987 = vmatpush.bf16.msra.mxu0 0
    %1988 = vmatpush.bf16.msra.mxu0 0
    %1989 = vmatpush.bf16.msra.mxu0 0
    %1990 = vmatpush.bf16.msra.mxu0 0
    %1991 = vmatpush.bf16.msra.mxu0 0
    %1992 = vmatpush.bf16.msra.mxu0 0
    %1993 = vmatpush.bf16.msra.mxu0 %v1981
    %1994 = vmatmul.bf16.gmra.mxu0 %v1984
    %v1995 = vpop.f32.mrf.mxu0
    %v1996 = vadd.f32 0.0, %v1995
    %v1997 = vpop.f32.mrf.mxu0
    %1998 = vdwg.mxu0
    %1999 = vrot.lane.b32.xlu0 %v1884, 120
    %v2000 = vpop.permute.xlu0 %1999
    %v2003 = vsel %vm1833, %v1979, 0
    %2005 = vmatpush.bf16.msra.mxu0 0
    %2006 = vmatpush.bf16.msra.mxu0 0
    %2007 = vmatpush.bf16.msra.mxu0 0
    %2008 = vmatpush.bf16.msra.mxu0 0
    %2009 = vmatpush.bf16.msra.mxu0 0
    %2010 = vmatpush.bf16.msra.mxu0 0
    %2011 = vmatpush.bf16.msra.mxu0 0
    %2012 = vmatpush.bf16.msra.mxu0 %v2000
    %2013 = vmatmul.bf16.gmra.mxu0 %v2003
    %v2014 = vpop.f32.mrf.mxu0
    %v2015 = vadd.f32 0.0, %v2014
    %v2016 = vpop.f32.mrf.mxu0
    %2017 = vdwg.mxu0
    %v2018 = vpack.c.bf16 %v2015, %v1996
    %v2019 = vpack.c.bf16 %v1772, %v1772
    %v2021 = vsel %vm1057, %v2018, 0
    %v2024 = vsel %vm1123, %v2019, 0
    %2026 = vmatpush.bf16.msra.mxu0 0
    %2027 = vmatpush.bf16.msra.mxu0 0
    %2028 = vmatpush.bf16.msra.mxu0 0
    %2029 = vmatpush.bf16.msra.mxu0 0
    %2030 = vmatpush.bf16.msra.mxu0 0
    %2031 = vmatpush.bf16.msra.mxu0 0
    %2032 = vmatpush.bf16.msra.mxu0 0
    %2033 = vmatpush.bf16.msra.mxu0 %v2024
    %2034 = vmatmul.bf16.gmra.mxu0 %v2021
    %v2035 = vpop.f32.mrf.mxu0
    %v2036 = vadd.f32 0.0, %v2035
    %v2037 = vpop.f32.mrf.mxu0
    %v2038 = vadd.f32 0.0, %v2037
    %2039 = vdwg.mxu0
    %v2041 = vsel %vm1057, %v1902, 0
    %v2044 = vsel %vm1123, %v1903, 0
    %2046 = vmatpush.bf16.msra.mxu0 0
    %2047 = vmatpush.bf16.msra.mxu0 0
    %2048 = vmatpush.bf16.msra.mxu0 0
    %2049 = vmatpush.bf16.msra.mxu0 0
    %2050 = vmatpush.bf16.msra.mxu0 0
    %2051 = vmatpush.bf16.msra.mxu0 0
    %2052 = vmatpush.bf16.msra.mxu0 0
    %2053 = vmatpush.bf16.msra.mxu0 %v2044
    %2054 = vmatmul.bf16.gmra.mxu0 %v2041
    %v2055 = vpop.f32.mrf.mxu0
    %v2056 = vadd.f32 %v2036, %v2055
    %v2057 = vpop.f32.mrf.mxu0
    %v2058 = vadd.f32 %v2038, %v2057
    %2059 = vdwg.mxu0
    %2060 = vrot.lane.b32.xlu0 %v1906, 112
    %v2061 = vpop.permute.xlu0 %2060
    %2062 = vrot.lane.b32.xlu0 %v1789, 112
    %v2063 = vpop.permute.xlu0 %2062
    %v2065 = vsel %vm1057, %v2061, 0
    %v2068 = vsel %vm1057, %v2063, 0
    %2070 = vmatpush.bf16.xpose.msra.mxu0 0
    %2071 = vmatpush.bf16.xpose.msra.mxu0 0
    %2072 = vmatpush.bf16.xpose.msra.mxu0 0
    %2073 = vmatpush.bf16.xpose.msra.mxu0 0
    %2074 = vmatpush.bf16.xpose.msra.mxu0 0
    %2075 = vmatpush.bf16.xpose.msra.mxu0 0
    %2076 = vmatpush.bf16.xpose.msra.mxu0 0
    %2077 = vmatpush.bf16.xpose.msra.mxu0 %v2068
    %2078 = vmatmul.bf16.gmra.mxu0 %v2065
    %v2079 = vpop.f32.mrf.mxu0
    %v2080 = vadd.f32 0.0, %v2079
    %v2081 = vpop.f32.mrf.mxu0
    %2082 = vdwg.mxu0
    %2083 = vrot.lane.b32.xlu0 %v1932, 112
    %v2084 = vpop.permute.xlu0 %2083
    %2085 = vrot.lane.b32.xlu0 %v1813, 112
    %v2086 = vpop.permute.xlu0 %2085
    %v2088 = vsel %vm1057, %v2084, 0
    %v2091 = vsel %vm1057, %v2086, 0
    %2093 = vmatpush.bf16.xpose.msra.mxu0 0
    %2094 = vmatpush.bf16.xpose.msra.mxu0 0
    %2095 = vmatpush.bf16.xpose.msra.mxu0 0
    %2096 = vmatpush.bf16.xpose.msra.mxu0 0
    %2097 = vmatpush.bf16.xpose.msra.mxu0 0
    %2098 = vmatpush.bf16.xpose.msra.mxu0 0
    %2099 = vmatpush.bf16.xpose.msra.mxu0 0
    %2100 = vmatpush.bf16.xpose.msra.mxu0 %v2091
    %2101 = vmatmul.bf16.gmra.mxu0 %v2088
    %v2102 = vpop.f32.mrf.mxu0
    %v2103 = vadd.f32 0.0, %v2102
    %v2104 = vpop.f32.mrf.mxu0
    %2105 = vdwg.mxu0
    %v2106 = vsel %vm1833, %v2080, -inf
    %2107 = vmax.xlane.f32.xlu0 %v2106
    %v2108 = vpop.xlane.xlu0 %2107
    %v2109 = vsel %vm1833, %v2103, -inf
    %2110 = vmax.xlane.f32.xlu0 %v2109
    %v2111 = vpop.xlane.xlu0 %2110
    %v2112 = vsub.f32 %v2080, %v2108
    %v2113 = vsub.f32 %v2103, %v2111
    %v2114 = vmul.f32 %v2112, 1.442695
    %v2115 = vpow.pop %v2114
    %v2116 = vmul.f32 %v2113, 1.442695
    %v2117 = vpow.pop %v2116
    %v2118 = vsel %vm1833, %v2115, 0.0
    %2119 = vadd.xlane.f32.xlu0 %v2118
    %v2120 = vpop.xlane.xlu0 %2119
    %v2121 = vsel %vm1833, %v2117, 0.0
    %2122 = vadd.xlane.f32.xlu0 %v2121
    %v2123 = vpop.xlane.xlu0 %2122
    %v2124 = vrcp.pop %v2120
    %v2125 = vrcp.pop %v2123
    %v2126 = vmul.f32 %v2115, %v2124
    %v2127 = vmul.f32 %v2117, %v2125
    %v2128 = vpack.c.bf16 %v2126, %v2126
    %v2129 = vpack.c.bf16 %v2127, %v2127
    %2130 = vrot.lane.b32.xlu0 %v1862, 112
    %v2131 = vpop.permute.xlu0 %2130
    %v2134 = vsel %vm1833, %v2128, 0
    %2136 = vmatpush.bf16.msra.mxu0 0
    %2137 = vmatpush.bf16.msra.mxu0 0
    %2138 = vmatpush.bf16.msra.mxu0 0
    %2139 = vmatpush.bf16.msra.mxu0 0
    %2140 = vmatpush.bf16.msra.mxu0 0
    %2141 = vmatpush.bf16.msra.mxu0 0
    %2142 = vmatpush.bf16.msra.mxu0 0
    %2143 = vmatpush.bf16.msra.mxu0 %v2131
    %2144 = vmatmul.bf16.gmra.mxu0 %v2134
    %v2145 = vpop.f32.mrf.mxu0
    %v2146 = vadd.f32 0.0, %v2145
    %v2147 = vpop.f32.mrf.mxu0
    %2148 = vdwg.mxu0
    %2149 = vrot.lane.b32.xlu0 %v1884, 112
    %v2150 = vpop.permute.xlu0 %2149
    %v2153 = vsel %vm1833, %v2129, 0
    %2155 = vmatpush.bf16.msra.mxu0 0
    %2156 = vmatpush.bf16.msra.mxu0 0
    %2157 = vmatpush.bf16.msra.mxu0 0
    %2158 = vmatpush.bf16.msra.mxu0 0
    %2159 = vmatpush.bf16.msra.mxu0 0
    %2160 = vmatpush.bf16.msra.mxu0 0
    %2161 = vmatpush.bf16.msra.mxu0 0
    %2162 = vmatpush.bf16.msra.mxu0 %v2150
    %2163 = vmatmul.bf16.gmra.mxu0 %v2153
    %v2164 = vpop.f32.mrf.mxu0
    %v2165 = vadd.f32 0.0, %v2164
    %v2166 = vpop.f32.mrf.mxu0
    %2167 = vdwg.mxu0
    %v2168 = vpack.c.bf16 %v2165, %v2146
    %v2169 = vpack.c.bf16 %v1773, %v1773
    %v2171 = vsel %vm1057, %v2168, 0
    %v2174 = vsel %vm1123, %v2169, 0
    %2176 = vmatpush.bf16.msra.mxu0 0
    %2177 = vmatpush.bf16.msra.mxu0 0
    %2178 = vmatpush.bf16.msra.mxu0 0
    %2179 = vmatpush.bf16.msra.mxu0 0
    %2180 = vmatpush.bf16.msra.mxu0 0
    %2181 = vmatpush.bf16.msra.mxu0 0
    %2182 = vmatpush.bf16.msra.mxu0 0
    %2183 = vmatpush.bf16.msra.mxu0 %v2174
    %2184 = vmatmul.bf16.gmra.mxu0 %v2171
    %v2185 = vpop.f32.mrf.mxu0
    %v2186 = vadd.f32 0.0, %v2185
    %v2187 = vpop.f32.mrf.mxu0
    %v2188 = vadd.f32 0.0, %v2187
    %2189 = vdwg.mxu0
    %v2190 = vadd.f32 %v2056, %v2186
    %v2191 = vadd.f32 %v2058, %v2188
    %2192 = vrot.lane.b32.xlu0 %v1906, 104
    %v2193 = vpop.permute.xlu0 %2192
    %2194 = vrot.lane.b32.xlu0 %v1789, 104
    %v2195 = vpop.permute.xlu0 %2194
    %v2197 = vsel %vm1057, %v2193, 0
    %v2200 = vsel %vm1057, %v2195, 0
    %2202 = vmatpush.bf16.xpose.msra.mxu0 0
    %2203 = vmatpush.bf16.xpose.msra.mxu0 0
    %2204 = vmatpush.bf16.xpose.msra.mxu0 0
    %2205 = vmatpush.bf16.xpose.msra.mxu0 0
    %2206 = vmatpush.bf16.xpose.msra.mxu0 0
    %2207 = vmatpush.bf16.xpose.msra.mxu0 0
    %2208 = vmatpush.bf16.xpose.msra.mxu0 0
    %2209 = vmatpush.bf16.xpose.msra.mxu0 %v2200
    %2210 = vmatmul.bf16.gmra.mxu0 %v2197
    %v2211 = vpop.f32.mrf.mxu0
    %v2212 = vadd.f32 0.0, %v2211
    %v2213 = vpop.f32.mrf.mxu0
    %2214 = vdwg.mxu0
    %2215 = vrot.lane.b32.xlu0 %v1932, 104
    %v2216 = vpop.permute.xlu0 %2215
    %2217 = vrot.lane.b32.xlu0 %v1813, 104
    %v2218 = vpop.permute.xlu0 %2217
    %v2220 = vsel %vm1057, %v2216, 0
    %v2223 = vsel %vm1057, %v2218, 0
    %2225 = vmatpush.bf16.xpose.msra.mxu0 0
    %2226 = vmatpush.bf16.xpose.msra.mxu0 0
    %2227 = vmatpush.bf16.xpose.msra.mxu0 0
    %2228 = vmatpush.bf16.xpose.msra.mxu0 0
    %2229 = vmatpush.bf16.xpose.msra.mxu0 0
    %2230 = vmatpush.bf16.xpose.msra.mxu0 0
    %2231 = vmatpush.bf16.xpose.msra.mxu0 0
    %2232 = vmatpush.bf16.xpose.msra.mxu0 %v2223
    %2233 = vmatmul.bf16.gmra.mxu0 %v2220
    %v2234 = vpop.f32.mrf.mxu0
    %v2235 = vadd.f32 0.0, %v2234
    %v2236 = vpop.f32.mrf.mxu0
    %2237 = vdwg.mxu0
    %v2238 = vsel %vm1833, %v2212, -inf
    %2239 = vmax.xlane.f32.xlu0 %v2238
    %v2240 = vpop.xlane.xlu0 %2239
    %v2241 = vsel %vm1833, %v2235, -inf
    %2242 = vmax.xlane.f32.xlu0 %v2241
    %v2243 = vpop.xlane.xlu0 %2242
    %v2244 = vsub.f32 %v2212, %v2240
    %v2245 = vsub.f32 %v2235, %v2243
    %v2246 = vmul.f32 %v2244, 1.442695
    %v2247 = vpow.pop %v2246
    %v2248 = vmul.f32 %v2245, 1.442695
    %v2249 = vpow.pop %v2248
    %v2250 = vsel %vm1833, %v2247, 0.0
    %2251 = vadd.xlane.f32.xlu0 %v2250
    %v2252 = vpop.xlane.xlu0 %2251
    %v2253 = vsel %vm1833, %v2249, 0.0
    %2254 = vadd.xlane.f32.xlu0 %v2253
    %v2255 = vpop.xlane.xlu0 %2254
    %v2256 = vrcp.pop %v2252
    %v2257 = vrcp.pop %v2255
    %v2258 = vmul.f32 %v2247, %v2256
    %v2259 = vmul.f32 %v2249, %v2257
    %v2260 = vpack.c.bf16 %v2258, %v2258
    %v2261 = vpack.c.bf16 %v2259, %v2259
    %2262 = vrot.lane.b32.xlu0 %v1862, 104
    %v2263 = vpop.permute.xlu0 %2262
    %v2266 = vsel %vm1833, %v2260, 0
    %2268 = vmatpush.bf16.msra.mxu0 0
    %2269 = vmatpush.bf16.msra.mxu0 0
    %2270 = vmatpush.bf16.msra.mxu0 0
    %2271 = vmatpush.bf16.msra.mxu0 0
    %2272 = vmatpush.bf16.msra.mxu0 0
    %2273 = vmatpush.bf16.msra.mxu0 0
    %2274 = vmatpush.bf16.msra.mxu0 0
    %2275 = vmatpush.bf16.msra.mxu0 %v2263
    %2276 = vmatmul.bf16.gmra.mxu0 %v2266
    %v2277 = vpop.f32.mrf.mxu0
    %v2278 = vadd.f32 0.0, %v2277
    %v2279 = vpop.f32.mrf.mxu0
    %2280 = vdwg.mxu0
    %2281 = vrot.lane.b32.xlu0 %v1884, 104
    %v2282 = vpop.permute.xlu0 %2281
    %v2285 = vsel %vm1833, %v2261, 0
    %2287 = vmatpush.bf16.msra.mxu0 0
    %2288 = vmatpush.bf16.msra.mxu0 0
    %2289 = vmatpush.bf16.msra.mxu0 0
    %2290 = vmatpush.bf16.msra.mxu0 0
    %2291 = vmatpush.bf16.msra.mxu0 0
    %2292 = vmatpush.bf16.msra.mxu0 0
    %2293 = vmatpush.bf16.msra.mxu0 0
    %2294 = vmatpush.bf16.msra.mxu0 %v2282
    %2295 = vmatmul.bf16.gmra.mxu0 %v2285
    %v2296 = vpop.f32.mrf.mxu0
    %v2297 = vadd.f32 0.0, %v2296
    %v2298 = vpop.f32.mrf.mxu0
    %2299 = vdwg.mxu0
    %v2300 = vpack.c.bf16 %v2297, %v2278
    %v2301 = vpack.c.bf16 %v1774, %v1774
    %v2303 = vsel %vm1057, %v2300, 0
    %v2306 = vsel %vm1123, %v2301, 0
    %2308 = vmatpush.bf16.msra.mxu0 0
    %2309 = vmatpush.bf16.msra.mxu0 0
    %2310 = vmatpush.bf16.msra.mxu0 0
    %2311 = vmatpush.bf16.msra.mxu0 0
    %2312 = vmatpush.bf16.msra.mxu0 0
    %2313 = vmatpush.bf16.msra.mxu0 0
    %2314 = vmatpush.bf16.msra.mxu0 0
    %2315 = vmatpush.bf16.msra.mxu0 %v2306
    %2316 = vmatmul.bf16.gmra.mxu0 %v2303
    %v2317 = vpop.f32.mrf.mxu0
    %v2318 = vadd.f32 0.0, %v2317
    %v2319 = vpop.f32.mrf.mxu0
    %v2320 = vadd.f32 0.0, %v2319
    %2321 = vdwg.mxu0
    %v2322 = vadd.f32 %v2190, %v2318
    %v2323 = vadd.f32 %v2191, %v2320
    %v2324 = vld [vmem:[#allocation23] sm:$0x1]
    %v2326 = vperm.slane %v2324, 0
    %v2328 = vadd.f32 %v2322, %v2326
    %v2329 = vadd.f32 %v2323, %v2326
    %v2330 = vadd.f32 %v1611, %v2328
    %v2331 = vadd.f32 %v1612, %v2329
    %v2332 = vld [vmem:[#allocation11] sm:$0x1]
    %v2333 = vld [vmem:[#allocation13] sm:$0x1]
    %v2334 = vsel %vm901, %v2330, 0.0
    %2335 = vadd.xlane.f32.xlu0 %v2334
    %v2336 = vpop.xlane.xlu0 %2335
    %v2337 = vsel %vm901, %v2331, 0.0
    %2338 = vadd.xlane.f32.xlu0 %v2337
    %v2339 = vpop.xlane.xlu0 %2338
    %v2340 = vmul.f32 %v2336, %v914
    %v2341 = vmul.f32 %v2339, %v914
    %v2342 = vsub.f32 %v2330, %v2340
    %v2343 = vsub.f32 %v2331, %v2341
    %v2344 = vmul.f32 %v2342, %v2342
    %v2345 = vmul.f32 %v2343, %v2343
    %v2346 = vsel %vm901, %v2344, 0.0
    %2347 = vadd.xlane.f32.xlu0 %v2346
    %v2348 = vpop.xlane.xlu0 %2347
    %v2349 = vsel %vm901, %v2345, 0.0
    %2350 = vadd.xlane.f32.xlu0 %v2349
    %v2351 = vpop.xlane.xlu0 %2350
    %v2352 = vmul.f32 %v2348, 0.032258064
    %v2353 = vmul.f32 %v2351, 0.032258064
    %v2354 = vrsqrt.pop %v2352
    %v2355 = vmul.f32 %v2354, %v2352
    %v2356 = vmul.f32 %v2355, %v2354
    %v2357 = vmul.f32 0.5, %v2356
    %v2358 = vsub.f32 1.5, %v2357
    %v2359 = vmul.f32 %v2354, %v2358
    %v2360 = vmul.f32 %v2352, %v2359
    %vm2361 = vcmp.eq.f32.partialorder %v2352, inf
    %v2362 = vsel %vm2361, %v2352, %v2360
    %vm2363 = vcmp.eq.f32.partialorder %v2352, 0.0
    %v2364 = vand.u32 %v2352, 2147483648
    %v2365 = vsel %vm2363, %v2364, %v2362
    %v2366 = vrsqrt.pop %v2353
    %v2367 = vmul.f32 %v2366, %v2353
    %v2368 = vmul.f32 %v2367, %v2366
    %v2369 = vmul.f32 0.5, %v2368
    %v2370 = vsub.f32 1.5, %v2369
    %v2371 = vmul.f32 %v2366, %v2370
    %v2372 = vmul.f32 %v2353, %v2371
    %vm2373 = vcmp.eq.f32.partialorder %v2353, inf
    %v2374 = vsel %vm2373, %v2353, %v2372
    %vm2375 = vcmp.eq.f32.partialorder %v2353, 0.0
    %v2376 = vand.u32 %v2353, 2147483648
    %v2377 = vsel %vm2375, %v2376, %v2374
    %v2378 = vadd.f32 %v2365, 1e-06
    %v2379 = vadd.f32 %v2377, 1e-06
    %v2380 = vrcp.pop %v2378
    %v2381 = vrcp.pop %v2379
    %v2382 = vmul.f32 %v2342, %v2380
    %v2383 = vmul.f32 %v2343, %v2381
    %v2385 = vperm.slane %v2332, 0
    %v2387 = vmul.f32 %v2385, %v2382
    %v2388 = vmul.f32 %v2385, %v2383
    %v2390 = vperm.slane %v2333, 0
    %v2392 = vadd.f32 %v2387, %v2390
    %v2393 = vadd.f32 %v2388, %v2390
    %v2394 = vpack.c.bf16 %v2393, %v2392
    %v2395 = vld [vmem:[#allocation25] sm:$0xff]
    %v2396 = vld [vmem:[#allocation25 + $0x8] sm:$0xff]
    %v2397 = vld [vmem:[#allocation25 + $0x10] sm:$0xff]
    %v2398 = vld [vmem:[#allocation25 + $0x18] sm:$0xff]
    %v2399 = vpack.c.bf16 %v2396, %v2395
    %v2400 = vpack.c.bf16 %v2398, %v2397
    %v2401 = vld [vmem:[#allocation26] sm:$0x1]
    %v2403 = vperm.slane %v2401, 0
    %v2406 = vsel %vm901, %v2394, 0
    %2408 = vmatpush.bf16.msra.mxu0 0
    %2409 = vmatpush.bf16.msra.mxu0 0
    %2410 = vmatpush.bf16.msra.mxu0 0
    %2411 = vmatpush.bf16.msra.mxu0 0
    %2412 = vmatpush.bf16.msra.mxu0 0
    %2413 = vmatpush.bf16.msra.mxu0 0
    %2414 = vmatpush.bf16.msra.mxu0 %v2400
    %2415 = vmatpush.bf16.msra.mxu0 %v2399
    %2416 = vmatmul.bf16.gmra.mxu0 %v2406
    %v2417 = vpop.f32.mrf.mxu0
    %v2418 = vadd.f32 %v2403, %v2417
    %v2419 = vpop.f32.mrf.mxu0
    %v2420 = vadd.f32 %v2403, %v2419
    %2421 = vdwg.mxu0
    %v2422 = vmax.f32 %v2418, 0.0
    %v2423 = vmax.f32 %v2420, 0.0
    %v2424 = vpack.c.bf16 %v2423, %v2422
    %v2425 = vld [vmem:[%s57] sm:$0xff]
    %v2426 = vld [vmem:[%s57 + $0x8] sm:$0xff]
    %v2427 = vld [vmem:[%s57 + $0x10] sm:$0xff]
    %v2428 = vld [vmem:[%s57 + $0x18] sm:$0xff]
    %v2429 = vld [vmem:[%s57 + $0x20] sm:$0xff]
    %v2430 = vld [vmem:[%s57 + $0x28] sm:$0xff]
    %v2431 = vld [vmem:[%s57 + $0x30] sm:$0xff]
    %v2432 = vld [vmem:[%s57 + $0x38] sm:$0xff]
    %v2433 = vpack.c.bf16 %v2426, %v2425
    %v2434 = vpack.c.bf16 %v2428, %v2427
    %v2435 = vpack.c.bf16 %v2430, %v2429
    %v2436 = vpack.c.bf16 %v2432, %v2431
    %v2437 = vld [vmem:[#allocation28] sm:$0x1]
    %v2439 = vperm.slane %v2437, 0
    %v2442 = vsel %vm862, %v2424, 0
    %2444 = vmatpush.bf16.msra.mxu0 0
    %2445 = vmatpush.bf16.msra.mxu0 0
    %2446 = vmatpush.bf16.msra.mxu0 0
    %2447 = vmatpush.bf16.msra.mxu0 0
    %2448 = vmatpush.bf16.msra.mxu0 %v2436
    %2449 = vmatpush.bf16.msra.mxu0 %v2435
    %2450 = vmatpush.bf16.msra.mxu0 %v2434
    %2451 = vmatpush.bf16.msra.mxu0 %v2433
    %2452 = vmatmul.bf16.gmra.mxu0 %v2442
    %v2453 = vpop.f32.mrf.mxu0
    %v2454 = vadd.f32 %v2439, %v2453
    %v2455 = vpop.f32.mrf.mxu0
    %v2456 = vadd.f32 %v2439, %v2455
    %2457 = vdwg.mxu0
    %v2458 = vadd.f32 %v2330, %v2454
    %v2459 = vadd.f32 %v2331, %v2456
    %v2460 = vld [vmem:[#allocation29] sm:$0x1]
    %v2461 = vld [vmem:[#allocation31] sm:$0x1]
    %v2462 = vsel %vm901, %v2458, 0.0
    %2463 = vadd.xlane.f32.xlu0 %v2462
    %v2464 = vpop.xlane.xlu0 %2463
    %v2465 = vsel %vm901, %v2459, 0.0
    %2466 = vadd.xlane.f32.xlu0 %v2465
    %v2467 = vpop.xlane.xlu0 %2466
    %v2468 = vmul.f32 %v2464, %v914
    %v2469 = vmul.f32 %v2467, %v914
    %v2470 = vsub.f32 %v2458, %v2468
    %v2471 = vsub.f32 %v2459, %v2469
    %v2472 = vmul.f32 %v2470, %v2470
    %v2473 = vmul.f32 %v2471, %v2471
    %v2474 = vsel %vm901, %v2472, 0.0
    %2475 = vadd.xlane.f32.xlu0 %v2474
    %v2476 = vpop.xlane.xlu0 %2475
    %v2477 = vsel %vm901, %v2473, 0.0
    %2478 = vadd.xlane.f32.xlu0 %v2477
    %v2479 = vpop.xlane.xlu0 %2478
    %v2480 = vmul.f32 %v2476, 0.032258064
    %v2481 = vmul.f32 %v2479, 0.032258064
    %v2482 = vrsqrt.pop %v2480
    %v2483 = vmul.f32 %v2482, %v2480
    %v2484 = vmul.f32 %v2483, %v2482
    %v2485 = vmul.f32 0.5, %v2484
    %v2486 = vsub.f32 1.5, %v2485
    %v2487 = vmul.f32 %v2482, %v2486
    %v2488 = vmul.f32 %v2480, %v2487
    %vm2489 = vcmp.eq.f32.partialorder %v2480, inf
    %v2490 = vsel %vm2489, %v2480, %v2488
    %vm2491 = vcmp.eq.f32.partialorder %v2480, 0.0
    %v2492 = vand.u32 %v2480, 2147483648
    %v2493 = vsel %vm2491, %v2492, %v2490
    %v2494 = vrsqrt.pop %v2481
    %v2495 = vmul.f32 %v2494, %v2481
    %v2496 = vmul.f32 %v2495, %v2494
    %v2497 = vmul.f32 0.5, %v2496
    %v2498 = vsub.f32 1.5, %v2497
    %v2499 = vmul.f32 %v2494, %v2498
    %v2500 = vmul.f32 %v2481, %v2499
    %vm2501 = vcmp.eq.f32.partialorder %v2481, inf
    %v2502 = vsel %vm2501, %v2481, %v2500
    %vm2503 = vcmp.eq.f32.partialorder %v2481, 0.0
    %v2504 = vand.u32 %v2481, 2147483648
    %v2505 = vsel %vm2503, %v2504, %v2502
    %v2506 = vadd.f32 %v2493, 1e-06
    %v2507 = vadd.f32 %v2505, 1e-06
    %v2508 = vrcp.pop %v2506
    %v2509 = vrcp.pop %v2507
    %v2510 = vmul.f32 %v2470, %v2508
    %v2511 = vmul.f32 %v2471, %v2509
    %v2513 = vperm.slane %v2460, 0
    %v2515 = vmul.f32 %v2513, %v2510
    %v2516 = vmul.f32 %v2513, %v2511
    %v2518 = vperm.slane %v2461, 0
    %v2520 = vadd.f32 %v2515, %v2518
    %v2521 = vadd.f32 %v2516, %v2518
    %v2522 = vpack.c.bf16 %v2521, %v2520
    %v2523 = vld [vmem:[#allocation38] sm:$0xff]
    %v2524 = vld [vmem:[#allocation38 + $0x8] sm:$0xff]
    %v2525 = vld [vmem:[#allocation38 + $0x10] sm:$0xff]
    %v2526 = vld [vmem:[#allocation38 + $0x18] sm:$0xff]
    %v2527 = vpack.c.bf16 %v2524, %v2523
    %v2528 = vpack.c.bf16 %v2526, %v2525
    %v2529 = vld [vmem:[#allocation40] sm:$0x1]
    %v2531 = vperm.slane %v2529, 0
    %v2534 = vsel %vm901, %v2522, 0
    %2536 = vmatpush.bf16.msra.mxu0 0
    %2537 = vmatpush.bf16.msra.mxu0 0
    %2538 = vmatpush.bf16.msra.mxu0 0
    %2539 = vmatpush.bf16.msra.mxu0 0
    %2540 = vmatpush.bf16.msra.mxu0 0
    %2541 = vmatpush.bf16.msra.mxu0 0
    %2542 = vmatpush.bf16.msra.mxu0 %v2528
    %2543 = vmatpush.bf16.msra.mxu0 %v2527
    %2544 = vmatmul.bf16.gmra.mxu0 %v2534
    %v2545 = vpop.f32.mrf.mxu0
    %v2546 = vadd.f32 %v2531, %v2545
    %v2547 = vpop.f32.mrf.mxu0
    %v2548 = vadd.f32 %v2531, %v2547
    %2549 = vdwg.mxu0
    %v2550 = vmul.f32 %v2546, 0.35355338
    %v2551 = vmul.f32 %v2548, 0.35355338
    %v2552 = vld [vmem:[#allocation41] sm:$0xff]
    %v2553 = vld [vmem:[#allocation41 + $0x8] sm:$0xff]
    %v2554 = vld [vmem:[#allocation41 + $0x10] sm:$0xff]
    %v2555 = vld [vmem:[#allocation41 + $0x18] sm:$0xff]
    %v2556 = vpack.c.bf16 %v2553, %v2552
    %v2557 = vpack.c.bf16 %v2555, %v2554
    %v2558 = vld [vmem:[#allocation43] sm:$0x1]
    %v2560 = vperm.slane %v2558, 0
    %2562 = vmatpush.bf16.msra.mxu0 0
    %2563 = vmatpush.bf16.msra.mxu0 0
    %2564 = vmatpush.bf16.msra.mxu0 0
    %2565 = vmatpush.bf16.msra.mxu0 0
    %2566 = vmatpush.bf16.msra.mxu0 0
    %2567 = vmatpush.bf16.msra.mxu0 0
    %2568 = vmatpush.bf16.msra.mxu0 %v2557
    %2569 = vmatpush.bf16.msra.mxu0 %v2556
    %2570 = vmatmul.bf16.gmra.mxu0 %v2534
    %v2571 = vpop.f32.mrf.mxu0
    %v2572 = vadd.f32 %v2560, %v2571
    %v2573 = vpop.f32.mrf.mxu0
    %v2574 = vadd.f32 %v2560, %v2573
    %2575 = vdwg.mxu0
    %v2576 = vld [vmem:[#allocation44] sm:$0xff]
    %v2577 = vld [vmem:[#allocation44 + $0x8] sm:$0xff]
    %v2578 = vld [vmem:[#allocation44 + $0x10] sm:$0xff]
    %v2579 = vld [vmem:[#allocation44 + $0x18] sm:$0xff]
    %v2580 = vpack.c.bf16 %v2577, %v2576
    %v2581 = vpack.c.bf16 %v2579, %v2578
    %v2582 = vld [vmem:[#allocation46] sm:$0x1]
    %v2584 = vperm.slane %v2582, 0
    %2586 = vmatpush.bf16.msra.mxu0 0
    %2587 = vmatpush.bf16.msra.mxu0 0
    %2588 = vmatpush.bf16.msra.mxu0 0
    %2589 = vmatpush.bf16.msra.mxu0 0
    %2590 = vmatpush.bf16.msra.mxu0 0
    %2591 = vmatpush.bf16.msra.mxu0 0
    %2592 = vmatpush.bf16.msra.mxu0 %v2581
    %2593 = vmatpush.bf16.msra.mxu0 %v2580
    %2594 = vmatmul.bf16.gmra.mxu0 %v2534
    %v2595 = vpop.f32.mrf.mxu0
    %v2596 = vadd.f32 %v2584, %v2595
    %v2597 = vpop.f32.mrf.mxu0
    %v2598 = vadd.f32 %v2584, %v2597
    %2599 = vdwg.mxu0
    %v2600 = vld [vmem:[#allocation47] sm:$0xff]
    %v2601 = vld [vmem:[#allocation47 + $0x8] sm:$0xff]
    %v2602 = vld [vmem:[#allocation47 + $0x10] sm:$0xff]
    %v2603 = vld [vmem:[#allocation47 + $0x18] sm:$0xff]
    %v2604 = vpack.c.bf16 %v2550, %v2550
    %v2605 = vpack.c.bf16 %v2551, %v2551
    %v2606 = vpack.c.bf16 %v2572, %v2572
    %v2607 = vpack.c.bf16 %v2574, %v2574
    %v2608 = vpack.c.bf16 %v2596, %v2596
    %v2609 = vpack.c.bf16 %v2598, %v2598
    %v2611 = vsel %vm1057, %v2604, 0
    %v2614 = vsel %vm1057, %v2606, 0
    %2616 = vmatpush.bf16.xpose.msra.mxu0 0
    %2617 = vmatpush.bf16.xpose.msra.mxu0 0
    %2618 = vmatpush.bf16.xpose.msra.mxu0 0
    %2619 = vmatpush.bf16.xpose.msra.mxu0 0
    %2620 = vmatpush.bf16.xpose.msra.mxu0 0
    %2621 = vmatpush.bf16.xpose.msra.mxu0 0
    %2622 = vmatpush.bf16.xpose.msra.mxu0 0
    %2623 = vmatpush.bf16.xpose.msra.mxu0 %v2614
    %2624 = vmatmul.bf16.gmra.mxu0 %v2611
    %v2625 = vpop.f32.mrf.mxu0
    %v2626 = vadd.f32 0.0, %v2625
    %v2627 = vpop.f32.mrf.mxu0
    %2628 = vdwg.mxu0
    %v2630 = vsel %vm1057, %v2605, 0
    %v2633 = vsel %vm1057, %v2607, 0
    %2635 = vmatpush.bf16.xpose.msra.mxu0 0
    %2636 = vmatpush.bf16.xpose.msra.mxu0 0
    %2637 = vmatpush.bf16.xpose.msra.mxu0 0
    %2638 = vmatpush.bf16.xpose.msra.mxu0 0
    %2639 = vmatpush.bf16.xpose.msra.mxu0 0
    %2640 = vmatpush.bf16.xpose.msra.mxu0 0
    %2641 = vmatpush.bf16.xpose.msra.mxu0 0
    %2642 = vmatpush.bf16.xpose.msra.mxu0 %v2633
    %2643 = vmatmul.bf16.gmra.mxu0 %v2630
    %v2644 = vpop.f32.mrf.mxu0
    %v2645 = vadd.f32 0.0, %v2644
    %v2646 = vpop.f32.mrf.mxu0
    %2647 = vdwg.mxu0
    %v2648 = vsel %vm1057, %v2626, -inf
    %2649 = vmax.xlane.f32.xlu0 %v2648
    %v2650 = vpop.xlane.xlu0 %2649
    %v2651 = vsel %vm1057, %v2645, -inf
    %2652 = vmax.xlane.f32.xlu0 %v2651
    %v2653 = vpop.xlane.xlu0 %2652
    %v2654 = vsub.f32 %v2626, %v2650
    %v2655 = vsub.f32 %v2645, %v2653
    %v2656 = vmul.f32 %v2654, 1.442695
    %v2657 = vpow.pop %v2656
    %v2658 = vmul.f32 %v2655, 1.442695
    %v2659 = vpow.pop %v2658
    %v2660 = vsel %vm1057, %v2657, 0.0
    %2661 = vadd.xlane.f32.xlu0 %v2660
    %v2662 = vpop.xlane.xlu0 %2661
    %v2663 = vsel %vm1057, %v2659, 0.0
    %2664 = vadd.xlane.f32.xlu0 %v2663
    %v2665 = vpop.xlane.xlu0 %2664
    %v2666 = vrcp.pop %v2662
    %v2667 = vrcp.pop %v2665
    %v2668 = vmul.f32 %v2657, %v2666
    %v2669 = vmul.f32 %v2659, %v2667
    %v2670 = vpack.c.bf16 %v2668, %v2668
    %v2671 = vpack.c.bf16 %v2669, %v2669
    %v2673 = vsel %vm1057, %v2670, 0
    %v2676 = vsel %vm1123, %v2608, 0
    %2678 = vmatpush.bf16.msra.mxu0 0
    %2679 = vmatpush.bf16.msra.mxu0 0
    %2680 = vmatpush.bf16.msra.mxu0 0
    %2681 = vmatpush.bf16.msra.mxu0 0
    %2682 = vmatpush.bf16.msra.mxu0 0
    %2683 = vmatpush.bf16.msra.mxu0 0
    %2684 = vmatpush.bf16.msra.mxu0 0
    %2685 = vmatpush.bf16.msra.mxu0 %v2676
    %2686 = vmatmul.bf16.gmra.mxu0 %v2673
    %v2687 = vpop.f32.mrf.mxu0
    %v2688 = vadd.f32 0.0, %v2687
    %v2689 = vpop.f32.mrf.mxu0
    %2690 = vdwg.mxu0
    %v2692 = vsel %vm1057, %v2671, 0
    %v2695 = vsel %vm1123, %v2609, 0
    %2697 = vmatpush.bf16.msra.mxu0 0
    %2698 = vmatpush.bf16.msra.mxu0 0
    %2699 = vmatpush.bf16.msra.mxu0 0
    %2700 = vmatpush.bf16.msra.mxu0 0
    %2701 = vmatpush.bf16.msra.mxu0 0
    %2702 = vmatpush.bf16.msra.mxu0 0
    %2703 = vmatpush.bf16.msra.mxu0 0
    %2704 = vmatpush.bf16.msra.mxu0 %v2695
    %2705 = vmatmul.bf16.gmra.mxu0 %v2692
    %v2706 = vpop.f32.mrf.mxu0
    %v2707 = vadd.f32 0.0, %v2706
    %v2708 = vpop.f32.mrf.mxu0
    %2709 = vdwg.mxu0
    %v2710 = vpack.c.bf16 %v2707, %v2688
    %v2711 = vpack.c.bf16 %v2600, %v2600
    %v2713 = vunpack.c.l.b16 %v2604
    %v2714 = vpack.c.b16 %v2713, %v2713
    %2715 = vrot.lane.b32.xlu0 %v2714, 120
    %v2716 = vpop.permute.xlu0 %2715
    %v2718 = vunpack.c.l.b16 %v2606
    %v2719 = vpack.c.b16 %v2718, %v2718
    %2720 = vrot.lane.b32.xlu0 %v2719, 120
    %v2721 = vpop.permute.xlu0 %2720
    %v2723 = vsel %vm1057, %v2716, 0
    %v2726 = vsel %vm1057, %v2721, 0
    %2728 = vmatpush.bf16.xpose.msra.mxu0 0
    %2729 = vmatpush.bf16.xpose.msra.mxu0 0
    %2730 = vmatpush.bf16.xpose.msra.mxu0 0
    %2731 = vmatpush.bf16.xpose.msra.mxu0 0
    %2732 = vmatpush.bf16.xpose.msra.mxu0 0
    %2733 = vmatpush.bf16.xpose.msra.mxu0 0
    %2734 = vmatpush.bf16.xpose.msra.mxu0 0
    %2735 = vmatpush.bf16.xpose.msra.mxu0 %v2726
    %2736 = vmatmul.bf16.gmra.mxu0 %v2723
    %v2737 = vpop.f32.mrf.mxu0
    %v2738 = vadd.f32 0.0, %v2737
    %v2739 = vpop.f32.mrf.mxu0
    %2740 = vdwg.mxu0
    %v2742 = vunpack.c.l.b16 %v2605
    %v2743 = vpack.c.b16 %v2742, %v2742
    %2744 = vrot.lane.b32.xlu0 %v2743, 120
    %v2745 = vpop.permute.xlu0 %2744
    %v2747 = vunpack.c.l.b16 %v2607
    %v2748 = vpack.c.b16 %v2747, %v2747
    %2749 = vrot.lane.b32.xlu0 %v2748, 120
    %v2750 = vpop.permute.xlu0 %2749
    %v2752 = vsel %vm1057, %v2745, 0
    %v2755 = vsel %vm1057, %v2750, 0
    %2757 = vmatpush.bf16.xpose.msra.mxu0 0
    %2758 = vmatpush.bf16.xpose.msra.mxu0 0
    %2759 = vmatpush.bf16.xpose.msra.mxu0 0
    %2760 = vmatpush.bf16.xpose.msra.mxu0 0
    %2761 = vmatpush.bf16.xpose.msra.mxu0 0
    %2762 = vmatpush.bf16.xpose.msra.mxu0 0
    %2763 = vmatpush.bf16.xpose.msra.mxu0 0
    %2764 = vmatpush.bf16.xpose.msra.mxu0 %v2755
    %2765 = vmatmul.bf16.gmra.mxu0 %v2752
    %v2766 = vpop.f32.mrf.mxu0
    %v2767 = vadd.f32 0.0, %v2766
    %v2768 = vpop.f32.mrf.mxu0
    %2769 = vdwg.mxu0
    %v2770 = vsel %vm1057, %v2738, -inf
    %2771 = vmax.xlane.f32.xlu0 %v2770
    %v2772 = vpop.xlane.xlu0 %2771
    %v2773 = vsel %vm1057, %v2767, -inf
    %2774 = vmax.xlane.f32.xlu0 %v2773
    %v2775 = vpop.xlane.xlu0 %2774
    %v2776 = vsub.f32 %v2738, %v2772
    %v2777 = vsub.f32 %v2767, %v2775
    %v2778 = vmul.f32 %v2776, 1.442695
    %v2779 = vpow.pop %v2778
    %v2780 = vmul.f32 %v2777, 1.442695
    %v2781 = vpow.pop %v2780
    %v2782 = vsel %vm1057, %v2779, 0.0
    %2783 = vadd.xlane.f32.xlu0 %v2782
    %v2784 = vpop.xlane.xlu0 %2783
    %v2785 = vsel %vm1057, %v2781, 0.0
    %2786 = vadd.xlane.f32.xlu0 %v2785
    %v2787 = vpop.xlane.xlu0 %2786
    %v2788 = vrcp.pop %v2784
    %v2789 = vrcp.pop %v2787
    %v2790 = vmul.f32 %v2779, %v2788
    %v2791 = vmul.f32 %v2781, %v2789
    %v2792 = vpack.c.bf16 %v2790, %v2790
    %v2793 = vpack.c.bf16 %v2791, %v2791
    %v2795 = vunpack.c.l.b16 %v2608
    %v2796 = vpack.c.b16 %v2795, %v2795
    %2797 = vrot.lane.b32.xlu0 %v2796, 120
    %v2798 = vpop.permute.xlu0 %2797
    %v2800 = vsel %vm1057, %v2792, 0
    %v2803 = vsel %vm1123, %v2798, 0
    %2805 = vmatpush.bf16.msra.mxu0 0
    %2806 = vmatpush.bf16.msra.mxu0 0
    %2807 = vmatpush.bf16.msra.mxu0 0
    %2808 = vmatpush.bf16.msra.mxu0 0
    %2809 = vmatpush.bf16.msra.mxu0 0
    %2810 = vmatpush.bf16.msra.mxu0 0
    %2811 = vmatpush.bf16.msra.mxu0 0
    %2812 = vmatpush.bf16.msra.mxu0 %v2803
    %2813 = vmatmul.bf16.gmra.mxu0 %v2800
    %v2814 = vpop.f32.mrf.mxu0
    %v2815 = vadd.f32 0.0, %v2814
    %v2816 = vpop.f32.mrf.mxu0
    %2817 = vdwg.mxu0
    %v2819 = vunpack.c.l.b16 %v2609
    %v2820 = vpack.c.b16 %v2819, %v2819
    %2821 = vrot.lane.b32.xlu0 %v2820, 120
    %v2822 = vpop.permute.xlu0 %2821
    %v2824 = vsel %vm1057, %v2793, 0
    %v2827 = vsel %vm1123, %v2822, 0
    %2829 = vmatpush.bf16.msra.mxu0 0
    %2830 = vmatpush.bf16.msra.mxu0 0
    %2831 = vmatpush.bf16.msra.mxu0 0
    %2832 = vmatpush.bf16.msra.mxu0 0
    %2833 = vmatpush.bf16.msra.mxu0 0
    %2834 = vmatpush.bf16.msra.mxu0 0
    %2835 = vmatpush.bf16.msra.mxu0 0
    %2836 = vmatpush.bf16.msra.mxu0 %v2827
    %2837 = vmatmul.bf16.gmra.mxu0 %v2824
    %v2838 = vpop.f32.mrf.mxu0
    %v2839 = vadd.f32 0.0, %v2838
    %v2840 = vpop.f32.mrf.mxu0
    %2841 = vdwg.mxu0
    %v2842 = vpack.c.bf16 %v2839, %v2815
    %v2843 = vpack.c.bf16 %v2601, %v2601
    %v2845 = vsel %vm1057, %v2842, 0
    %v2848 = vsel %vm1123, %v2843, 0
    %2850 = vmatpush.bf16.msra.mxu0 0
    %2851 = vmatpush.bf16.msra.mxu0 0
    %2852 = vmatpush.bf16.msra.mxu0 0
    %2853 = vmatpush.bf16.msra.mxu0 0
    %2854 = vmatpush.bf16.msra.mxu0 0
    %2855 = vmatpush.bf16.msra.mxu0 0
    %2856 = vmatpush.bf16.msra.mxu0 0
    %2857 = vmatpush.bf16.msra.mxu0 %v2848
    %2858 = vmatmul.bf16.gmra.mxu0 %v2845
    %v2859 = vpop.f32.mrf.mxu0
    %v2860 = vadd.f32 0.0, %v2859
    %v2861 = vpop.f32.mrf.mxu0
    %v2862 = vadd.f32 0.0, %v2861
    %2863 = vdwg.mxu0
    %v2865 = vsel %vm1057, %v2710, 0
    %v2868 = vsel %vm1123, %v2711, 0
    %2870 = vmatpush.bf16.msra.mxu0 0
    %2871 = vmatpush.bf16.msra.mxu0 0
    %2872 = vmatpush.bf16.msra.mxu0 0
    %2873 = vmatpush.bf16.msra.mxu0 0
    %2874 = vmatpush.bf16.msra.mxu0 0
    %2875 = vmatpush.bf16.msra.mxu0 0
    %2876 = vmatpush.bf16.msra.mxu0 0
    %2877 = vmatpush.bf16.msra.mxu0 %v2868
    %2878 = vmatmul.bf16.gmra.mxu0 %v2865
    %v2879 = vpop.f32.mrf.mxu0
    %v2880 = vadd.f32 %v2860, %v2879
    %v2881 = vpop.f32.mrf.mxu0
    %v2882 = vadd.f32 %v2862, %v2881
    %2883 = vdwg.mxu0
    %2884 = vrot.lane.b32.xlu0 %v2714, 112
    %v2885 = vpop.permute.xlu0 %2884
    %2886 = vrot.lane.b32.xlu0 %v2719, 112
    %v2887 = vpop.permute.xlu0 %2886
    %v2889 = vsel %vm1057, %v2885, 0
    %v2892 = vsel %vm1057, %v2887, 0
    %2894 = vmatpush.bf16.xpose.msra.mxu0 0
    %2895 = vmatpush.bf16.xpose.msra.mxu0 0
    %2896 = vmatpush.bf16.xpose.msra.mxu0 0
    %2897 = vmatpush.bf16.xpose.msra.mxu0 0
    %2898 = vmatpush.bf16.xpose.msra.mxu0 0
    %2899 = vmatpush.bf16.xpose.msra.mxu0 0
    %2900 = vmatpush.bf16.xpose.msra.mxu0 0
    %2901 = vmatpush.bf16.xpose.msra.mxu0 %v2892
    %2902 = vmatmul.bf16.gmra.mxu0 %v2889
    %v2903 = vpop.f32.mrf.mxu0
    %v2904 = vadd.f32 0.0, %v2903
    %v2905 = vpop.f32.mrf.mxu0
    %2906 = vdwg.mxu0
    %2907 = vrot.lane.b32.xlu0 %v2743, 112
    %v2908 = vpop.permute.xlu0 %2907
    %2909 = vrot.lane.b32.xlu0 %v2748, 112
    %v2910 = vpop.permute.xlu0 %2909
    %v2912 = vsel %vm1057, %v2908, 0
    %v2915 = vsel %vm1057, %v2910, 0
    %2917 = vmatpush.bf16.xpose.msra.mxu0 0
    %2918 = vmatpush.bf16.xpose.msra.mxu0 0
    %2919 = vmatpush.bf16.xpose.msra.mxu0 0
    %2920 = vmatpush.bf16.xpose.msra.mxu0 0
    %2921 = vmatpush.bf16.xpose.msra.mxu0 0
    %2922 = vmatpush.bf16.xpose.msra.mxu0 0
    %2923 = vmatpush.bf16.xpose.msra.mxu0 0
    %2924 = vmatpush.bf16.xpose.msra.mxu0 %v2915
    %2925 = vmatmul.bf16.gmra.mxu0 %v2912
    %v2926 = vpop.f32.mrf.mxu0
    %v2927 = vadd.f32 0.0, %v2926
    %v2928 = vpop.f32.mrf.mxu0
    %2929 = vdwg.mxu0
    %v2930 = vsel %vm1057, %v2904, -inf
    %2931 = vmax.xlane.f32.xlu0 %v2930
    %v2932 = vpop.xlane.xlu0 %2931
    %v2933 = vsel %vm1057, %v2927, -inf
    %2934 = vmax.xlane.f32.xlu0 %v2933
    %v2935 = vpop.xlane.xlu0 %2934
    %v2936 = vsub.f32 %v2904, %v2932
    %v2937 = vsub.f32 %v2927, %v2935
    %v2938 = vmul.f32 %v2936, 1.442695
    %v2939 = vpow.pop %v2938
    %v2940 = vmul.f32 %v2937, 1.442695
    %v2941 = vpow.pop %v2940
    %v2942 = vsel %vm1057, %v2939, 0.0
    %2943 = vadd.xlane.f32.xlu0 %v2942
    %v2944 = vpop.xlane.xlu0 %2943
    %v2945 = vsel %vm1057, %v2941, 0.0
    %2946 = vadd.xlane.f32.xlu0 %v2945
    %v2947 = vpop.xlane.xlu0 %2946
    %v2948 = vrcp.pop %v2944
    %v2949 = vrcp.pop %v2947
    %v2950 = vmul.f32 %v2939, %v2948
    %v2951 = vmul.f32 %v2941, %v2949
    %v2952 = vpack.c.bf16 %v2950, %v2950
    %v2953 = vpack.c.bf16 %v2951, %v2951
    %2954 = vrot.lane.b32.xlu0 %v2796, 112
    %v2955 = vpop.permute.xlu0 %2954
    %v2957 = vsel %vm1057, %v2952, 0
    %v2960 = vsel %vm1123, %v2955, 0
    %2962 = vmatpush.bf16.msra.mxu0 0
    %2963 = vmatpush.bf16.msra.mxu0 0
    %2964 = vmatpush.bf16.msra.mxu0 0
    %2965 = vmatpush.bf16.msra.mxu0 0
    %2966 = vmatpush.bf16.msra.mxu0 0
    %2967 = vmatpush.bf16.msra.mxu0 0
    %2968 = vmatpush.bf16.msra.mxu0 0
    %2969 = vmatpush.bf16.msra.mxu0 %v2960
    %2970 = vmatmul.bf16.gmra.mxu0 %v2957
    %v2971 = vpop.f32.mrf.mxu0
    %v2972 = vadd.f32 0.0, %v2971
    %v2973 = vpop.f32.mrf.mxu0
    %2974 = vdwg.mxu0
    %2975 = vrot.lane.b32.xlu0 %v2820, 112
    %v2976 = vpop.permute.xlu0 %2975
    %v2978 = vsel %vm1057, %v2953, 0
    %v2981 = vsel %vm1123, %v2976, 0
    %2983 = vmatpush.bf16.msra.mxu0 0
    %2984 = vmatpush.bf16.msra.mxu0 0
    %2985 = vmatpush.bf16.msra.mxu0 0
    %2986 = vmatpush.bf16.msra.mxu0 0
    %2987 = vmatpush.bf16.msra.mxu0 0
    %2988 = vmatpush.bf16.msra.mxu0 0
    %2989 = vmatpush.bf16.msra.mxu0 0
    %2990 = vmatpush.bf16.msra.mxu0 %v2981
    %2991 = vmatmul.bf16.gmra.mxu0 %v2978
    %v2992 = vpop.f32.mrf.mxu0
    %v2993 = vadd.f32 0.0, %v2992
    %v2994 = vpop.f32.mrf.mxu0
    %2995 = vdwg.mxu0
    %v2996 = vpack.c.bf16 %v2993, %v2972
    %v2997 = vpack.c.bf16 %v2602, %v2602
    %v2999 = vsel %vm1057, %v2996, 0
    %v3002 = vsel %vm1123, %v2997, 0
    %3004 = vmatpush.bf16.msra.mxu0 0
    %3005 = vmatpush.bf16.msra.mxu0 0
    %3006 = vmatpush.bf16.msra.mxu0 0
    %3007 = vmatpush.bf16.msra.mxu0 0
    %3008 = vmatpush.bf16.msra.mxu0 0
    %3009 = vmatpush.bf16.msra.mxu0 0
    %3010 = vmatpush.bf16.msra.mxu0 0
    %3011 = vmatpush.bf16.msra.mxu0 %v3002
    %3012 = vmatmul.bf16.gmra.mxu0 %v2999
    %v3013 = vpop.f32.mrf.mxu0
    %v3014 = vadd.f32 0.0, %v3013
    %v3015 = vpop.f32.mrf.mxu0
    %v3016 = vadd.f32 0.0, %v3015
    %3017 = vdwg.mxu0
    %v3018 = vadd.f32 %v2880, %v3014
    %v3019 = vadd.f32 %v2882, %v3016
    %3020 = vrot.lane.b32.xlu0 %v2714, 104
    %v3021 = vpop.permute.xlu0 %3020
    %3022 = vrot.lane.b32.xlu0 %v2719, 104
    %v3023 = vpop.permute.xlu0 %3022
    %v3025 = vsel %vm1057, %v3021, 0
    %v3028 = vsel %vm1057, %v3023, 0
    %3030 = vmatpush.bf16.xpose.msra.mxu0 0
    %3031 = vmatpush.bf16.xpose.msra.mxu0 0
    %3032 = vmatpush.bf16.xpose.msra.mxu0 0
    %3033 = vmatpush.bf16.xpose.msra.mxu0 0
    %3034 = vmatpush.bf16.xpose.msra.mxu0 0
    %3035 = vmatpush.bf16.xpose.msra.mxu0 0
    %3036 = vmatpush.bf16.xpose.msra.mxu0 0
    %3037 = vmatpush.bf16.xpose.msra.mxu0 %v3028
    %3038 = vmatmul.bf16.gmra.mxu0 %v3025
    %v3039 = vpop.f32.mrf.mxu0
    %v3040 = vadd.f32 0.0, %v3039
    %v3041 = vpop.f32.mrf.mxu0
    %3042 = vdwg.mxu0
    %3043 = vrot.lane.b32.xlu0 %v2743, 104
    %v3044 = vpop.permute.xlu0 %3043
    %3045 = vrot.lane.b32.xlu0 %v2748, 104
    %v3046 = vpop.permute.xlu0 %3045
    %v3048 = vsel %vm1057, %v3044, 0
    %v3051 = vsel %vm1057, %v3046, 0
    %3053 = vmatpush.bf16.xpose.msra.mxu0 0
    %3054 = vmatpush.bf16.xpose.msra.mxu0 0
    %3055 = vmatpush.bf16.xpose.msra.mxu0 0
    %3056 = vmatpush.bf16.xpose.msra.mxu0 0
    %3057 = vmatpush.bf16.xpose.msra.mxu0 0
    %3058 = vmatpush.bf16.xpose.msra.mxu0 0
    %3059 = vmatpush.bf16.xpose.msra.mxu0 0
    %3060 = vmatpush.bf16.xpose.msra.mxu0 %v3051
    %3061 = vmatmul.bf16.gmra.mxu0 %v3048
    %v3062 = vpop.f32.mrf.mxu0
    %v3063 = vadd.f32 0.0, %v3062
    %v3064 = vpop.f32.mrf.mxu0
    %3065 = vdwg.mxu0
    %v3066 = vsel %vm1057, %v3040, -inf
    %3067 = vmax.xlane.f32.xlu0 %v3066
    %v3068 = vpop.xlane.xlu0 %3067
    %v3069 = vsel %vm1057, %v3063, -inf
    %3070 = vmax.xlane.f32.xlu0 %v3069
    %v3071 = vpop.xlane.xlu0 %3070
    %v3072 = vsub.f32 %v3040, %v3068
    %v3073 = vsub.f32 %v3063, %v3071
    %v3074 = vmul.f32 %v3072, 1.442695
    %v3075 = vpow.pop %v3074
    %v3076 = vmul.f32 %v3073, 1.442695
    %v3077 = vpow.pop %v3076
    %v3078 = vsel %vm1057, %v3075, 0.0
    %3079 = vadd.xlane.f32.xlu0 %v3078
    %v3080 = vpop.xlane.xlu0 %3079
    %v3081 = vsel %vm1057, %v3077, 0.0
    %3082 = vadd.xlane.f32.xlu0 %v3081
    %v3083 = vpop.xlane.xlu0 %3082
    %v3084 = vrcp.pop %v3080
    %v3085 = vrcp.pop %v3083
    %v3086 = vmul.f32 %v3075, %v3084
    %v3087 = vmul.f32 %v3077, %v3085
    %v3088 = vpack.c.bf16 %v3086, %v3086
    %v3089 = vpack.c.bf16 %v3087, %v3087
    %3090 = vrot.lane.b32.xlu0 %v2796, 104
    %v3091 = vpop.permute.xlu0 %3090
    %v3093 = vsel %vm1057, %v3088, 0
    %v3096 = vsel %vm1123, %v3091, 0
    %3098 = vmatpush.bf16.msra.mxu0 0
    %3099 = vmatpush.bf16.msra.mxu0 0
    %3100 = vmatpush.bf16.msra.mxu0 0
    %3101 = vmatpush.bf16.msra.mxu0 0
    %3102 = vmatpush.bf16.msra.mxu0 0
    %3103 = vmatpush.bf16.msra.mxu0 0
    %3104 = vmatpush.bf16.msra.mxu0 0
    %3105 = vmatpush.bf16.msra.mxu0 %v3096
    %3106 = vmatmul.bf16.gmra.mxu0 %v3093
    %v3107 = vpop.f32.mrf.mxu0
    %v3108 = vadd.f32 0.0, %v3107
    %v3109 = vpop.f32.mrf.mxu0
    %3110 = vdwg.mxu0
    %3111 = vrot.lane.b32.xlu0 %v2820, 104
    %v3112 = vpop.permute.xlu0 %3111
    %v3114 = vsel %vm1057, %v3089, 0
    %v3117 = vsel %vm1123, %v3112, 0
    %3119 = vmatpush.bf16.msra.mxu0 0
    %3120 = vmatpush.bf16.msra.mxu0 0
    %3121 = vmatpush.bf16.msra.mxu0 0
    %3122 = vmatpush.bf16.msra.mxu0 0
    %3123 = vmatpush.bf16.msra.mxu0 0
    %3124 = vmatpush.bf16.msra.mxu0 0
    %3125 = vmatpush.bf16.msra.mxu0 0
    %3126 = vmatpush.bf16.msra.mxu0 %v3117
    %3127 = vmatmul.bf16.gmra.mxu0 %v3114
    %v3128 = vpop.f32.mrf.mxu0
    %v3129 = vadd.f32 0.0, %v3128
    %v3130 = vpop.f32.mrf.mxu0
    %3131 = vdwg.mxu0
    %v3132 = vpack.c.bf16 %v3129, %v3108
    %v3133 = vpack.c.bf16 %v2603, %v2603
    %v3135 = vsel %vm1057, %v3132, 0
    %v3138 = vsel %vm1123, %v3133, 0
    %3140 = vmatpush.bf16.msra.mxu0 0
    %3141 = vmatpush.bf16.msra.mxu0 0
    %3142 = vmatpush.bf16.msra.mxu0 0
    %3143 = vmatpush.bf16.msra.mxu0 0
    %3144 = vmatpush.bf16.msra.mxu0 0
    %3145 = vmatpush.bf16.msra.mxu0 0
    %3146 = vmatpush.bf16.msra.mxu0 0
    %3147 = vmatpush.bf16.msra.mxu0 %v3138
    %3148 = vmatmul.bf16.gmra.mxu0 %v3135
    %v3149 = vpop.f32.mrf.mxu0
    %v3150 = vadd.f32 0.0, %v3149
    %v3151 = vpop.f32.mrf.mxu0
    %v3152 = vadd.f32 0.0, %v3151
    %3153 = vdwg.mxu0
    %v3154 = vadd.f32 %v3018, %v3150
    %v3155 = vadd.f32 %v3019, %v3152
    %v3156 = vld [vmem:[#allocation49] sm:$0x1]
    %v3158 = vperm.slane %v3156, 0
    %v3160 = vadd.f32 %v3154, %v3158
    %v3161 = vadd.f32 %v3155, %v3158
    %v3162 = vadd.f32 %v2458, %v3160
    %v3163 = vadd.f32 %v2459, %v3161
    %v3164 = vld [vmem:[#allocation32] sm:$0x1]
    %v3165 = vld [vmem:[#allocation34] sm:$0x1]
    %v3166 = vsel %vm901, %v3162, 0.0
    %3167 = vadd.xlane.f32.xlu0 %v3166
    %v3168 = vpop.xlane.xlu0 %3167
    %v3169 = vsel %vm901, %v3163, 0.0
    %3170 = vadd.xlane.f32.xlu0 %v3169
    %v3171 = vpop.xlane.xlu0 %3170
    %v3172 = vmul.f32 %v3168, %v914
    %v3173 = vmul.f32 %v3171, %v914
    %v3174 = vsub.f32 %v3162, %v3172
    %v3175 = vsub.f32 %v3163, %v3173
    %v3176 = vmul.f32 %v3174, %v3174
    %v3177 = vmul.f32 %v3175, %v3175
    %v3178 = vsel %vm901, %v3176, 0.0
    %3179 = vadd.xlane.f32.xlu0 %v3178
    %v3180 = vpop.xlane.xlu0 %3179
    %v3181 = vsel %vm901, %v3177, 0.0
    %3182 = vadd.xlane.f32.xlu0 %v3181
    %v3183 = vpop.xlane.xlu0 %3182
    %v3184 = vmul.f32 %v3180, 0.032258064
    %v3185 = vmul.f32 %v3183, 0.032258064
    %v3186 = vrsqrt.pop %v3184
    %v3187 = vmul.f32 %v3186, %v3184
    %v3188 = vmul.f32 %v3187, %v3186
    %v3189 = vmul.f32 0.5, %v3188
    %v3190 = vsub.f32 1.5, %v3189
    %v3191 = vmul.f32 %v3186, %v3190
    %v3192 = vmul.f32 %v3184, %v3191
    %vm3193 = vcmp.eq.f32.partialorder %v3184, inf
    %v3194 = vsel %vm3193, %v3184, %v3192
    %vm3195 = vcmp.eq.f32.partialorder %v3184, 0.0
    %v3196 = vand.u32 %v3184, 2147483648
    %v3197 = vsel %vm3195, %v3196, %v3194
    %v3198 = vrsqrt.pop %v3185
    %v3199 = vmul.f32 %v3198, %v3185
    %v3200 = vmul.f32 %v3199, %v3198
    %v3201 = vmul.f32 0.5, %v3200
    %v3202 = vsub.f32 1.5, %v3201
    %v3203 = vmul.f32 %v3198, %v3202
    %v3204 = vmul.f32 %v3185, %v3203
    %vm3205 = vcmp.eq.f32.partialorder %v3185, inf
    %v3206 = vsel %vm3205, %v3185, %v3204
    %vm3207 = vcmp.eq.f32.partialorder %v3185, 0.0
    %v3208 = vand.u32 %v3185, 2147483648
    %v3209 = vsel %vm3207, %v3208, %v3206
    %v3210 = vadd.f32 %v3197, 1e-06
    %v3211 = vadd.f32 %v3209, 1e-06
    %v3212 = vrcp.pop %v3210
    %v3213 = vrcp.pop %v3211
    %v3214 = vmul.f32 %v3174, %v3212
    %v3215 = vmul.f32 %v3175, %v3213
    %v3217 = vperm.slane %v3164, 0
    %v3219 = vmul.f32 %v3217, %v3214
    %v3220 = vmul.f32 %v3217, %v3215
    %v3222 = vperm.slane %v3165, 0
    %v3224 = vadd.f32 %v3219, %v3222
    %v3225 = vadd.f32 %v3220, %v3222
    %v3226 = vpack.c.bf16 %v3225, %v3224
    %v3227 = vld [vmem:[#allocation50] sm:$0xff]
    %v3228 = vld [vmem:[#allocation50 + $0x8] sm:$0xff]
    %v3229 = vld [vmem:[#allocation50 + $0x10] sm:$0xff]
    %v3230 = vld [vmem:[#allocation50 + $0x18] sm:$0xff]
    %v3231 = vpack.c.bf16 %v3228, %v3227
    %v3232 = vpack.c.bf16 %v3230, %v3229
    %v3233 = vld [vmem:[#allocation52] sm:$0x1]
    %v3235 = vperm.slane %v3233, 0
    %v3238 = vsel %vm901, %v3226, 0
    %3240 = vmatpush.bf16.msra.mxu0 0
    %3241 = vmatpush.bf16.msra.mxu0 0
    %3242 = vmatpush.bf16.msra.mxu0 0
    %3243 = vmatpush.bf16.msra.mxu0 0
    %3244 = vmatpush.bf16.msra.mxu0 0
    %3245 = vmatpush.bf16.msra.mxu0 0
    %3246 = vmatpush.bf16.msra.mxu0 %v3232
    %3247 = vmatpush.bf16.msra.mxu0 %v3231
    %3248 = vmatmul.bf16.gmra.mxu0 %v3238
    %v3249 = vpop.f32.mrf.mxu0
    %v3250 = vadd.f32 %v3235, %v3249
    %v3251 = vpop.f32.mrf.mxu0
    %v3252 = vadd.f32 %v3235, %v3251
    %3253 = vdwg.mxu0
    %v3254 = vmul.f32 %v3250, 0.35355338
    %v3255 = vmul.f32 %v3252, 0.35355338
    %v3256 = vld [vmem:[#allocation53] sm:$0xff]
    %v3257 = vld [vmem:[#allocation53 + $0x8] sm:$0xff]
    %v3258 = vld [vmem:[#allocation53 + $0x10] sm:$0xff]
    %v3259 = vld [vmem:[#allocation53 + $0x18] sm:$0xff]
    %v3260 = vpack.c.bf16 %v3257, %v3256
    %v3261 = vpack.c.bf16 %v3259, %v3258
    %v3262 = vld [vmem:[#allocation55] sm:$0x1]
    %v3264 = vperm.slane %v3262, 0
    %3266 = vmatpush.bf16.msra.mxu0 0
    %3267 = vmatpush.bf16.msra.mxu0 0
    %3268 = vmatpush.bf16.msra.mxu0 0
    %3269 = vmatpush.bf16.msra.mxu0 0
    %3270 = vmatpush.bf16.msra.mxu0 0
    %3271 = vmatpush.bf16.msra.mxu0 0
    %3272 = vmatpush.bf16.msra.mxu0 %v3261
    %3273 = vmatpush.bf16.msra.mxu0 %v3260
    %3274 = vmatmul.bf16.gmra.mxu0 %v1718
    %v3275 = vpop.f32.mrf.mxu0
    %v3276 = vadd.f32 %v3264, %v3275
    %v3277 = vpop.f32.mrf.mxu0
    %v3278 = vadd.f32 %v3264, %v3277
    %3279 = vmatmul.bf16.gmra.mxu0 %v1721
    %v3280 = vpop.f32.mrf.mxu0
    %v3281 = vadd.f32 %v3264, %v3280
    %v3282 = vpop.f32.mrf.mxu0
    %v3283 = vadd.f32 %v3264, %v3282
    %3284 = vdwg.mxu0
    %v3285 = vld [vmem:[#allocation56] sm:$0xff]
    %v3286 = vld [vmem:[#allocation56 + $0x8] sm:$0xff]
    %v3287 = vld [vmem:[#allocation56 + $0x10] sm:$0xff]
    %v3288 = vld [vmem:[#allocation56 + $0x18] sm:$0xff]
    %v3289 = vpack.c.bf16 %v3286, %v3285
    %v3290 = vpack.c.bf16 %v3288, %v3287
    %v3291 = vld [vmem:[#allocation58] sm:$0x1]
    %v3293 = vperm.slane %v3291, 0
    %3295 = vmatpush.bf16.msra.mxu0 0
    %3296 = vmatpush.bf16.msra.mxu0 0
    %3297 = vmatpush.bf16.msra.mxu0 0
    %3298 = vmatpush.bf16.msra.mxu0 0
    %3299 = vmatpush.bf16.msra.mxu0 0
    %3300 = vmatpush.bf16.msra.mxu0 0
    %3301 = vmatpush.bf16.msra.mxu0 %v3290
    %3302 = vmatpush.bf16.msra.mxu0 %v3289
    %3303 = vmatmul.bf16.gmra.mxu0 %v1718
    %v3304 = vpop.f32.mrf.mxu0
    %v3305 = vadd.f32 %v3293, %v3304
    %v3306 = vpop.f32.mrf.mxu0
    %v3307 = vadd.f32 %v3293, %v3306
    %3308 = vmatmul.bf16.gmra.mxu0 %v1721
    %v3309 = vpop.f32.mrf.mxu0
    %v3310 = vadd.f32 %v3293, %v3309
    %v3311 = vpop.f32.mrf.mxu0
    %v3312 = vadd.f32 %v3293, %v3311
    %3313 = vdwg.mxu0
    %v3314 = vld [vmem:[#allocation59] sm:$0xff]
    %v3315 = vld [vmem:[#allocation59 + $0x8] sm:$0xff]
    %v3316 = vld [vmem:[#allocation59 + $0x10] sm:$0xff]
    %v3317 = vld [vmem:[#allocation59 + $0x18] sm:$0xff]
    %v3318 = vpack.c.bf16 %v3254, %v3254
    %v3319 = vpack.c.bf16 %v3255, %v3255
    %v3320 = vpack.c.bf16 %v3276, %v3276
    %v3321 = vpack.c.bf16 %v3278, %v3278
    %v3322 = vpack.c.bf16 %v3281, %v3281
    %v3323 = vpack.c.bf16 %v3283, %v3283
    %v3324 = vpack.c.bf16 %v3305, %v3305
    %v3325 = vpack.c.bf16 %v3307, %v3307
    %v3326 = vpack.c.bf16 %v3310, %v3310
    %v3327 = vpack.c.bf16 %v3312, %v3312
    %v3330 = vunpack.c.l.b16 %v3320
    %v3331 = vunpack.c.l.b16 %v3321
    %v3332 = vpack.c.b16 %v3331, %v3330
    %v3334 = vsel %vm1057, %v3318, 0
    %v3337 = vsel %vm1057, %v3332, 0
    %3339 = vmatpush.bf16.xpose.msra.mxu0 0
    %3340 = vmatpush.bf16.xpose.msra.mxu0 0
    %3341 = vmatpush.bf16.xpose.msra.mxu0 0
    %3342 = vmatpush.bf16.xpose.msra.mxu0 0
    %3343 = vmatpush.bf16.xpose.msra.mxu0 0
    %3344 = vmatpush.bf16.xpose.msra.mxu0 0
    %3345 = vmatpush.bf16.xpose.msra.mxu0 0
    %3346 = vmatpush.bf16.xpose.msra.mxu0 %v3337
    %3347 = vmatmul.bf16.gmra.mxu0 %v3334
    %v3348 = vpop.f32.mrf.mxu0
    %v3349 = vadd.f32 0.0, %v3348
    %v3350 = vpop.f32.mrf.mxu0
    %3351 = vdwg.mxu0
    %v3354 = vunpack.c.l.b16 %v3322
    %v3355 = vunpack.c.l.b16 %v3323
    %v3356 = vpack.c.b16 %v3355, %v3354
    %v3358 = vsel %vm1057, %v3319, 0
    %v3361 = vsel %vm1057, %v3356, 0
    %3363 = vmatpush.bf16.xpose.msra.mxu0 0
    %3364 = vmatpush.bf16.xpose.msra.mxu0 0
    %3365 = vmatpush.bf16.xpose.msra.mxu0 0
    %3366 = vmatpush.bf16.xpose.msra.mxu0 0
    %3367 = vmatpush.bf16.xpose.msra.mxu0 0
    %3368 = vmatpush.bf16.xpose.msra.mxu0 0
    %3369 = vmatpush.bf16.xpose.msra.mxu0 0
    %3370 = vmatpush.bf16.xpose.msra.mxu0 %v3361
    %3371 = vmatmul.bf16.gmra.mxu0 %v3358
    %v3372 = vpop.f32.mrf.mxu0
    %v3373 = vadd.f32 0.0, %v3372
    %v3374 = vpop.f32.mrf.mxu0
    %3375 = vdwg.mxu0
    %v3376 = vsel %vm1833, %v3349, -inf
    %3377 = vmax.xlane.f32.xlu0 %v3376
    %v3378 = vpop.xlane.xlu0 %3377
    %v3379 = vsel %vm1833, %v3373, -inf
    %3380 = vmax.xlane.f32.xlu0 %v3379
    %v3381 = vpop.xlane.xlu0 %3380
    %v3382 = vsub.f32 %v3349, %v3378
    %v3383 = vsub.f32 %v3373, %v3381
    %v3384 = vmul.f32 %v3382, 1.442695
    %v3385 = vpow.pop %v3384
    %v3386 = vmul.f32 %v3383, 1.442695
    %v3387 = vpow.pop %v3386
    %v3388 = vsel %vm1833, %v3385, 0.0
    %3389 = vadd.xlane.f32.xlu0 %v3388
    %v3390 = vpop.xlane.xlu0 %3389
    %v3391 = vsel %vm1833, %v3387, 0.0
    %3392 = vadd.xlane.f32.xlu0 %v3391
    %v3393 = vpop.xlane.xlu0 %3392
    %v3394 = vrcp.pop %v3390
    %v3395 = vrcp.pop %v3393
    %v3396 = vmul.f32 %v3385, %v3394
    %v3397 = vmul.f32 %v3387, %v3395
    %v3398 = vpack.c.bf16 %v3396, %v3396
    %v3399 = vpack.c.bf16 %v3397, %v3397
    %v3402 = vunpack.c.l.b16 %v3324
    %v3403 = vunpack.c.l.b16 %v3325
    %v3404 = vpack.c.b16 %v3403, %v3402
    %v3407 = vsel %vm1833, %v3398, 0
    %3409 = vmatpush.bf16.msra.mxu0 0
    %3410 = vmatpush.bf16.msra.mxu0 0
    %3411 = vmatpush.bf16.msra.mxu0 0
    %3412 = vmatpush.bf16.msra.mxu0 0
    %3413 = vmatpush.bf16.msra.mxu0 0
    %3414 = vmatpush.bf16.msra.mxu0 0
    %3415 = vmatpush.bf16.msra.mxu0 0
    %3416 = vmatpush.bf16.msra.mxu0 %v3404
    %3417 = vmatmul.bf16.gmra.mxu0 %v3407
    %v3418 = vpop.f32.mrf.mxu0
    %v3419 = vadd.f32 0.0, %v3418
    %v3420 = vpop.f32.mrf.mxu0
    %3421 = vdwg.mxu0
    %v3424 = vunpack.c.l.b16 %v3326
    %v3425 = vunpack.c.l.b16 %v3327
    %v3426 = vpack.c.b16 %v3425, %v3424
    %v3429 = vsel %vm1833, %v3399, 0
    %3431 = vmatpush.bf16.msra.mxu0 0
    %3432 = vmatpush.bf16.msra.mxu0 0
    %3433 = vmatpush.bf16.msra.mxu0 0
    %3434 = vmatpush.bf16.msra.mxu0 0
    %3435 = vmatpush.bf16.msra.mxu0 0
    %3436 = vmatpush.bf16.msra.mxu0 0
    %3437 = vmatpush.bf16.msra.mxu0 0
    %3438 = vmatpush.bf16.msra.mxu0 %v3426
    %3439 = vmatmul.bf16.gmra.mxu0 %v3429
    %v3440 = vpop.f32.mrf.mxu0
    %v3441 = vadd.f32 0.0, %v3440
    %v3442 = vpop.f32.mrf.mxu0
    %3443 = vdwg.mxu0
    %v3444 = vpack.c.bf16 %v3441, %v3419
    %v3445 = vpack.c.bf16 %v3314, %v3314
    %v3447 = vunpack.c.l.b16 %v3318
    %v3448 = vpack.c.b16 %v3447, %v3447
    %3449 = vrot.lane.b32.xlu0 %v3448, 120
    %v3450 = vpop.permute.xlu0 %3449
    %3451 = vrot.lane.b32.xlu0 %v3332, 120
    %v3452 = vpop.permute.xlu0 %3451
    %v3454 = vsel %vm1057, %v3450, 0
    %v3457 = vsel %vm1057, %v3452, 0
    %3459 = vmatpush.bf16.xpose.msra.mxu0 0
    %3460 = vmatpush.bf16.xpose.msra.mxu0 0
    %3461 = vmatpush.bf16.xpose.msra.mxu0 0
    %3462 = vmatpush.bf16.xpose.msra.mxu0 0
    %3463 = vmatpush.bf16.xpose.msra.mxu0 0
    %3464 = vmatpush.bf16.xpose.msra.mxu0 0
    %3465 = vmatpush.bf16.xpose.msra.mxu0 0
    %3466 = vmatpush.bf16.xpose.msra.mxu0 %v3457
    %3467 = vmatmul.bf16.gmra.mxu0 %v3454
    %v3468 = vpop.f32.mrf.mxu0
    %v3469 = vadd.f32 0.0, %v3468
    %v3470 = vpop.f32.mrf.mxu0
    %3471 = vdwg.mxu0
    %v3473 = vunpack.c.l.b16 %v3319
    %v3474 = vpack.c.b16 %v3473, %v3473
    %3475 = vrot.lane.b32.xlu0 %v3474, 120
    %v3476 = vpop.permute.xlu0 %3475
    %3477 = vrot.lane.b32.xlu0 %v3356, 120
    %v3478 = vpop.permute.xlu0 %3477
    %v3480 = vsel %vm1057, %v3476, 0
    %v3483 = vsel %vm1057, %v3478, 0
    %3485 = vmatpush.bf16.xpose.msra.mxu0 0
    %3486 = vmatpush.bf16.xpose.msra.mxu0 0
    %3487 = vmatpush.bf16.xpose.msra.mxu0 0
    %3488 = vmatpush.bf16.xpose.msra.mxu0 0
    %3489 = vmatpush.bf16.xpose.msra.mxu0 0
    %3490 = vmatpush.bf16.xpose.msra.mxu0 0
    %3491 = vmatpush.bf16.xpose.msra.mxu0 0
    %3492 = vmatpush.bf16.xpose.msra.mxu0 %v3483
    %3493 = vmatmul.bf16.gmra.mxu0 %v3480
    %v3494 = vpop.f32.mrf.mxu0
    %v3495 = vadd.f32 0.0, %v3494
    %v3496 = vpop.f32.mrf.mxu0
    %3497 = vdwg.mxu0
    %v3498 = vsel %vm1833, %v3469, -inf
    %3499 = vmax.xlane.f32.xlu0 %v3498
    %v3500 = vpop.xlane.xlu0 %3499
    %v3501 = vsel %vm1833, %v3495, -inf
    %3502 = vmax.xlane.f32.xlu0 %v3501
    %v3503 = vpop.xlane.xlu0 %3502
    %v3504 = vsub.f32 %v3469, %v3500
    %v3505 = vsub.f32 %v3495, %v3503
    %v3506 = vmul.f32 %v3504, 1.442695
    %v3507 = vpow.pop %v3506
    %v3508 = vmul.f32 %v3505, 1.442695
    %v3509 = vpow.pop %v3508
    %v3510 = vsel %vm1833, %v3507, 0.0
    %3511 = vadd.xlane.f32.xlu0 %v3510
    %v3512 = vpop.xlane.xlu0 %3511
    %v3513 = vsel %vm1833, %v3509, 0.0
    %3514 = vadd.xlane.f32.xlu0 %v3513
    %v3515 = vpop.xlane.xlu0 %3514
    %v3516 = vrcp.pop %v3512
    %v3517 = vrcp.pop %v3515
    %v3518 = vmul.f32 %v3507, %v3516
    %v3519 = vmul.f32 %v3509, %v3517
    %v3520 = vpack.c.bf16 %v3518, %v3518
    %v3521 = vpack.c.bf16 %v3519, %v3519
    %3522 = vrot.lane.b32.xlu0 %v3404, 120
    %v3523 = vpop.permute.xlu0 %3522
    %v3526 = vsel %vm1833, %v3520, 0
    %3528 = vmatpush.bf16.msra.mxu0 0
    %3529 = vmatpush.bf16.msra.mxu0 0
    %3530 = vmatpush.bf16.msra.mxu0 0
    %3531 = vmatpush.bf16.msra.mxu0 0
    %3532 = vmatpush.bf16.msra.mxu0 0
    %3533 = vmatpush.bf16.msra.mxu0 0
    %3534 = vmatpush.bf16.msra.mxu0 0
    %3535 = vmatpush.bf16.msra.mxu0 %v3523
    %3536 = vmatmul.bf16.gmra.mxu0 %v3526
    %v3537 = vpop.f32.mrf.mxu0
    %v3538 = vadd.f32 0.0, %v3537
    %v3539 = vpop.f32.mrf.mxu0
    %3540 = vdwg.mxu0
    %3541 = vrot.lane.b32.xlu0 %v3426, 120
    %v3542 = vpop.permute.xlu0 %3541
    %v3545 = vsel %vm1833, %v3521, 0
    %3547 = vmatpush.bf16.msra.mxu0 0
    %3548 = vmatpush.bf16.msra.mxu0 0
    %3549 = vmatpush.bf16.msra.mxu0 0
    %3550 = vmatpush.bf16.msra.mxu0 0
    %3551 = vmatpush.bf16.msra.mxu0 0
    %3552 = vmatpush.bf16.msra.mxu0 0
    %3553 = vmatpush.bf16.msra.mxu0 0
    %3554 = vmatpush.bf16.msra.mxu0 %v3542
    %3555 = vmatmul.bf16.gmra.mxu0 %v3545
    %v3556 = vpop.f32.mrf.mxu0
    %v3557 = vadd.f32 0.0, %v3556
    %v3558 = vpop.f32.mrf.mxu0
    %3559 = vdwg.mxu0
    %v3560 = vpack.c.bf16 %v3557, %v3538
    %v3561 = vpack.c.bf16 %v3315, %v3315
    %v3563 = vsel %vm1057, %v3560, 0
    %v3566 = vsel %vm1123, %v3561, 0
    %3568 = vmatpush.bf16.msra.mxu0 0
    %3569 = vmatpush.bf16.msra.mxu0 0
    %3570 = vmatpush.bf16.msra.mxu0 0
    %3571 = vmatpush.bf16.msra.mxu0 0
    %3572 = vmatpush.bf16.msra.mxu0 0
    %3573 = vmatpush.bf16.msra.mxu0 0
    %3574 = vmatpush.bf16.msra.mxu0 0
    %3575 = vmatpush.bf16.msra.mxu0 %v3566
    %3576 = vmatmul.bf16.gmra.mxu0 %v3563
    %v3577 = vpop.f32.mrf.mxu0
    %v3578 = vadd.f32 0.0, %v3577
    %v3579 = vpop.f32.mrf.mxu0
    %v3580 = vadd.f32 0.0, %v3579
    %3581 = vdwg.mxu0
    %v3583 = vsel %vm1057, %v3444, 0
    %v3586 = vsel %vm1123, %v3445, 0
    %3588 = vmatpush.bf16.msra.mxu0 0
    %3589 = vmatpush.bf16.msra.mxu0 0
    %3590 = vmatpush.bf16.msra.mxu0 0
    %3591 = vmatpush.bf16.msra.mxu0 0
    %3592 = vmatpush.bf16.msra.mxu0 0
    %3593 = vmatpush.bf16.msra.mxu0 0
    %3594 = vmatpush.bf16.msra.mxu0 0
    %3595 = vmatpush.bf16.msra.mxu0 %v3586
    %3596 = vmatmul.bf16.gmra.mxu0 %v3583
    %v3597 = vpop.f32.mrf.mxu0
    %v3598 = vadd.f32 %v3578, %v3597
    %v3599 = vpop.f32.mrf.mxu0
    %v3600 = vadd.f32 %v3580, %v3599
    %3601 = vdwg.mxu0
    %3602 = vrot.lane.b32.xlu0 %v3448, 112
    %v3603 = vpop.permute.xlu0 %3602
    %3604 = vrot.lane.b32.xlu0 %v3332, 112
    %v3605 = vpop.permute.xlu0 %3604
    %v3607 = vsel %vm1057, %v3603, 0
    %v3610 = vsel %vm1057, %v3605, 0
    %3612 = vmatpush.bf16.xpose.msra.mxu0 0
    %3613 = vmatpush.bf16.xpose.msra.mxu0 0
    %3614 = vmatpush.bf16.xpose.msra.mxu0 0
    %3615 = vmatpush.bf16.xpose.msra.mxu0 0
    %3616 = vmatpush.bf16.xpose.msra.mxu0 0
    %3617 = vmatpush.bf16.xpose.msra.mxu0 0
    %3618 = vmatpush.bf16.xpose.msra.mxu0 0
    %3619 = vmatpush.bf16.xpose.msra.mxu0 %v3610
    %3620 = vmatmul.bf16.gmra.mxu0 %v3607
    %v3621 = vpop.f32.mrf.mxu0
    %v3622 = vadd.f32 0.0, %v3621
    %v3623 = vpop.f32.mrf.mxu0
    %3624 = vdwg.mxu0
    %3625 = vrot.lane.b32.xlu0 %v3474, 112
    %v3626 = vpop.permute.xlu0 %3625
    %3627 = vrot.lane.b32.xlu0 %v3356, 112
    %v3628 = vpop.permute.xlu0 %3627
    %v3630 = vsel %vm1057, %v3626, 0
    %v3633 = vsel %vm1057, %v3628, 0
    %3635 = vmatpush.bf16.xpose.msra.mxu0 0
    %3636 = vmatpush.bf16.xpose.msra.mxu0 0
    %3637 = vmatpush.bf16.xpose.msra.mxu0 0
    %3638 = vmatpush.bf16.xpose.msra.mxu0 0
    %3639 = vmatpush.bf16.xpose.msra.mxu0 0
    %3640 = vmatpush.bf16.xpose.msra.mxu0 0
    %3641 = vmatpush.bf16.xpose.msra.mxu0 0
    %3642 = vmatpush.bf16.xpose.msra.mxu0 %v3633
    %3643 = vmatmul.bf16.gmra.mxu0 %v3630
    %v3644 = vpop.f32.mrf.mxu0
    %v3645 = vadd.f32 0.0, %v3644
    %v3646 = vpop.f32.mrf.mxu0
    %3647 = vdwg.mxu0
    %v3648 = vsel %vm1833, %v3622, -inf
    %3649 = vmax.xlane.f32.xlu0 %v3648
    %v3650 = vpop.xlane.xlu0 %3649
    %v3651 = vsel %vm1833, %v3645, -inf
    %3652 = vmax.xlane.f32.xlu0 %v3651
    %v3653 = vpop.xlane.xlu0 %3652
    %v3654 = vsub.f32 %v3622, %v3650
    %v3655 = vsub.f32 %v3645, %v3653
    %v3656 = vmul.f32 %v3654, 1.442695
    %v3657 = vpow.pop %v3656
    %v3658 = vmul.f32 %v3655, 1.442695
    %v3659 = vpow.pop %v3658
    %v3660 = vsel %vm1833, %v3657, 0.0
    %3661 = vadd.xlane.f32.xlu0 %v3660
    %v3662 = vpop.xlane.xlu0 %3661
    %v3663 = vsel %vm1833, %v3659, 0.0
    %3664 = vadd.xlane.f32.xlu0 %v3663
    %v3665 = vpop.xlane.xlu0 %3664
    %v3666 = vrcp.pop %v3662
    %v3667 = vrcp.pop %v3665
    %v3668 = vmul.f32 %v3657, %v3666
    %v3669 = vmul.f32 %v3659, %v3667
    %v3670 = vpack.c.bf16 %v3668, %v3668
    %v3671 = vpack.c.bf16 %v3669, %v3669
    %3672 = vrot.lane.b32.xlu0 %v3404, 112
    %v3673 = vpop.permute.xlu0 %3672
    %v3676 = vsel %vm1833, %v3670, 0
    %3678 = vmatpush.bf16.msra.mxu0 0
    %3679 = vmatpush.bf16.msra.mxu0 0
    %3680 = vmatpush.bf16.msra.mxu0 0
    %3681 = vmatpush.bf16.msra.mxu0 0
    %3682 = vmatpush.bf16.msra.mxu0 0
    %3683 = vmatpush.bf16.msra.mxu0 0
    %3684 = vmatpush.bf16.msra.mxu0 0
    %3685 = vmatpush.bf16.msra.mxu0 %v3673
    %3686 = vmatmul.bf16.gmra.mxu0 %v3676
    %v3687 = vpop.f32.mrf.mxu0
    %v3688 = vadd.f32 0.0, %v3687
    %v3689 = vpop.f32.mrf.mxu0
    %3690 = vdwg.mxu0
    %3691 = vrot.lane.b32.xlu0 %v3426, 112
    %v3692 = vpop.permute.xlu0 %3691
    %v3695 = vsel %vm1833, %v3671, 0
    %3697 = vmatpush.bf16.msra.mxu0 0
    %3698 = vmatpush.bf16.msra.mxu0 0
    %3699 = vmatpush.bf16.msra.mxu0 0
    %3700 = vmatpush.bf16.msra.mxu0 0
    %3701 = vmatpush.bf16.msra.mxu0 0
    %3702 = vmatpush.bf16.msra.mxu0 0
    %3703 = vmatpush.bf16.msra.mxu0 0
    %3704 = vmatpush.bf16.msra.mxu0 %v3692
    %3705 = vmatmul.bf16.gmra.mxu0 %v3695
    %v3706 = vpop.f32.mrf.mxu0
    %v3707 = vadd.f32 0.0, %v3706
    %v3708 = vpop.f32.mrf.mxu0
    %3709 = vdwg.mxu0
    %v3710 = vpack.c.bf16 %v3707, %v3688
    %v3711 = vpack.c.bf16 %v3316, %v3316
    %v3713 = vsel %vm1057, %v3710, 0
    %v3716 = vsel %vm1123, %v3711, 0
    %3718 = vmatpush.bf16.msra.mxu0 0
    %3719 = vmatpush.bf16.msra.mxu0 0
    %3720 = vmatpush.bf16.msra.mxu0 0
    %3721 = vmatpush.bf16.msra.mxu0 0
    %3722 = vmatpush.bf16.msra.mxu0 0
    %3723 = vmatpush.bf16.msra.mxu0 0
    %3724 = vmatpush.bf16.msra.mxu0 0
    %3725 = vmatpush.bf16.msra.mxu0 %v3716
    %3726 = vmatmul.bf16.gmra.mxu0 %v3713
    %v3727 = vpop.f32.mrf.mxu0
    %v3728 = vadd.f32 0.0, %v3727
    %v3729 = vpop.f32.mrf.mxu0
    %v3730 = vadd.f32 0.0, %v3729
    %3731 = vdwg.mxu0
    %v3732 = vadd.f32 %v3598, %v3728
    %v3733 = vadd.f32 %v3600, %v3730
    %3734 = vrot.lane.b32.xlu0 %v3448, 104
    %v3735 = vpop.permute.xlu0 %3734
    %3736 = vrot.lane.b32.xlu0 %v3332, 104
    %v3737 = vpop.permute.xlu0 %3736
    %v3739 = vsel %vm1057, %v3735, 0
    %v3742 = vsel %vm1057, %v3737, 0
    %3744 = vmatpush.bf16.xpose.msra.mxu0 0
    %3745 = vmatpush.bf16.xpose.msra.mxu0 0
    %3746 = vmatpush.bf16.xpose.msra.mxu0 0
    %3747 = vmatpush.bf16.xpose.msra.mxu0 0
    %3748 = vmatpush.bf16.xpose.msra.mxu0 0
    %3749 = vmatpush.bf16.xpose.msra.mxu0 0
    %3750 = vmatpush.bf16.xpose.msra.mxu0 0
    %3751 = vmatpush.bf16.xpose.msra.mxu0 %v3742
    %3752 = vmatmul.bf16.gmra.mxu0 %v3739
    %v3753 = vpop.f32.mrf.mxu0
    %v3754 = vadd.f32 0.0, %v3753
    %v3755 = vpop.f32.mrf.mxu0
    %3756 = vdwg.mxu0
    %3757 = vrot.lane.b32.xlu0 %v3474, 104
    %v3758 = vpop.permute.xlu0 %3757
    %3759 = vrot.lane.b32.xlu0 %v3356, 104
    %v3760 = vpop.permute.xlu0 %3759
    %v3762 = vsel %vm1057, %v3758, 0
    %v3765 = vsel %vm1057, %v3760, 0
    %3767 = vmatpush.bf16.xpose.msra.mxu0 0
    %3768 = vmatpush.bf16.xpose.msra.mxu0 0
    %3769 = vmatpush.bf16.xpose.msra.mxu0 0
    %3770 = vmatpush.bf16.xpose.msra.mxu0 0
    %3771 = vmatpush.bf16.xpose.msra.mxu0 0
    %3772 = vmatpush.bf16.xpose.msra.mxu0 0
    %3773 = vmatpush.bf16.xpose.msra.mxu0 0
    %3774 = vmatpush.bf16.xpose.msra.mxu0 %v3765
    %3775 = vmatmul.bf16.gmra.mxu0 %v3762
    %v3776 = vpop.f32.mrf.mxu0
    %v3777 = vadd.f32 0.0, %v3776
    %v3778 = vpop.f32.mrf.mxu0
    %3779 = vdwg.mxu0
    %v3780 = vsel %vm1833, %v3754, -inf
    %3781 = vmax.xlane.f32.xlu0 %v3780
    %v3782 = vpop.xlane.xlu0 %3781
    %v3783 = vsel %vm1833, %v3777, -inf
    %3784 = vmax.xlane.f32.xlu0 %v3783
    %v3785 = vpop.xlane.xlu0 %3784
    %v3786 = vsub.f32 %v3754, %v3782
    %v3787 = vsub.f32 %v3777, %v3785
    %v3788 = vmul.f32 %v3786, 1.442695
    %v3789 = vpow.pop %v3788
    %v3790 = vmul.f32 %v3787, 1.442695
    %v3791 = vpow.pop %v3790
    %v3792 = vsel %vm1833, %v3789, 0.0
    %3793 = vadd.xlane.f32.xlu0 %v3792
    %v3794 = vpop.xlane.xlu0 %3793
    %v3795 = vsel %vm1833, %v3791, 0.0
    %3796 = vadd.xlane.f32.xlu0 %v3795
    %v3797 = vpop.xlane.xlu0 %3796
    %v3798 = vrcp.pop %v3794
    %v3799 = vrcp.pop %v3797
    %v3800 = vmul.f32 %v3789, %v3798
    %v3801 = vmul.f32 %v3791, %v3799
    %v3802 = vpack.c.bf16 %v3800, %v3800
    %v3803 = vpack.c.bf16 %v3801, %v3801
    %3804 = vrot.lane.b32.xlu0 %v3404, 104
    %v3805 = vpop.permute.xlu0 %3804
    %v3808 = vsel %vm1833, %v3802, 0
    %3810 = vmatpush.bf16.msra.mxu0 0
    %3811 = vmatpush.bf16.msra.mxu0 0
    %3812 = vmatpush.bf16.msra.mxu0 0
    %3813 = vmatpush.bf16.msra.mxu0 0
    %3814 = vmatpush.bf16.msra.mxu0 0
    %3815 = vmatpush.bf16.msra.mxu0 0
    %3816 = vmatpush.bf16.msra.mxu0 0
    %3817 = vmatpush.bf16.msra.mxu0 %v3805
    %3818 = vmatmul.bf16.gmra.mxu0 %v3808
    %v3819 = vpop.f32.mrf.mxu0
    %v3820 = vadd.f32 0.0, %v3819
    %v3821 = vpop.f32.mrf.mxu0
    %3822 = vdwg.mxu0
    %3823 = vrot.lane.b32.xlu0 %v3426, 104
    %v3824 = vpop.permute.xlu0 %3823
    %v3827 = vsel %vm1833, %v3803, 0
    %3829 = vmatpush.bf16.msra.mxu0 0
    %3830 = vmatpush.bf16.msra.mxu0 0
    %3831 = vmatpush.bf16.msra.mxu0 0
    %3832 = vmatpush.bf16.msra.mxu0 0
    %3833 = vmatpush.bf16.msra.mxu0 0
    %3834 = vmatpush.bf16.msra.mxu0 0
    %3835 = vmatpush.bf16.msra.mxu0 0
    %3836 = vmatpush.bf16.msra.mxu0 %v3824
    %3837 = vmatmul.bf16.gmra.mxu0 %v3827
    %v3838 = vpop.f32.mrf.mxu0
    %v3839 = vadd.f32 0.0, %v3838
    %v3840 = vpop.f32.mrf.mxu0
    %3841 = vdwg.mxu0
    %v3842 = vpack.c.bf16 %v3839, %v3820
    %v3843 = vpack.c.bf16 %v3317, %v3317
    %v3845 = vsel %vm1057, %v3842, 0
    %v3848 = vsel %vm1123, %v3843, 0
    %3850 = vmatpush.bf16.msra.mxu0 0
    %3851 = vmatpush.bf16.msra.mxu0 0
    %3852 = vmatpush.bf16.msra.mxu0 0
    %3853 = vmatpush.bf16.msra.mxu0 0
    %3854 = vmatpush.bf16.msra.mxu0 0
    %3855 = vmatpush.bf16.msra.mxu0 0
    %3856 = vmatpush.bf16.msra.mxu0 0
    %3857 = vmatpush.bf16.msra.mxu0 %v3848
    %3858 = vmatmul.bf16.gmra.mxu0 %v3845
    %v3859 = vpop.f32.mrf.mxu0
    %v3860 = vadd.f32 0.0, %v3859
    %v3861 = vpop.f32.mrf.mxu0
    %v3862 = vadd.f32 0.0, %v3861
    %3863 = vdwg.mxu0
    %v3864 = vadd.f32 %v3732, %v3860
    %v3865 = vadd.f32 %v3733, %v3862
    %v3866 = vld [vmem:[#allocation61] sm:$0x1]
    %v3868 = vperm.slane %v3866, 0
    %v3870 = vadd.f32 %v3864, %v3868
    %v3871 = vadd.f32 %v3865, %v3868
    %v3872 = vadd.f32 %v3162, %v3870
    %v3873 = vadd.f32 %v3163, %v3871
    %v3874 = vld [vmem:[#allocation35] sm:$0x1]
    %v3875 = vld [vmem:[#allocation37] sm:$0x1]
    %v3876 = vsel %vm901, %v3872, 0.0
    %3877 = vadd.xlane.f32.xlu0 %v3876
    %v3878 = vpop.xlane.xlu0 %3877
    %v3879 = vsel %vm901, %v3873, 0.0
    %3880 = vadd.xlane.f32.xlu0 %v3879
    %v3881 = vpop.xlane.xlu0 %3880
    %v3882 = vmul.f32 %v3878, %v914
    %v3883 = vmul.f32 %v3881, %v914
    %v3884 = vsub.f32 %v3872, %v3882
    %v3885 = vsub.f32 %v3873, %v3883
    %v3886 = vmul.f32 %v3884, %v3884
    %v3887 = vmul.f32 %v3885, %v3885
    %v3888 = vsel %vm901, %v3886, 0.0
    %3889 = vadd.xlane.f32.xlu0 %v3888
    %v3890 = vpop.xlane.xlu0 %3889
    %v3891 = vsel %vm901, %v3887, 0.0
    %3892 = vadd.xlane.f32.xlu0 %v3891
    %v3893 = vpop.xlane.xlu0 %3892
    %v3894 = vmul.f32 %v3890, 0.032258064
    %v3895 = vmul.f32 %v3893, 0.032258064
    %v3896 = vrsqrt.pop %v3894
    %v3897 = vmul.f32 %v3896, %v3894
    %v3898 = vmul.f32 %v3897, %v3896
    %v3899 = vmul.f32 0.5, %v3898
    %v3900 = vsub.f32 1.5, %v3899
    %v3901 = vmul.f32 %v3896, %v3900
    %v3902 = vmul.f32 %v3894, %v3901
    %vm3903 = vcmp.eq.f32.partialorder %v3894, inf
    %v3904 = vsel %vm3903, %v3894, %v3902
    %vm3905 = vcmp.eq.f32.partialorder %v3894, 0.0
    %v3906 = vand.u32 %v3894, 2147483648
    %v3907 = vsel %vm3905, %v3906, %v3904
    %v3908 = vrsqrt.pop %v3895
    %v3909 = vmul.f32 %v3908, %v3895
    %v3910 = vmul.f32 %v3909, %v3908
    %v3911 = vmul.f32 0.5, %v3910
    %v3912 = vsub.f32 1.5, %v3911
    %v3913 = vmul.f32 %v3908, %v3912
    %v3914 = vmul.f32 %v3895, %v3913
    %vm3915 = vcmp.eq.f32.partialorder %v3895, inf
    %v3916 = vsel %vm3915, %v3895, %v3914
    %vm3917 = vcmp.eq.f32.partialorder %v3895, 0.0
    %v3918 = vand.u32 %v3895, 2147483648
    %v3919 = vsel %vm3917, %v3918, %v3916
    %v3920 = vadd.f32 %v3907, 1e-06
    %v3921 = vadd.f32 %v3919, 1e-06
    %v3922 = vrcp.pop %v3920
    %v3923 = vrcp.pop %v3921
    %v3924 = vmul.f32 %v3884, %v3922
    %v3925 = vmul.f32 %v3885, %v3923
    %v3927 = vperm.slane %v3874, 0
    %v3929 = vmul.f32 %v3927, %v3924
    %v3930 = vmul.f32 %v3927, %v3925
    %v3932 = vperm.slane %v3875, 0
    %v3934 = vadd.f32 %v3929, %v3932
    %v3935 = vadd.f32 %v3930, %v3932
    %v3936 = vpack.c.bf16 %v3935, %v3934
    %v3937 = vld [vmem:[%s105] sm:$0xff]
    %v3938 = vld [vmem:[%s105 + $0x8] sm:$0xff]
    %v3939 = vld [vmem:[%s105 + $0x10] sm:$0xff]
    %v3940 = vld [vmem:[%s105 + $0x18] sm:$0xff]
    %v3941 = vpack.c.bf16 %v3938, %v3937
    %v3942 = vpack.c.bf16 %v3940, %v3939
    %v3943 = vld [vmem:[#allocation62] sm:$0x1]
    %v3945 = vperm.slane %v3943, 0
    %v3948 = vsel %vm901, %v3936, 0
    %3950 = vmatpush.bf16.msra.mxu0 0
    %3951 = vmatpush.bf16.msra.mxu0 0
    %3952 = vmatpush.bf16.msra.mxu0 0
    %3953 = vmatpush.bf16.msra.mxu0 0
    %3954 = vmatpush.bf16.msra.mxu0 0
    %3955 = vmatpush.bf16.msra.mxu0 0
    %3956 = vmatpush.bf16.msra.mxu0 %v3942
    %3957 = vmatpush.bf16.msra.mxu0 %v3941
    %3958 = vmatmul.bf16.gmra.mxu0 %v3948
    %v3959 = vpop.f32.mrf.mxu0
    %v3960 = vadd.f32 %v3945, %v3959
    %v3961 = vpop.f32.mrf.mxu0
    %v3962 = vadd.f32 %v3945, %v3961
    %3963 = vdwg.mxu0
    %v3964 = vmax.f32 %v3960, 0.0
    %v3965 = vmax.f32 %v3962, 0.0
    %v3966 = vpack.c.bf16 %v3965, %v3964
    %v3967 = vld [vmem:[%s109] sm:$0xff]
    %v3968 = vld [vmem:[%s109 + $0x8] sm:$0xff]
    %v3969 = vld [vmem:[%s109 + $0x10] sm:$0xff]
    %v3970 = vld [vmem:[%s109 + $0x18] sm:$0xff]
    %v3971 = vld [vmem:[%s109 + $0x20] sm:$0xff]
    %v3972 = vld [vmem:[%s109 + $0x28] sm:$0xff]
    %v3973 = vld [vmem:[%s109 + $0x30] sm:$0xff]
    %v3974 = vld [vmem:[%s109 + $0x38] sm:$0xff]
    %v3975 = vpack.c.bf16 %v3968, %v3967
    %v3976 = vpack.c.bf16 %v3970, %v3969
    %v3977 = vpack.c.bf16 %v3972, %v3971
    %v3978 = vpack.c.bf16 %v3974, %v3973
    %v3979 = vld [vmem:[#allocation64] sm:$0x1]
    %v3981 = vperm.slane %v3979, 0
    %v3984 = vsel %vm862, %v3966, 0
    %3986 = vmatpush.bf16.msra.mxu0 0
    %3987 = vmatpush.bf16.msra.mxu0 0
    %3988 = vmatpush.bf16.msra.mxu0 0
    %3989 = vmatpush.bf16.msra.mxu0 0
    %3990 = vmatpush.bf16.msra.mxu0 %v3978
    %3991 = vmatpush.bf16.msra.mxu0 %v3977
    %3992 = vmatpush.bf16.msra.mxu0 %v3976
    %3993 = vmatpush.bf16.msra.mxu0 %v3975
    %3994 = vmatmul.bf16.gmra.mxu0 %v3984
    %v3995 = vpop.f32.mrf.mxu0
    %v3996 = vadd.f32 %v3981, %v3995
    %v3997 = vpop.f32.mrf.mxu0
    %v3998 = vadd.f32 %v3981, %v3997
    %3999 = vdwg.mxu0
    %v4000 = vadd.f32 %v3872, %v3996
    %v4001 = vadd.f32 %v3873, %v3998
    %v4002 = vld [vmem:[%s113] sm:$0x1]
    %v4003 = vld [vmem:[%s115] sm:$0x1]
    %v4004 = vsel %vm901, %v4000, 0.0
    %4005 = vadd.xlane.f32.xlu0 %v4004
    %v4006 = vpop.xlane.xlu0 %4005
    %v4007 = vsel %vm901, %v4001, 0.0
    %4008 = vadd.xlane.f32.xlu0 %v4007
    %v4009 = vpop.xlane.xlu0 %4008
    %v4010 = vmul.f32 %v4006, %v914
    %v4011 = vmul.f32 %v4009, %v914
    %v4012 = vsub.f32 %v4000, %v4010
    %v4013 = vsub.f32 %v4001, %v4011
    %v4014 = vmul.f32 %v4012, %v4012
    %v4015 = vmul.f32 %v4013, %v4013
    %v4016 = vsel %vm901, %v4014, 0.0
    %4017 = vadd.xlane.f32.xlu0 %v4016
    %v4018 = vpop.xlane.xlu0 %4017
    %v4019 = vsel %vm901, %v4015, 0.0
    %4020 = vadd.xlane.f32.xlu0 %v4019
    %v4021 = vpop.xlane.xlu0 %4020
    %v4022 = vmul.f32 %v4018, 0.032258064
    %v4023 = vmul.f32 %v4021, 0.032258064
    %v4024 = vrsqrt.pop %v4022
    %v4025 = vmul.f32 %v4024, %v4022
    %v4026 = vmul.f32 %v4025, %v4024
    %v4027 = vmul.f32 0.5, %v4026
    %v4028 = vsub.f32 1.5, %v4027
    %v4029 = vmul.f32 %v4024, %v4028
    %v4030 = vmul.f32 %v4022, %v4029
    %vm4031 = vcmp.eq.f32.partialorder %v4022, inf
    %v4032 = vsel %vm4031, %v4022, %v4030
    %vm4033 = vcmp.eq.f32.partialorder %v4022, 0.0
    %v4034 = vand.u32 %v4022, 2147483648
    %v4035 = vsel %vm4033, %v4034, %v4032
    %v4036 = vrsqrt.pop %v4023
    %v4037 = vmul.f32 %v4036, %v4023
    %v4038 = vmul.f32 %v4037, %v4036
    %v4039 = vmul.f32 0.5, %v4038
    %v4040 = vsub.f32 1.5, %v4039
    %v4041 = vmul.f32 %v4036, %v4040
    %v4042 = vmul.f32 %v4023, %v4041
    %vm4043 = vcmp.eq.f32.partialorder %v4023, inf
    %v4044 = vsel %vm4043, %v4023, %v4042
    %vm4045 = vcmp.eq.f32.partialorder %v4023, 0.0
    %v4046 = vand.u32 %v4023, 2147483648
    %v4047 = vsel %vm4045, %v4046, %v4044
    %v4048 = vadd.f32 %v4035, 1e-06
    %v4049 = vadd.f32 %v4047, 1e-06
    %v4050 = vrcp.pop %v4048
    %v4051 = vrcp.pop %v4049
    %v4052 = vmul.f32 %v4012, %v4050
    %v4053 = vmul.f32 %v4013, %v4051
    %v4055 = vperm.slane %v4002, 0
    %v4057 = vmul.f32 %v4055, %v4052
    %v4058 = vmul.f32 %v4055, %v4053
    %v4060 = vperm.slane %v4003, 0
    %v4062 = vadd.f32 %v4057, %v4060
    %v4063 = vadd.f32 %v4058, %v4060
    %v4064 = vpack.c.bf16 %v4063, %v4062
    %v4065 = vld [vmem:[#allocation65] sm:$0xff]
    %v4066 = vld [vmem:[#allocation65 + $0x8] sm:$0xff]
    %v4067 = vld [vmem:[#allocation65 + $0x10] sm:$0xff]
    %v4068 = vld [vmem:[#allocation65 + $0x18] sm:$0xff]
    %v4069 = vpack.c.bf16 %v4066, %v4065
    %v4070 = vpack.c.bf16 %v4068, %v4067
    %v4071 = vld [vmem:[%s119] sm:$0x1]
    %v4073 = vperm.slane %v4071, 0
    %v4076 = vsel %vm901, %v4064, 0
    %4078 = vmatpush.bf16.msra.mxu0 0
    %4079 = vmatpush.bf16.msra.mxu0 0
    %4080 = vmatpush.bf16.msra.mxu0 0
    %4081 = vmatpush.bf16.msra.mxu0 0
    %4082 = vmatpush.bf16.msra.mxu0 0
    %4083 = vmatpush.bf16.msra.mxu0 0
    %4084 = vmatpush.bf16.msra.mxu0 %v4070
    %4085 = vmatpush.bf16.msra.mxu0 %v4069
    %4086 = vmatmul.bf16.gmra.mxu0 %v4076
    %v4087 = vpop.f32.mrf.mxu0
    %v4088 = vadd.f32 %v4073, %v4087
    %v4089 = vpop.f32.mrf.mxu0
    %v4090 = vadd.f32 %v4073, %v4089
    %4091 = vdwg.mxu0
    %4092 = vst.msk [vmem:[#allocation67] sm:$0xff] %vm862, %v4088
    %4093 = vst.msk [vmem:[#allocation67 + $0x8] sm:$0xff] %vm862, %v4090
    // Predicated region
    $region410: #{tpu_custom_call.1} parent=1 // pred_check
      _
    $region411: #{tpu_custom_call.1} parent=1 // pred_check_branch
      %4095 = sbr.rel (0) target = $region413
    $region412: #{tpu_custom_call.1} parent=1 // pred_region
      %4097 = vsyncadd [#allocation4], 0
      %s4098 = sshll.u32 [#allocation67], 4
      %s4099 = int_to_ptr.vmem [resolvable:$true] %s4098
      %s4100 = sshll.u32 %s121, 4
      %s4101 = int_to_ptr.hbm [resolvable:$true] %s4100
      %4106 = dma.vmem_to_hbm [thread:$0]  %s4099, 256, %s4101, [#allocation4], 128, 128, 8
    $region413: #{tpu_custom_call.1} parent=1 // pred_fallthru
      _
    // Predicated region
    $region414: #{tpu_custom_call.1} parent=1 // pred_check
      _
    $region415: #{tpu_custom_call.1} parent=1 // pred_check_branch
      %4108 = sbr.rel (0) target = $region417
    $region416: #{tpu_custom_call.1} parent=1 // pred_region
      %4110 = dma.done [#allocation4], 256
    $region417: #{tpu_custom_call.1} parent=1 // pred_fallthru
      _
    %4111 = vsyncpa [#allocation3], 1
    %4112 = vsyncpa [#allocation6], 1
    %4113 = vsyncpa [#allocation9], 1
    %4114 = vsyncpa [#allocation12], 1
    %4115 = vsyncpa [#allocation15], 1
    %4116 = vsyncpa [#allocation18], 1
    %4117 = vsyncpa [#allocation21], 1
    %4118 = vsyncpa [#allocation24], 1
    %4119 = vsyncpa [#allocation27], 1
    %4120 = vsyncpa [#allocation30], 1
    %4121 = vsyncpa [#allocation33], 1
    %4122 = vsyncpa [#allocation36], 1
    %4123 = vsyncpa [#allocation39], 1
    %4124 = vsyncpa [#allocation42], 1
    %4125 = vsyncpa [#allocation45], 1
    %4126 = vsyncpa [#allocation48], 1
    %4127 = vsyncpa [#allocation51], 1
    %4128 = vsyncpa [#allocation54], 1
    %4129 = vsyncpa [#allocation57], 1
    %4130 = vsyncpa [#allocation60], 1
    %4131 = vsyncpa [#allocation63], 1
    %4132 = vsyncpa [#allocation66], 1
    %4133 = vsyncpa [#allocation4], 1

</llo_original>
